<compile_context>
chip_gen: v7x
topology: tpu7x:2x2x1
jax: 0.10.0
libtpu: 0.0.40
codegen_flags: <defaults>
</compile_context>

<pallas_src>
import functools

import jax
import jax.numpy as jnp
from jax.experimental import pallas as pl
from jax.experimental.pallas import tpu as pltpu


# ---------------------------------------------------------------------------
# Fused kernel: all GRU layers + FC + sigmoid in one invocation
# ---------------------------------------------------------------------------
def _gru_disc_kernel(num_layers, x_ref, *refs):
    """refs = [w_i, w_h, b_i, b_hn] * num_layers + [w_fc, b_fc, out_ref]."""
    layer_refs = refs[:4 * num_layers]
    w_fc_ref, b_fc_ref, o_ref = refs[4 * num_layers:]

    x = x_ref[...].astype(jnp.float32)            # (B, T, V) batch-first
    B, T, V = x.shape
    H = layer_refs[1].shape[0]                    # w_h of layer 0: (H, 3H)

    # Small weights: load once, keep live (fits comfortably in vregs/VMEM).
    w_i = [layer_refs[4 * l + 0][...] for l in range(num_layers)]   # (D_in, 3H)
    w_h = [layer_refs[4 * l + 1][...] for l in range(num_layers)]   # (H, 3H)
    b_i = [layer_refs[4 * l + 2][...] for l in range(num_layers)]   # (1, 3H)
    b_hn = [layer_refs[4 * l + 3][...] for l in range(num_layers)]  # (1, H)

    def cell(layer, gx, h):
        # One MXU matmul for all three gates; gate order r, z, n.
        gh = jnp.dot(h, w_h[layer], preferred_element_type=jnp.float32)  # (B, 3H)
        r = jax.nn.sigmoid(gx[:, :H] + gh[:, :H])
        z = jax.nn.sigmoid(gx[:, H:2 * H] + gh[:, H:2 * H])
        n = jnp.tanh(gx[:, 2 * H:] + r * (gh[:, 2 * H:] + b_hn[layer]))
        return (1.0 - z) * n + z * h

    # Layer 0: input projection hoisted over all timesteps (no h dependence).
    xp0 = jnp.dot(x.reshape(B * T, V), w_i[0],
                  preferred_element_type=jnp.float32) + b_i[0]       # (B*T, 3H)
    xp0 = xp0.reshape(B, T, 3 * H)

    prev_seq = [xp0[:, t, :] for t in range(T)]   # layer-0 pre-activations per step
    h_last = None
    for layer in range(num_layers):
        h = jnp.zeros((B, H), jnp.float32)
        outs = []
        for t in range(T):                        # fully unrolled serial recurrence
            if layer == 0:
                gx = prev_seq[t]                                          # (B, 3H)
            else:
                # Per-step projection from the previous layer's hidden state:
                # only depends on h_{layer-1}[t], so the recurrences pipeline
                # (wavefront) instead of serializing layer after layer.
                gx = jnp.dot(prev_seq[t], w_i[layer],
                             preferred_element_type=jnp.float32) + b_i[layer]
            h = cell(layer, gx, h)
            outs.append(h)
        prev_seq = outs
        h_last = h

    # fc(hidden_dim -> 1) + sigmoid on the last timestep's hidden state.
    # N=1 output: VPU multiply + lane reduce instead of a padded MXU pass.
    logits = jnp.sum(h_last * w_fc_ref[...], axis=-1, keepdims=True) + b_fc_ref[...]
    o_ref[...] = jax.nn.sigmoid(logits).astype(o_ref.dtype)


def _full_spec(shape):
    # Whole-array block (no grid): block shape equals full array dims.
    return pl.BlockSpec(shape, lambda *_: (0,) * len(shape))


# ---------------------------------------------------------------------------
# Wrapper: one pallas_call for the whole forward pass
# ---------------------------------------------------------------------------
@jax.jit
def gru_discriminator_forward(x_btv, packed_layers, w_fc, b_fc):
    """x_btv: (B, T, V) batch-first (PyTorch convention). Returns (B, 1)."""
    B, T, V = x_btv.shape
    L = len(packed_layers)

    operands = [x_btv.astype(jnp.float32)]
    in_specs = [_full_spec((B, T, V))]
    for p in packed_layers:
        for name in ("w_i", "w_h", "b_i", "b_hn"):
            a = p[name]
            operands.append(a)
            in_specs.append(_full_spec(a.shape))
    operands += [w_fc, b_fc]
    in_specs += [_full_spec(w_fc.shape), _full_spec(b_fc.shape)]

    # TODO(synk): on v7x a leading "parallel" batch grid axis could occupy the
    # second TensorCore once B grows; at B=2 it would only add overhead.
    return pl.pallas_call(
        functools.partial(_gru_disc_kernel, L),
        out_shape=jax.ShapeDtypeStruct((B, 1), jnp.float32),
        in_specs=in_specs,
        out_specs=_full_spec((B, 1)),
    )(*operands)


# ---------------------------------------------------------------------------
# Parameter init (PyTorch-style uniform(-1/sqrt(H), 1/sqrt(H))) + gate packing
# ---------------------------------------------------------------------------
def init_raw_params(key, hidden_dim, num_layers, vocab_size):
    bound = 1.0 / jnp.sqrt(hidden_dim)

    def u(k, shape):
        return jax.random.uniform(k, shape, jnp.float32, -bound, bound)

    layers = []
    for layer in range(num_layers):
        d_in = vocab_size if layer == 0 else hidden_dim
        keys = jax.random.split(jax.random.fold_in(key, layer), 12)
        layers.append({
            # stored pre-transposed: (D_in, H) / (H, H)
            "w_ir_t": u(keys[0], (d_in, hidden_dim)),
            "w_iz_t": u(keys[1], (d_in, hidden_dim)),
            "w_in_t": u(keys[2], (d_in, hidden_dim)),
            "w_hr_t": u(keys[3], (hidden_dim, hidden_dim)),
            "w_hz_t": u(keys[4], (hidden_dim, hidden_dim)),
            "w_hn_t": u(keys[5], (hidden_dim, hidden_dim)),
            "b_ir": u(keys[6], (1, hidden_dim)),
            "b_iz": u(keys[7], (1, hidden_dim)),
            "b_in": u(keys[8], (1, hidden_dim)),
            "b_hr": u(keys[9], (1, hidden_dim)),
            "b_hz": u(keys[10], (1, hidden_dim)),
            "b_hn": u(keys[11], (1, hidden_dim)),
        })

    kfc_w, kfc_b = jax.random.split(jax.random.fold_in(key, 1000))
    w_fc = u(kfc_w, (1, hidden_dim))   # nn.Linear(hidden_dim, 1).weight layout
    b_fc = u(kfc_b, (1, 1))
    return layers, w_fc, b_fc


def pack_params(raw_layers):
    """Concatenate gates (r,z,n order) and pre-combine r/z biases for the kernel."""
    packed = []
    for p in raw_layers:
        packed.append({
            "w_i": jnp.concatenate([p["w_ir_t"], p["w_iz_t"], p["w_in_t"]], axis=1),
            "w_h": jnp.concatenate([p["w_hr_t"], p["w_hz_t"], p["w_hn_t"]], axis=1),
            "b_i": jnp.concatenate([p["b_ir"] + p["b_hr"],
                                    p["b_iz"] + p["b_hz"],
                                    p["b_in"]], axis=1),
            "b_hn": p["b_hn"],
        })
    return packed


# ---------------------------------------------------------------------------
# Pure-JAX reference (mirrors torch.nn.GRU + Linear + Sigmoid semantics)
# ---------------------------------------------------------------------------
def reference_forward(x_btv, raw_layers, w_fc, b_fc):
    seq = jnp.transpose(x_btv, (1, 0, 2)).astype(jnp.float32)  # (T, B, D)
    T, B, _ = seq.shape
    for p in raw_layers:
        H = p["w_hr_t"].shape[0]
        h = jnp.zeros((B, H), jnp.float32)
        outs = []
        for t in range(T):
            xt = seq[t]
            r = jax.nn.sigmoid(xt @ p["w_ir_t"] + p["b_ir"] + h @ p["w_hr_t"] + p["b_hr"])
            z = jax.nn.sigmoid(xt @ p["w_iz_t"] + p["b_iz"] + h @ p["w_hz_t"] + p["b_hz"])
            n = jnp.tanh(xt @ p["w_in_t"] + p["b_in"] + r * (h @ p["w_hn_t"] + p["b_hn"]))
            h = (1.0 - z) * n + z * h
            outs.append(h)
        seq = jnp.stack(outs, axis=0)
    logits = jnp.sum(seq[-1] * w_fc, axis=-1, keepdims=True) + b_fc
    return jax.nn.sigmoid(logits)


if __name__ == "__main__":
    hidden_dim = 32
    num_layers = 2
    max_length = 8     # T
    vocab_size = 16    # V
    batch = 2          # B

    key = jax.random.PRNGKey(0)
    k_x, k_p = jax.random.split(key)

    # Input: (B, T, V) — e.g. softmax-like sequence representations.
    x = jax.random.uniform(k_x, (batch, max_length, vocab_size), jnp.float32)

    raw_layers, w_fc, b_fc = init_raw_params(k_p, hidden_dim, num_layers, vocab_size)
    packed_layers = pack_params(raw_layers)

    out = gru_discriminator_forward(x, packed_layers, w_fc, b_fc)
    out = jax.block_until_ready(out)

    ref = reference_forward(x, raw_layers, w_fc, b_fc)
    assert out.shape == (batch, 1)
    assert jnp.allclose(out, ref, atol=1e-4, rtol=1e-4), (out, ref)

    print("KERNEL_OK")
</pallas_src>

<mosaic_0001>
module attributes {stable_mosaic.version = 11 : i64} {
  func.func @_gru_disc_kernel(%arg0: memref<2x8x16xf32, #tpu.memory_space<vmem>>, %arg1: memref<16x96xf32, #tpu.memory_space<vmem>>, %arg2: memref<32x96xf32, #tpu.memory_space<vmem>>, %arg3: memref<1x96xf32, #tpu.memory_space<vmem>>, %arg4: memref<1x32xf32, #tpu.memory_space<vmem>>, %arg5: memref<32x96xf32, #tpu.memory_space<vmem>>, %arg6: memref<32x96xf32, #tpu.memory_space<vmem>>, %arg7: memref<1x96xf32, #tpu.memory_space<vmem>>, %arg8: memref<1x32xf32, #tpu.memory_space<vmem>>, %arg9: memref<1x32xf32, #tpu.memory_space<vmem>>, %arg10: memref<1x1xf32, #tpu.memory_space<vmem>>, %arg11: memref<2x1xf32, #tpu.memory_space<vmem>>) attributes {dimension_semantics = [], scalar_prefetch = 0 : i64, scratch_operands = 0 : i64, tpu.core_type = #tpu.core_type<tc>} {
    %c0 = arith.constant 0 : index
    %c0_0 = arith.constant 0 : index
    %c0_1 = arith.constant 0 : index
    %0 = vector.load %arg0[%c0, %c0_0, %c0_1] : memref<2x8x16xf32, #tpu.memory_space<vmem>>, vector<2x8x16xf32>
    %c0_2 = arith.constant 0 : index
    %c0_3 = arith.constant 0 : index
    %1 = vector.load %arg1[%c0_2, %c0_3] : memref<16x96xf32, #tpu.memory_space<vmem>>, vector<16x96xf32>
    %c0_4 = arith.constant 0 : index
    %c0_5 = arith.constant 0 : index
    %2 = vector.load %arg5[%c0_4, %c0_5] : memref<32x96xf32, #tpu.memory_space<vmem>>, vector<32x96xf32>
    %c0_6 = arith.constant 0 : index
    %c0_7 = arith.constant 0 : index
    %3 = vector.load %arg2[%c0_6, %c0_7] : memref<32x96xf32, #tpu.memory_space<vmem>>, vector<32x96xf32>
    %c0_8 = arith.constant 0 : index
    %c0_9 = arith.constant 0 : index
    %4 = vector.load %arg6[%c0_8, %c0_9] : memref<32x96xf32, #tpu.memory_space<vmem>>, vector<32x96xf32>
    %c0_10 = arith.constant 0 : index
    %c0_11 = arith.constant 0 : index
    %5 = vector.load %arg3[%c0_10, %c0_11] : memref<1x96xf32, #tpu.memory_space<vmem>>, vector<1x96xf32>
    %c0_12 = arith.constant 0 : index
    %c0_13 = arith.constant 0 : index
    %6 = vector.load %arg7[%c0_12, %c0_13] : memref<1x96xf32, #tpu.memory_space<vmem>>, vector<1x96xf32>
    %c0_14 = arith.constant 0 : index
    %c0_15 = arith.constant 0 : index
    %7 = vector.load %arg4[%c0_14, %c0_15] : memref<1x32xf32, #tpu.memory_space<vmem>>, vector<1x32xf32>
    %c0_16 = arith.constant 0 : index
    %c0_17 = arith.constant 0 : index
    %8 = vector.load %arg8[%c0_16, %c0_17] : memref<1x32xf32, #tpu.memory_space<vmem>>, vector<1x32xf32>
    %9 = vector.shape_cast %0 : vector<2x8x16xf32> to vector<16x16xf32>
    %cst = arith.constant dense<0.000000e+00> : vector<16x96xf32>
    %10 = tpu.matmul %9, %1, %cst {dimension_numbers = #tpu.dot_dimension_numbers<[1], [0], [0], [1], [0, 0, 1, 1], [], []>} : vector<16x16xf32>, vector<16x96xf32>, vector<16x96xf32> -> vector<16x96xf32>
    %11 = vector.broadcast %5 : vector<1x96xf32> to vector<16x96xf32>
    %12 = arith.addf %10, %11 : vector<16x96xf32>
    %13 = vector.shape_cast %12 : vector<16x96xf32> to vector<2x8x96xf32>
    %14 = vector.extract_strided_slice %13 {offsets = [0, 0, 0], sizes = [2, 1, 96], strides = [1, 1, 1]} : vector<2x8x96xf32> to vector<2x1x96xf32>
    %15 = vector.shape_cast %14 : vector<2x1x96xf32> to vector<2x96xf32>
    %16 = vector.extract_strided_slice %13 {offsets = [0, 1, 0], sizes = [2, 1, 96], strides = [1, 1, 1]} : vector<2x8x96xf32> to vector<2x1x96xf32>
    %17 = vector.shape_cast %16 : vector<2x1x96xf32> to vector<2x96xf32>
    %18 = vector.extract_strided_slice %13 {offsets = [0, 2, 0], sizes = [2, 1, 96], strides = [1, 1, 1]} : vector<2x8x96xf32> to vector<2x1x96xf32>
    %19 = vector.shape_cast %18 : vector<2x1x96xf32> to vector<2x96xf32>
    %20 = vector.extract_strided_slice %13 {offsets = [0, 3, 0], sizes = [2, 1, 96], strides = [1, 1, 1]} : vector<2x8x96xf32> to vector<2x1x96xf32>
    %21 = vector.shape_cast %20 : vector<2x1x96xf32> to vector<2x96xf32>
    %22 = vector.extract_strided_slice %13 {offsets = [0, 4, 0], sizes = [2, 1, 96], strides = [1, 1, 1]} : vector<2x8x96xf32> to vector<2x1x96xf32>
    %23 = vector.shape_cast %22 : vector<2x1x96xf32> to vector<2x96xf32>
    %24 = vector.extract_strided_slice %13 {offsets = [0, 5, 0], sizes = [2, 1, 96], strides = [1, 1, 1]} : vector<2x8x96xf32> to vector<2x1x96xf32>
    %25 = vector.shape_cast %24 : vector<2x1x96xf32> to vector<2x96xf32>
    %26 = vector.extract_strided_slice %13 {offsets = [0, 6, 0], sizes = [2, 1, 96], strides = [1, 1, 1]} : vector<2x8x96xf32> to vector<2x1x96xf32>
    %27 = vector.shape_cast %26 : vector<2x1x96xf32> to vector<2x96xf32>
    %28 = vector.extract_strided_slice %13 {offsets = [0, 7, 0], sizes = [2, 1, 96], strides = [1, 1, 1]} : vector<2x8x96xf32> to vector<2x1x96xf32>
    %29 = vector.shape_cast %28 : vector<2x1x96xf32> to vector<2x96xf32>
    %cst_18 = arith.constant 0.000000e+00 : f32
    %30 = vector.broadcast %cst_18 : f32 to vector<2x32xf32>
    %cst_19 = arith.constant dense<0.000000e+00> : vector<2x96xf32>
    %31 = tpu.matmul %30, %3, %cst_19 {dimension_numbers = #tpu.dot_dimension_numbers<[1], [0], [0], [1], [0, 0, 1, 1], [], []>} : vector<2x32xf32>, vector<32x96xf32>, vector<2x96xf32> -> vector<2x96xf32>
    %32 = vector.extract_strided_slice %15 {offsets = [0, 0], sizes = [2, 32], strides = [1, 1]} : vector<2x96xf32> to vector<2x32xf32>
    %33 = vector.extract_strided_slice %31 {offsets = [0, 0], sizes = [2, 32], strides = [1, 1]} : vector<2x96xf32> to vector<2x32xf32>
    %34 = arith.addf %32, %33 : vector<2x32xf32>
    %35 = arith.negf %34 : vector<2x32xf32>
    %36 = math.exp %35 : vector<2x32xf32>
    %cst_20 = arith.constant 1.000000e+00 : f32
    %37 = vector.broadcast %cst_20 : f32 to vector<2x32xf32>
    %38 = arith.addf %37, %36 : vector<2x32xf32>
    %39 = arith.divf %37, %38 : vector<2x32xf32>
    %40 = vector.extract_strided_slice %15 {offsets = [0, 32], sizes = [2, 32], strides = [1, 1]} : vector<2x96xf32> to vector<2x32xf32>
    %41 = vector.extract_strided_slice %31 {offsets = [0, 32], sizes = [2, 32], strides = [1, 1]} : vector<2x96xf32> to vector<2x32xf32>
    %42 = arith.addf %40, %41 : vector<2x32xf32>
    %43 = arith.negf %42 : vector<2x32xf32>
    %44 = math.exp %43 : vector<2x32xf32>
    %cst_21 = arith.constant 1.000000e+00 : f32
    %45 = vector.broadcast %cst_21 : f32 to vector<2x32xf32>
    %46 = arith.addf %45, %44 : vector<2x32xf32>
    %47 = arith.divf %45, %46 : vector<2x32xf32>
    %48 = vector.extract_strided_slice %15 {offsets = [0, 64], sizes = [2, 32], strides = [1, 1]} : vector<2x96xf32> to vector<2x32xf32>
    %49 = vector.extract_strided_slice %31 {offsets = [0, 64], sizes = [2, 32], strides = [1, 1]} : vector<2x96xf32> to vector<2x32xf32>
    %50 = vector.broadcast %7 : vector<1x32xf32> to vector<2x32xf32>
    %51 = arith.addf %49, %50 : vector<2x32xf32>
    %52 = arith.mulf %39, %51 : vector<2x32xf32>
    %53 = arith.addf %48, %52 : vector<2x32xf32>
    %54 = math.tanh %53 : vector<2x32xf32>
    %cst_22 = arith.constant 1.000000e+00 : f32
    %55 = vector.broadcast %cst_22 : f32 to vector<2x32xf32>
    %56 = arith.subf %55, %47 : vector<2x32xf32>
    %57 = arith.mulf %56, %54 : vector<2x32xf32>
    %58 = arith.mulf %47, %30 : vector<2x32xf32>
    %59 = arith.addf %57, %58 : vector<2x32xf32>
    %cst_23 = arith.constant dense<0.000000e+00> : vector<2x96xf32>
    %60 = tpu.matmul %59, %3, %cst_23 {dimension_numbers = #tpu.dot_dimension_numbers<[1], [0], [0], [1], [0, 0, 1, 1], [], []>} : vector<2x32xf32>, vector<32x96xf32>, vector<2x96xf32> -> vector<2x96xf32>
    %61 = vector.extract_strided_slice %17 {offsets = [0, 0], sizes = [2, 32], strides = [1, 1]} : vector<2x96xf32> to vector<2x32xf32>
    %62 = vector.extract_strided_slice %60 {offsets = [0, 0], sizes = [2, 32], strides = [1, 1]} : vector<2x96xf32> to vector<2x32xf32>
    %63 = arith.addf %61, %62 : vector<2x32xf32>
    %64 = arith.negf %63 : vector<2x32xf32>
    %65 = math.exp %64 : vector<2x32xf32>
    %cst_24 = arith.constant 1.000000e+00 : f32
    %66 = vector.broadcast %cst_24 : f32 to vector<2x32xf32>
    %67 = arith.addf %66, %65 : vector<2x32xf32>
    %68 = arith.divf %66, %67 : vector<2x32xf32>
    %69 = vector.extract_strided_slice %17 {offsets = [0, 32], sizes = [2, 32], strides = [1, 1]} : vector<2x96xf32> to vector<2x32xf32>
    %70 = vector.extract_strided_slice %60 {offsets = [0, 32], sizes = [2, 32], strides = [1, 1]} : vector<2x96xf32> to vector<2x32xf32>
    %71 = arith.addf %69, %70 : vector<2x32xf32>
    %72 = arith.negf %71 : vector<2x32xf32>
    %73 = math.exp %72 : vector<2x32xf32>
    %cst_25 = arith.constant 1.000000e+00 : f32
    %74 = vector.broadcast %cst_25 : f32 to vector<2x32xf32>
    %75 = arith.addf %74, %73 : vector<2x32xf32>
    %76 = arith.divf %74, %75 : vector<2x32xf32>
    %77 = vector.extract_strided_slice %17 {offsets = [0, 64], sizes = [2, 32], strides = [1, 1]} : vector<2x96xf32> to vector<2x32xf32>
    %78 = vector.extract_strided_slice %60 {offsets = [0, 64], sizes = [2, 32], strides = [1, 1]} : vector<2x96xf32> to vector<2x32xf32>
    %79 = vector.broadcast %7 : vector<1x32xf32> to vector<2x32xf32>
    %80 = arith.addf %78, %79 : vector<2x32xf32>
    %81 = arith.mulf %68, %80 : vector<2x32xf32>
    %82 = arith.addf %77, %81 : vector<2x32xf32>
    %83 = math.tanh %82 : vector<2x32xf32>
    %cst_26 = arith.constant 1.000000e+00 : f32
    %84 = vector.broadcast %cst_26 : f32 to vector<2x32xf32>
    %85 = arith.subf %84, %76 : vector<2x32xf32>
    %86 = arith.mulf %85, %83 : vector<2x32xf32>
    %87 = arith.mulf %76, %59 : vector<2x32xf32>
    %88 = arith.addf %86, %87 : vector<2x32xf32>
    %cst_27 = arith.constant dense<0.000000e+00> : vector<2x96xf32>
    %89 = tpu.matmul %88, %3, %cst_27 {dimension_numbers = #tpu.dot_dimension_numbers<[1], [0], [0], [1], [0, 0, 1, 1], [], []>} : vector<2x32xf32>, vector<32x96xf32>, vector<2x96xf32> -> vector<2x96xf32>
    %90 = vector.extract_strided_slice %19 {offsets = [0, 0], sizes = [2, 32], strides = [1, 1]} : vector<2x96xf32> to vector<2x32xf32>
    %91 = vector.extract_strided_slice %89 {offsets = [0, 0], sizes = [2, 32], strides = [1, 1]} : vector<2x96xf32> to vector<2x32xf32>
    %92 = arith.addf %90, %91 : vector<2x32xf32>
    %93 = arith.negf %92 : vector<2x32xf32>
    %94 = math.exp %93 : vector<2x32xf32>
    %cst_28 = arith.constant 1.000000e+00 : f32
    %95 = vector.broadcast %cst_28 : f32 to vector<2x32xf32>
    %96 = arith.addf %95, %94 : vector<2x32xf32>
    %97 = arith.divf %95, %96 : vector<2x32xf32>
    %98 = vector.extract_strided_slice %19 {offsets = [0, 32], sizes = [2, 32], strides = [1, 1]} : vector<2x96xf32> to vector<2x32xf32>
    %99 = vector.extract_strided_slice %89 {offsets = [0, 32], sizes = [2, 32], strides = [1, 1]} : vector<2x96xf32> to vector<2x32xf32>
    %100 = arith.addf %98, %99 : vector<2x32xf32>
    %101 = arith.negf %100 : vector<2x32xf32>
    %102 = math.exp %101 : vector<2x32xf32>
    %cst_29 = arith.constant 1.000000e+00 : f32
    %103 = vector.broadcast %cst_29 : f32 to vector<2x32xf32>
    %104 = arith.addf %103, %102 : vector<2x32xf32>
    %105 = arith.divf %103, %104 : vector<2x32xf32>
    %106 = vector.extract_strided_slice %19 {offsets = [0, 64], sizes = [2, 32], strides = [1, 1]} : vector<2x96xf32> to vector<2x32xf32>
    %107 = vector.extract_strided_slice %89 {offsets = [0, 64], sizes = [2, 32], strides = [1, 1]} : vector<2x96xf32> to vector<2x32xf32>
    %108 = vector.broadcast %7 : vector<1x32xf32> to vector<2x32xf32>
    %109 = arith.addf %107, %108 : vector<2x32xf32>
    %110 = arith.mulf %97, %109 : vector<2x32xf32>
    %111 = arith.addf %106, %110 : vector<2x32xf32>
    %112 = math.tanh %111 : vector<2x32xf32>
    %cst_30 = arith.constant 1.000000e+00 : f32
    %113 = vector.broadcast %cst_30 : f32 to vector<2x32xf32>
    %114 = arith.subf %113, %105 : vector<2x32xf32>
    %115 = arith.mulf %114, %112 : vector<2x32xf32>
    %116 = arith.mulf %105, %88 : vector<2x32xf32>
    %117 = arith.addf %115, %116 : vector<2x32xf32>
    %cst_31 = arith.constant dense<0.000000e+00> : vector<2x96xf32>
    %118 = tpu.matmul %117, %3, %cst_31 {dimension_numbers = #tpu.dot_dimension_numbers<[1], [0], [0], [1], [0, 0, 1, 1], [], []>} : vector<2x32xf32>, vector<32x96xf32>, vector<2x96xf32> -> vector<2x96xf32>
    %119 = vector.extract_strided_slice %21 {offsets = [0, 0], sizes = [2, 32], strides = [1, 1]} : vector<2x96xf32> to vector<2x32xf32>
    %120 = vector.extract_strided_slice %118 {offsets = [0, 0], sizes = [2, 32], strides = [1, 1]} : vector<2x96xf32> to vector<2x32xf32>
    %121 = arith.addf %119, %120 : vector<2x32xf32>
    %122 = arith.negf %121 : vector<2x32xf32>
    %123 = math.exp %122 : vector<2x32xf32>
    %cst_32 = arith.constant 1.000000e+00 : f32
    %124 = vector.broadcast %cst_32 : f32 to vector<2x32xf32>
    %125 = arith.addf %124, %123 : vector<2x32xf32>
    %126 = arith.divf %124, %125 : vector<2x32xf32>
    %127 = vector.extract_strided_slice %21 {offsets = [0, 32], sizes = [2, 32], strides = [1, 1]} : vector<2x96xf32> to vector<2x32xf32>
    %128 = vector.extract_strided_slice %118 {offsets = [0, 32], sizes = [2, 32], strides = [1, 1]} : vector<2x96xf32> to vector<2x32xf32>
    %129 = arith.addf %127, %128 : vector<2x32xf32>
    %130 = arith.negf %129 : vector<2x32xf32>
    %131 = math.exp %130 : vector<2x32xf32>
    %cst_33 = arith.constant 1.000000e+00 : f32
    %132 = vector.broadcast %cst_33 : f32 to vector<2x32xf32>
    %133 = arith.addf %132, %131 : vector<2x32xf32>
    %134 = arith.divf %132, %133 : vector<2x32xf32>
    %135 = vector.extract_strided_slice %21 {offsets = [0, 64], sizes = [2, 32], strides = [1, 1]} : vector<2x96xf32> to vector<2x32xf32>
    %136 = vector.extract_strided_slice %118 {offsets = [0, 64], sizes = [2, 32], strides = [1, 1]} : vector<2x96xf32> to vector<2x32xf32>
    %137 = vector.broadcast %7 : vector<1x32xf32> to vector<2x32xf32>
    %138 = arith.addf %136, %137 : vector<2x32xf32>
    %139 = arith.mulf %126, %138 : vector<2x32xf32>
    %140 = arith.addf %135, %139 : vector<2x32xf32>
    %141 = math.tanh %140 : vector<2x32xf32>
    %cst_34 = arith.constant 1.000000e+00 : f32
    %142 = vector.broadcast %cst_34 : f32 to vector<2x32xf32>
    %143 = arith.subf %142, %134 : vector<2x32xf32>
    %144 = arith.mulf %143, %141 : vector<2x32xf32>
    %145 = arith.mulf %134, %117 : vector<2x32xf32>
    %146 = arith.addf %144, %145 : vector<2x32xf32>
    %cst_35 = arith.constant dense<0.000000e+00> : vector<2x96xf32>
    %147 = tpu.matmul %146, %3, %cst_35 {dimension_numbers = #tpu.dot_dimension_numbers<[1], [0], [0], [1], [0, 0, 1, 1], [], []>} : vector<2x32xf32>, vector<32x96xf32>, vector<2x96xf32> -> vector<2x96xf32>
    %148 = vector.extract_strided_slice %23 {offsets = [0, 0], sizes = [2, 32], strides = [1, 1]} : vector<2x96xf32> to vector<2x32xf32>
    %149 = vector.extract_strided_slice %147 {offsets = [0, 0], sizes = [2, 32], strides = [1, 1]} : vector<2x96xf32> to vector<2x32xf32>
    %150 = arith.addf %148, %149 : vector<2x32xf32>
    %151 = arith.negf %150 : vector<2x32xf32>
    %152 = math.exp %151 : vector<2x32xf32>
    %cst_36 = arith.constant 1.000000e+00 : f32
    %153 = vector.broadcast %cst_36 : f32 to vector<2x32xf32>
    %154 = arith.addf %153, %152 : vector<2x32xf32>
    %155 = arith.divf %153, %154 : vector<2x32xf32>
    %156 = vector.extract_strided_slice %23 {offsets = [0, 32], sizes = [2, 32], strides = [1, 1]} : vector<2x96xf32> to vector<2x32xf32>
    %157 = vector.extract_strided_slice %147 {offsets = [0, 32], sizes = [2, 32], strides = [1, 1]} : vector<2x96xf32> to vector<2x32xf32>
    %158 = arith.addf %156, %157 : vector<2x32xf32>
    %159 = arith.negf %158 : vector<2x32xf32>
    %160 = math.exp %159 : vector<2x32xf32>
    %cst_37 = arith.constant 1.000000e+00 : f32
    %161 = vector.broadcast %cst_37 : f32 to vector<2x32xf32>
    %162 = arith.addf %161, %160 : vector<2x32xf32>
    %163 = arith.divf %161, %162 : vector<2x32xf32>
    %164 = vector.extract_strided_slice %23 {offsets = [0, 64], sizes = [2, 32], strides = [1, 1]} : vector<2x96xf32> to vector<2x32xf32>
    %165 = vector.extract_strided_slice %147 {offsets = [0, 64], sizes = [2, 32], strides = [1, 1]} : vector<2x96xf32> to vector<2x32xf32>
    %166 = vector.broadcast %7 : vector<1x32xf32> to vector<2x32xf32>
    %167 = arith.addf %165, %166 : vector<2x32xf32>
    %168 = arith.mulf %155, %167 : vector<2x32xf32>
    %169 = arith.addf %164, %168 : vector<2x32xf32>
    %170 = math.tanh %169 : vector<2x32xf32>
    %cst_38 = arith.constant 1.000000e+00 : f32
    %171 = vector.broadcast %cst_38 : f32 to vector<2x32xf32>
    %172 = arith.subf %171, %163 : vector<2x32xf32>
    %173 = arith.mulf %172, %170 : vector<2x32xf32>
    %174 = arith.mulf %163, %146 : vector<2x32xf32>
    %175 = arith.addf %173, %174 : vector<2x32xf32>
    %cst_39 = arith.constant dense<0.000000e+00> : vector<2x96xf32>
    %176 = tpu.matmul %175, %3, %cst_39 {dimension_numbers = #tpu.dot_dimension_numbers<[1], [0], [0], [1], [0, 0, 1, 1], [], []>} : vector<2x32xf32>, vector<32x96xf32>, vector<2x96xf32> -> vector<2x96xf32>
    %177 = vector.extract_strided_slice %25 {offsets = [0, 0], sizes = [2, 32], strides = [1, 1]} : vector<2x96xf32> to vector<2x32xf32>
    %178 = vector.extract_strided_slice %176 {offsets = [0, 0], sizes = [2, 32], strides = [1, 1]} : vector<2x96xf32> to vector<2x32xf32>
    %179 = arith.addf %177, %178 : vector<2x32xf32>
    %180 = arith.negf %179 : vector<2x32xf32>
    %181 = math.exp %180 : vector<2x32xf32>
    %cst_40 = arith.constant 1.000000e+00 : f32
    %182 = vector.broadcast %cst_40 : f32 to vector<2x32xf32>
    %183 = arith.addf %182, %181 : vector<2x32xf32>
    %184 = arith.divf %182, %183 : vector<2x32xf32>
    %185 = vector.extract_strided_slice %25 {offsets = [0, 32], sizes = [2, 32], strides = [1, 1]} : vector<2x96xf32> to vector<2x32xf32>
    %186 = vector.extract_strided_slice %176 {offsets = [0, 32], sizes = [2, 32], strides = [1, 1]} : vector<2x96xf32> to vector<2x32xf32>
    %187 = arith.addf %185, %186 : vector<2x32xf32>
    %188 = arith.negf %187 : vector<2x32xf32>
    %189 = math.exp %188 : vector<2x32xf32>
    %cst_41 = arith.constant 1.000000e+00 : f32
    %190 = vector.broadcast %cst_41 : f32 to vector<2x32xf32>
    %191 = arith.addf %190, %189 : vector<2x32xf32>
    %192 = arith.divf %190, %191 : vector<2x32xf32>
    %193 = vector.extract_strided_slice %25 {offsets = [0, 64], sizes = [2, 32], strides = [1, 1]} : vector<2x96xf32> to vector<2x32xf32>
    %194 = vector.extract_strided_slice %176 {offsets = [0, 64], sizes = [2, 32], strides = [1, 1]} : vector<2x96xf32> to vector<2x32xf32>
    %195 = vector.broadcast %7 : vector<1x32xf32> to vector<2x32xf32>
    %196 = arith.addf %194, %195 : vector<2x32xf32>
    %197 = arith.mulf %184, %196 : vector<2x32xf32>
    %198 = arith.addf %193, %197 : vector<2x32xf32>
    %199 = math.tanh %198 : vector<2x32xf32>
    %cst_42 = arith.constant 1.000000e+00 : f32
    %200 = vector.broadcast %cst_42 : f32 to vector<2x32xf32>
    %201 = arith.subf %200, %192 : vector<2x32xf32>
    %202 = arith.mulf %201, %199 : vector<2x32xf32>
    %203 = arith.mulf %192, %175 : vector<2x32xf32>
    %204 = arith.addf %202, %203 : vector<2x32xf32>
    %cst_43 = arith.constant dense<0.000000e+00> : vector<2x96xf32>
    %205 = tpu.matmul %204, %3, %cst_43 {dimension_numbers = #tpu.dot_dimension_numbers<[1], [0], [0], [1], [0, 0, 1, 1], [], []>} : vector<2x32xf32>, vector<32x96xf32>, vector<2x96xf32> -> vector<2x96xf32>
    %206 = vector.extract_strided_slice %27 {offsets = [0, 0], sizes = [2, 32], strides = [1, 1]} : vector<2x96xf32> to vector<2x32xf32>
    %207 = vector.extract_strided_slice %205 {offsets = [0, 0], sizes = [2, 32], strides = [1, 1]} : vector<2x96xf32> to vector<2x32xf32>
    %208 = arith.addf %206, %207 : vector<2x32xf32>
    %209 = arith.negf %208 : vector<2x32xf32>
    %210 = math.exp %209 : vector<2x32xf32>
    %cst_44 = arith.constant 1.000000e+00 : f32
    %211 = vector.broadcast %cst_44 : f32 to vector<2x32xf32>
    %212 = arith.addf %211, %210 : vector<2x32xf32>
    %213 = arith.divf %211, %212 : vector<2x32xf32>
    %214 = vector.extract_strided_slice %27 {offsets = [0, 32], sizes = [2, 32], strides = [1, 1]} : vector<2x96xf32> to vector<2x32xf32>
    %215 = vector.extract_strided_slice %205 {offsets = [0, 32], sizes = [2, 32], strides = [1, 1]} : vector<2x96xf32> to vector<2x32xf32>
    %216 = arith.addf %214, %215 : vector<2x32xf32>
    %217 = arith.negf %216 : vector<2x32xf32>
    %218 = math.exp %217 : vector<2x32xf32>
    %cst_45 = arith.constant 1.000000e+00 : f32
    %219 = vector.broadcast %cst_45 : f32 to vector<2x32xf32>
    %220 = arith.addf %219, %218 : vector<2x32xf32>
    %221 = arith.divf %219, %220 : vector<2x32xf32>
    %222 = vector.extract_strided_slice %27 {offsets = [0, 64], sizes = [2, 32], strides = [1, 1]} : vector<2x96xf32> to vector<2x32xf32>
    %223 = vector.extract_strided_slice %205 {offsets = [0, 64], sizes = [2, 32], strides = [1, 1]} : vector<2x96xf32> to vector<2x32xf32>
    %224 = vector.broadcast %7 : vector<1x32xf32> to vector<2x32xf32>
    %225 = arith.addf %223, %224 : vector<2x32xf32>
    %226 = arith.mulf %213, %225 : vector<2x32xf32>
    %227 = arith.addf %222, %226 : vector<2x32xf32>
    %228 = math.tanh %227 : vector<2x32xf32>
    %cst_46 = arith.constant 1.000000e+00 : f32
    %229 = vector.broadcast %cst_46 : f32 to vector<2x32xf32>
    %230 = arith.subf %229, %221 : vector<2x32xf32>
    %231 = arith.mulf %230, %228 : vector<2x32xf32>
    %232 = arith.mulf %221, %204 : vector<2x32xf32>
    %233 = arith.addf %231, %232 : vector<2x32xf32>
    %cst_47 = arith.constant dense<0.000000e+00> : vector<2x96xf32>
    %234 = tpu.matmul %233, %3, %cst_47 {dimension_numbers = #tpu.dot_dimension_numbers<[1], [0], [0], [1], [0, 0, 1, 1], [], []>} : vector<2x32xf32>, vector<32x96xf32>, vector<2x96xf32> -> vector<2x96xf32>
    %235 = vector.extract_strided_slice %29 {offsets = [0, 0], sizes = [2, 32], strides = [1, 1]} : vector<2x96xf32> to vector<2x32xf32>
    %236 = vector.extract_strided_slice %234 {offsets = [0, 0], sizes = [2, 32], strides = [1, 1]} : vector<2x96xf32> to vector<2x32xf32>
    %237 = arith.addf %235, %236 : vector<2x32xf32>
    %238 = arith.negf %237 : vector<2x32xf32>
    %239 = math.exp %238 : vector<2x32xf32>
    %cst_48 = arith.constant 1.000000e+00 : f32
    %240 = vector.broadcast %cst_48 : f32 to vector<2x32xf32>
    %241 = arith.addf %240, %239 : vector<2x32xf32>
    %242 = arith.divf %240, %241 : vector<2x32xf32>
    %243 = vector.extract_strided_slice %29 {offsets = [0, 32], sizes = [2, 32], strides = [1, 1]} : vector<2x96xf32> to vector<2x32xf32>
    %244 = vector.extract_strided_slice %234 {offsets = [0, 32], sizes = [2, 32], strides = [1, 1]} : vector<2x96xf32> to vector<2x32xf32>
    %245 = arith.addf %243, %244 : vector<2x32xf32>
    %246 = arith.negf %245 : vector<2x32xf32>
    %247 = math.exp %246 : vector<2x32xf32>
    %cst_49 = arith.constant 1.000000e+00 : f32
    %248 = vector.broadcast %cst_49 : f32 to vector<2x32xf32>
    %249 = arith.addf %248, %247 : vector<2x32xf32>
    %250 = arith.divf %248, %249 : vector<2x32xf32>
    %251 = vector.extract_strided_slice %29 {offsets = [0, 64], sizes = [2, 32], strides = [1, 1]} : vector<2x96xf32> to vector<2x32xf32>
    %252 = vector.extract_strided_slice %234 {offsets = [0, 64], sizes = [2, 32], strides = [1, 1]} : vector<2x96xf32> to vector<2x32xf32>
    %253 = vector.broadcast %7 : vector<1x32xf32> to vector<2x32xf32>
    %254 = arith.addf %252, %253 : vector<2x32xf32>
    %255 = arith.mulf %242, %254 : vector<2x32xf32>
    %256 = arith.addf %251, %255 : vector<2x32xf32>
    %257 = math.tanh %256 : vector<2x32xf32>
    %cst_50 = arith.constant 1.000000e+00 : f32
    %258 = vector.broadcast %cst_50 : f32 to vector<2x32xf32>
    %259 = arith.subf %258, %250 : vector<2x32xf32>
    %260 = arith.mulf %259, %257 : vector<2x32xf32>
    %261 = arith.mulf %250, %233 : vector<2x32xf32>
    %262 = arith.addf %260, %261 : vector<2x32xf32>
    %cst_51 = arith.constant 0.000000e+00 : f32
    %263 = vector.broadcast %cst_51 : f32 to vector<2x32xf32>
    %cst_52 = arith.constant dense<0.000000e+00> : vector<2x96xf32>
    %264 = tpu.matmul %59, %2, %cst_52 {dimension_numbers = #tpu.dot_dimension_numbers<[1], [0], [0], [1], [0, 0, 1, 1], [], []>} : vector<2x32xf32>, vector<32x96xf32>, vector<2x96xf32> -> vector<2x96xf32>
    %265 = vector.broadcast %6 : vector<1x96xf32> to vector<2x96xf32>
    %266 = arith.addf %264, %265 : vector<2x96xf32>
    %cst_53 = arith.constant dense<0.000000e+00> : vector<2x96xf32>
    %267 = tpu.matmul %263, %4, %cst_53 {dimension_numbers = #tpu.dot_dimension_numbers<[1], [0], [0], [1], [0, 0, 1, 1], [], []>} : vector<2x32xf32>, vector<32x96xf32>, vector<2x96xf32> -> vector<2x96xf32>
    %268 = vector.extract_strided_slice %266 {offsets = [0, 0], sizes = [2, 32], strides = [1, 1]} : vector<2x96xf32> to vector<2x32xf32>
    %269 = vector.extract_strided_slice %267 {offsets = [0, 0], sizes = [2, 32], strides = [1, 1]} : vector<2x96xf32> to vector<2x32xf32>
    %270 = arith.addf %268, %269 : vector<2x32xf32>
    %271 = arith.negf %270 : vector<2x32xf32>
    %272 = math.exp %271 : vector<2x32xf32>
    %cst_54 = arith.constant 1.000000e+00 : f32
    %273 = vector.broadcast %cst_54 : f32 to vector<2x32xf32>
    %274 = arith.addf %273, %272 : vector<2x32xf32>
    %275 = arith.divf %273, %274 : vector<2x32xf32>
    %276 = vector.extract_strided_slice %266 {offsets = [0, 32], sizes = [2, 32], strides = [1, 1]} : vector<2x96xf32> to vector<2x32xf32>
    %277 = vector.extract_strided_slice %267 {offsets = [0, 32], sizes = [2, 32], strides = [1, 1]} : vector<2x96xf32> to vector<2x32xf32>
    %278 = arith.addf %276, %277 : vector<2x32xf32>
    %279 = arith.negf %278 : vector<2x32xf32>
    %280 = math.exp %279 : vector<2x32xf32>
    %cst_55 = arith.constant 1.000000e+00 : f32
    %281 = vector.broadcast %cst_55 : f32 to vector<2x32xf32>
    %282 = arith.addf %281, %280 : vector<2x32xf32>
    %283 = arith.divf %281, %282 : vector<2x32xf32>
    %284 = vector.extract_strided_slice %266 {offsets = [0, 64], sizes = [2, 32], strides = [1, 1]} : vector<2x96xf32> to vector<2x32xf32>
    %285 = vector.extract_strided_slice %267 {offsets = [0, 64], sizes = [2, 32], strides = [1, 1]} : vector<2x96xf32> to vector<2x32xf32>
    %286 = vector.broadcast %8 : vector<1x32xf32> to vector<2x32xf32>
    %287 = arith.addf %285, %286 : vector<2x32xf32>
    %288 = arith.mulf %275, %287 : vector<2x32xf32>
    %289 = arith.addf %284, %288 : vector<2x32xf32>
    %290 = math.tanh %289 : vector<2x32xf32>
    %cst_56 = arith.constant 1.000000e+00 : f32
    %291 = vector.broadcast %cst_56 : f32 to vector<2x32xf32>
    %292 = arith.subf %291, %283 : vector<2x32xf32>
    %293 = arith.mulf %292, %290 : vector<2x32xf32>
    %294 = arith.mulf %283, %263 : vector<2x32xf32>
    %295 = arith.addf %293, %294 : vector<2x32xf32>
    %cst_57 = arith.constant dense<0.000000e+00> : vector<2x96xf32>
    %296 = tpu.matmul %88, %2, %cst_57 {dimension_numbers = #tpu.dot_dimension_numbers<[1], [0], [0], [1], [0, 0, 1, 1], [], []>} : vector<2x32xf32>, vector<32x96xf32>, vector<2x96xf32> -> vector<2x96xf32>
    %297 = vector.broadcast %6 : vector<1x96xf32> to vector<2x96xf32>
    %298 = arith.addf %296, %297 : vector<2x96xf32>
    %cst_58 = arith.constant dense<0.000000e+00> : vector<2x96xf32>
    %299 = tpu.matmul %295, %4, %cst_58 {dimension_numbers = #tpu.dot_dimension_numbers<[1], [0], [0], [1], [0, 0, 1, 1], [], []>} : vector<2x32xf32>, vector<32x96xf32>, vector<2x96xf32> -> vector<2x96xf32>
    %300 = vector.extract_strided_slice %298 {offsets = [0, 0], sizes = [2, 32], strides = [1, 1]} : vector<2x96xf32> to vector<2x32xf32>
    %301 = vector.extract_strided_slice %299 {offsets = [0, 0], sizes = [2, 32], strides = [1, 1]} : vector<2x96xf32> to vector<2x32xf32>
    %302 = arith.addf %300, %301 : vector<2x32xf32>
    %303 = arith.negf %302 : vector<2x32xf32>
    %304 = math.exp %303 : vector<2x32xf32>
    %cst_59 = arith.constant 1.000000e+00 : f32
    %305 = vector.broadcast %cst_59 : f32 to vector<2x32xf32>
    %306 = arith.addf %305, %304 : vector<2x32xf32>
    %307 = arith.divf %305, %306 : vector<2x32xf32>
    %308 = vector.extract_strided_slice %298 {offsets = [0, 32], sizes = [2, 32], strides = [1, 1]} : vector<2x96xf32> to vector<2x32xf32>
    %309 = vector.extract_strided_slice %299 {offsets = [0, 32], sizes = [2, 32], strides = [1, 1]} : vector<2x96xf32> to vector<2x32xf32>
    %310 = arith.addf %308, %309 : vector<2x32xf32>
    %311 = arith.negf %310 : vector<2x32xf32>
    %312 = math.exp %311 : vector<2x32xf32>
    %cst_60 = arith.constant 1.000000e+00 : f32
    %313 = vector.broadcast %cst_60 : f32 to vector<2x32xf32>
    %314 = arith.addf %313, %312 : vector<2x32xf32>
    %315 = arith.divf %313, %314 : vector<2x32xf32>
    %316 = vector.extract_strided_slice %298 {offsets = [0, 64], sizes = [2, 32], strides = [1, 1]} : vector<2x96xf32> to vector<2x32xf32>
    %317 = vector.extract_strided_slice %299 {offsets = [0, 64], sizes = [2, 32], strides = [1, 1]} : vector<2x96xf32> to vector<2x32xf32>
    %318 = vector.broadcast %8 : vector<1x32xf32> to vector<2x32xf32>
    %319 = arith.addf %317, %318 : vector<2x32xf32>
    %320 = arith.mulf %307, %319 : vector<2x32xf32>
    %321 = arith.addf %316, %320 : vector<2x32xf32>
    %322 = math.tanh %321 : vector<2x32xf32>
    %cst_61 = arith.constant 1.000000e+00 : f32
    %323 = vector.broadcast %cst_61 : f32 to vector<2x32xf32>
    %324 = arith.subf %323, %315 : vector<2x32xf32>
    %325 = arith.mulf %324, %322 : vector<2x32xf32>
    %326 = arith.mulf %315, %295 : vector<2x32xf32>
    %327 = arith.addf %325, %326 : vector<2x32xf32>
    %cst_62 = arith.constant dense<0.000000e+00> : vector<2x96xf32>
    %328 = tpu.matmul %117, %2, %cst_62 {dimension_numbers = #tpu.dot_dimension_numbers<[1], [0], [0], [1], [0, 0, 1, 1], [], []>} : vector<2x32xf32>, vector<32x96xf32>, vector<2x96xf32> -> vector<2x96xf32>
    %329 = vector.broadcast %6 : vector<1x96xf32> to vector<2x96xf32>
    %330 = arith.addf %328, %329 : vector<2x96xf32>
    %cst_63 = arith.constant dense<0.000000e+00> : vector<2x96xf32>
    %331 = tpu.matmul %327, %4, %cst_63 {dimension_numbers = #tpu.dot_dimension_numbers<[1], [0], [0], [1], [0, 0, 1, 1], [], []>} : vector<2x32xf32>, vector<32x96xf32>, vector<2x96xf32> -> vector<2x96xf32>
    %332 = vector.extract_strided_slice %330 {offsets = [0, 0], sizes = [2, 32], strides = [1, 1]} : vector<2x96xf32> to vector<2x32xf32>
    %333 = vector.extract_strided_slice %331 {offsets = [0, 0], sizes = [2, 32], strides = [1, 1]} : vector<2x96xf32> to vector<2x32xf32>
    %334 = arith.addf %332, %333 : vector<2x32xf32>
    %335 = arith.negf %334 : vector<2x32xf32>
    %336 = math.exp %335 : vector<2x32xf32>
    %cst_64 = arith.constant 1.000000e+00 : f32
    %337 = vector.broadcast %cst_64 : f32 to vector<2x32xf32>
    %338 = arith.addf %337, %336 : vector<2x32xf32>
    %339 = arith.divf %337, %338 : vector<2x32xf32>
    %340 = vector.extract_strided_slice %330 {offsets = [0, 32], sizes = [2, 32], strides = [1, 1]} : vector<2x96xf32> to vector<2x32xf32>
    %341 = vector.extract_strided_slice %331 {offsets = [0, 32], sizes = [2, 32], strides = [1, 1]} : vector<2x96xf32> to vector<2x32xf32>
    %342 = arith.addf %340, %341 : vector<2x32xf32>
    %343 = arith.negf %342 : vector<2x32xf32>
    %344 = math.exp %343 : vector<2x32xf32>
    %cst_65 = arith.constant 1.000000e+00 : f32
    %345 = vector.broadcast %cst_65 : f32 to vector<2x32xf32>
    %346 = arith.addf %345, %344 : vector<2x32xf32>
    %347 = arith.divf %345, %346 : vector<2x32xf32>
    %348 = vector.extract_strided_slice %330 {offsets = [0, 64], sizes = [2, 32], strides = [1, 1]} : vector<2x96xf32> to vector<2x32xf32>
    %349 = vector.extract_strided_slice %331 {offsets = [0, 64], sizes = [2, 32], strides = [1, 1]} : vector<2x96xf32> to vector<2x32xf32>
    %350 = vector.broadcast %8 : vector<1x32xf32> to vector<2x32xf32>
    %351 = arith.addf %349, %350 : vector<2x32xf32>
    %352 = arith.mulf %339, %351 : vector<2x32xf32>
    %353 = arith.addf %348, %352 : vector<2x32xf32>
    %354 = math.tanh %353 : vector<2x32xf32>
    %cst_66 = arith.constant 1.000000e+00 : f32
    %355 = vector.broadcast %cst_66 : f32 to vector<2x32xf32>
    %356 = arith.subf %355, %347 : vector<2x32xf32>
    %357 = arith.mulf %356, %354 : vector<2x32xf32>
    %358 = arith.mulf %347, %327 : vector<2x32xf32>
    %359 = arith.addf %357, %358 : vector<2x32xf32>
    %cst_67 = arith.constant dense<0.000000e+00> : vector<2x96xf32>
    %360 = tpu.matmul %146, %2, %cst_67 {dimension_numbers = #tpu.dot_dimension_numbers<[1], [0], [0], [1], [0, 0, 1, 1], [], []>} : vector<2x32xf32>, vector<32x96xf32>, vector<2x96xf32> -> vector<2x96xf32>
    %361 = vector.broadcast %6 : vector<1x96xf32> to vector<2x96xf32>
    %362 = arith.addf %360, %361 : vector<2x96xf32>
    %cst_68 = arith.constant dense<0.000000e+00> : vector<2x96xf32>
    %363 = tpu.matmul %359, %4, %cst_68 {dimension_numbers = #tpu.dot_dimension_numbers<[1], [0], [0], [1], [0, 0, 1, 1], [], []>} : vector<2x32xf32>, vector<32x96xf32>, vector<2x96xf32> -> vector<2x96xf32>
    %364 = vector.extract_strided_slice %362 {offsets = [0, 0], sizes = [2, 32], strides = [1, 1]} : vector<2x96xf32> to vector<2x32xf32>
    %365 = vector.extract_strided_slice %363 {offsets = [0, 0], sizes = [2, 32], strides = [1, 1]} : vector<2x96xf32> to vector<2x32xf32>
    %366 = arith.addf %364, %365 : vector<2x32xf32>
    %367 = arith.negf %366 : vector<2x32xf32>
    %368 = math.exp %367 : vector<2x32xf32>
    %cst_69 = arith.constant 1.000000e+00 : f32
    %369 = vector.broadcast %cst_69 : f32 to vector<2x32xf32>
    %370 = arith.addf %369, %368 : vector<2x32xf32>
    %371 = arith.divf %369, %370 : vector<2x32xf32>
    %372 = vector.extract_strided_slice %362 {offsets = [0, 32], sizes = [2, 32], strides = [1, 1]} : vector<2x96xf32> to vector<2x32xf32>
    %373 = vector.extract_strided_slice %363 {offsets = [0, 32], sizes = [2, 32], strides = [1, 1]} : vector<2x96xf32> to vector<2x32xf32>
    %374 = arith.addf %372, %373 : vector<2x32xf32>
    %375 = arith.negf %374 : vector<2x32xf32>
    %376 = math.exp %375 : vector<2x32xf32>
    %cst_70 = arith.constant 1.000000e+00 : f32
    %377 = vector.broadcast %cst_70 : f32 to vector<2x32xf32>
    %378 = arith.addf %377, %376 : vector<2x32xf32>
    %379 = arith.divf %377, %378 : vector<2x32xf32>
    %380 = vector.extract_strided_slice %362 {offsets = [0, 64], sizes = [2, 32], strides = [1, 1]} : vector<2x96xf32> to vector<2x32xf32>
    %381 = vector.extract_strided_slice %363 {offsets = [0, 64], sizes = [2, 32], strides = [1, 1]} : vector<2x96xf32> to vector<2x32xf32>
    %382 = vector.broadcast %8 : vector<1x32xf32> to vector<2x32xf32>
    %383 = arith.addf %381, %382 : vector<2x32xf32>
    %384 = arith.mulf %371, %383 : vector<2x32xf32>
    %385 = arith.addf %380, %384 : vector<2x32xf32>
    %386 = math.tanh %385 : vector<2x32xf32>
    %cst_71 = arith.constant 1.000000e+00 : f32
    %387 = vector.broadcast %cst_71 : f32 to vector<2x32xf32>
    %388 = arith.subf %387, %379 : vector<2x32xf32>
    %389 = arith.mulf %388, %386 : vector<2x32xf32>
    %390 = arith.mulf %379, %359 : vector<2x32xf32>
    %391 = arith.addf %389, %390 : vector<2x32xf32>
    %cst_72 = arith.constant dense<0.000000e+00> : vector<2x96xf32>
    %392 = tpu.matmul %175, %2, %cst_72 {dimension_numbers = #tpu.dot_dimension_numbers<[1], [0], [0], [1], [0, 0, 1, 1], [], []>} : vector<2x32xf32>, vector<32x96xf32>, vector<2x96xf32> -> vector<2x96xf32>
    %393 = vector.broadcast %6 : vector<1x96xf32> to vector<2x96xf32>
    %394 = arith.addf %392, %393 : vector<2x96xf32>
    %cst_73 = arith.constant dense<0.000000e+00> : vector<2x96xf32>
    %395 = tpu.matmul %391, %4, %cst_73 {dimension_numbers = #tpu.dot_dimension_numbers<[1], [0], [0], [1], [0, 0, 1, 1], [], []>} : vector<2x32xf32>, vector<32x96xf32>, vector<2x96xf32> -> vector<2x96xf32>
    %396 = vector.extract_strided_slice %394 {offsets = [0, 0], sizes = [2, 32], strides = [1, 1]} : vector<2x96xf32> to vector<2x32xf32>
    %397 = vector.extract_strided_slice %395 {offsets = [0, 0], sizes = [2, 32], strides = [1, 1]} : vector<2x96xf32> to vector<2x32xf32>
    %398 = arith.addf %396, %397 : vector<2x32xf32>
    %399 = arith.negf %398 : vector<2x32xf32>
    %400 = math.exp %399 : vector<2x32xf32>
    %cst_74 = arith.constant 1.000000e+00 : f32
    %401 = vector.broadcast %cst_74 : f32 to vector<2x32xf32>
    %402 = arith.addf %401, %400 : vector<2x32xf32>
    %403 = arith.divf %401, %402 : vector<2x32xf32>
    %404 = vector.extract_strided_slice %394 {offsets = [0, 32], sizes = [2, 32], strides = [1, 1]} : vector<2x96xf32> to vector<2x32xf32>
    %405 = vector.extract_strided_slice %395 {offsets = [0, 32], sizes = [2, 32], strides = [1, 1]} : vector<2x96xf32> to vector<2x32xf32>
    %406 = arith.addf %404, %405 : vector<2x32xf32>
    %407 = arith.negf %406 : vector<2x32xf32>
    %408 = math.exp %407 : vector<2x32xf32>
    %cst_75 = arith.constant 1.000000e+00 : f32
    %409 = vector.broadcast %cst_75 : f32 to vector<2x32xf32>
    %410 = arith.addf %409, %408 : vector<2x32xf32>
    %411 = arith.divf %409, %410 : vector<2x32xf32>
    %412 = vector.extract_strided_slice %394 {offsets = [0, 64], sizes = [2, 32], strides = [1, 1]} : vector<2x96xf32> to vector<2x32xf32>
    %413 = vector.extract_strided_slice %395 {offsets = [0, 64], sizes = [2, 32], strides = [1, 1]} : vector<2x96xf32> to vector<2x32xf32>
    %414 = vector.broadcast %8 : vector<1x32xf32> to vector<2x32xf32>
    %415 = arith.addf %413, %414 : vector<2x32xf32>
    %416 = arith.mulf %403, %415 : vector<2x32xf32>
    %417 = arith.addf %412, %416 : vector<2x32xf32>
    %418 = math.tanh %417 : vector<2x32xf32>
    %cst_76 = arith.constant 1.000000e+00 : f32
    %419 = vector.broadcast %cst_76 : f32 to vector<2x32xf32>
    %420 = arith.subf %419, %411 : vector<2x32xf32>
    %421 = arith.mulf %420, %418 : vector<2x32xf32>
    %422 = arith.mulf %411, %391 : vector<2x32xf32>
    %423 = arith.addf %421, %422 : vector<2x32xf32>
    %cst_77 = arith.constant dense<0.000000e+00> : vector<2x96xf32>
    %424 = tpu.matmul %204, %2, %cst_77 {dimension_numbers = #tpu.dot_dimension_numbers<[1], [0], [0], [1], [0, 0, 1, 1], [], []>} : vector<2x32xf32>, vector<32x96xf32>, vector<2x96xf32> -> vector<2x96xf32>
    %425 = vector.broadcast %6 : vector<1x96xf32> to vector<2x96xf32>
    %426 = arith.addf %424, %425 : vector<2x96xf32>
    %cst_78 = arith.constant dense<0.000000e+00> : vector<2x96xf32>
    %427 = tpu.matmul %423, %4, %cst_78 {dimension_numbers = #tpu.dot_dimension_numbers<[1], [0], [0], [1], [0, 0, 1, 1], [], []>} : vector<2x32xf32>, vector<32x96xf32>, vector<2x96xf32> -> vector<2x96xf32>
    %428 = vector.extract_strided_slice %426 {offsets = [0, 0], sizes = [2, 32], strides = [1, 1]} : vector<2x96xf32> to vector<2x32xf32>
    %429 = vector.extract_strided_slice %427 {offsets = [0, 0], sizes = [2, 32], strides = [1, 1]} : vector<2x96xf32> to vector<2x32xf32>
    %430 = arith.addf %428, %429 : vector<2x32xf32>
    %431 = arith.negf %430 : vector<2x32xf32>
    %432 = math.exp %431 : vector<2x32xf32>
    %cst_79 = arith.constant 1.000000e+00 : f32
    %433 = vector.broadcast %cst_79 : f32 to vector<2x32xf32>
    %434 = arith.addf %433, %432 : vector<2x32xf32>
    %435 = arith.divf %433, %434 : vector<2x32xf32>
    %436 = vector.extract_strided_slice %426 {offsets = [0, 32], sizes = [2, 32], strides = [1, 1]} : vector<2x96xf32> to vector<2x32xf32>
    %437 = vector.extract_strided_slice %427 {offsets = [0, 32], sizes = [2, 32], strides = [1, 1]} : vector<2x96xf32> to vector<2x32xf32>
    %438 = arith.addf %436, %437 : vector<2x32xf32>
    %439 = arith.negf %438 : vector<2x32xf32>
    %440 = math.exp %439 : vector<2x32xf32>
    %cst_80 = arith.constant 1.000000e+00 : f32
    %441 = vector.broadcast %cst_80 : f32 to vector<2x32xf32>
    %442 = arith.addf %441, %440 : vector<2x32xf32>
    %443 = arith.divf %441, %442 : vector<2x32xf32>
    %444 = vector.extract_strided_slice %426 {offsets = [0, 64], sizes = [2, 32], strides = [1, 1]} : vector<2x96xf32> to vector<2x32xf32>
    %445 = vector.extract_strided_slice %427 {offsets = [0, 64], sizes = [2, 32], strides = [1, 1]} : vector<2x96xf32> to vector<2x32xf32>
    %446 = vector.broadcast %8 : vector<1x32xf32> to vector<2x32xf32>
    %447 = arith.addf %445, %446 : vector<2x32xf32>
    %448 = arith.mulf %435, %447 : vector<2x32xf32>
    %449 = arith.addf %444, %448 : vector<2x32xf32>
    %450 = math.tanh %449 : vector<2x32xf32>
    %cst_81 = arith.constant 1.000000e+00 : f32
    %451 = vector.broadcast %cst_81 : f32 to vector<2x32xf32>
    %452 = arith.subf %451, %443 : vector<2x32xf32>
    %453 = arith.mulf %452, %450 : vector<2x32xf32>
    %454 = arith.mulf %443, %423 : vector<2x32xf32>
    %455 = arith.addf %453, %454 : vector<2x32xf32>
    %cst_82 = arith.constant dense<0.000000e+00> : vector<2x96xf32>
    %456 = tpu.matmul %233, %2, %cst_82 {dimension_numbers = #tpu.dot_dimension_numbers<[1], [0], [0], [1], [0, 0, 1, 1], [], []>} : vector<2x32xf32>, vector<32x96xf32>, vector<2x96xf32> -> vector<2x96xf32>
    %457 = vector.broadcast %6 : vector<1x96xf32> to vector<2x96xf32>
    %458 = arith.addf %456, %457 : vector<2x96xf32>
    %cst_83 = arith.constant dense<0.000000e+00> : vector<2x96xf32>
    %459 = tpu.matmul %455, %4, %cst_83 {dimension_numbers = #tpu.dot_dimension_numbers<[1], [0], [0], [1], [0, 0, 1, 1], [], []>} : vector<2x32xf32>, vector<32x96xf32>, vector<2x96xf32> -> vector<2x96xf32>
    %460 = vector.extract_strided_slice %458 {offsets = [0, 0], sizes = [2, 32], strides = [1, 1]} : vector<2x96xf32> to vector<2x32xf32>
    %461 = vector.extract_strided_slice %459 {offsets = [0, 0], sizes = [2, 32], strides = [1, 1]} : vector<2x96xf32> to vector<2x32xf32>
    %462 = arith.addf %460, %461 : vector<2x32xf32>
    %463 = arith.negf %462 : vector<2x32xf32>
    %464 = math.exp %463 : vector<2x32xf32>
    %cst_84 = arith.constant 1.000000e+00 : f32
    %465 = vector.broadcast %cst_84 : f32 to vector<2x32xf32>
    %466 = arith.addf %465, %464 : vector<2x32xf32>
    %467 = arith.divf %465, %466 : vector<2x32xf32>
    %468 = vector.extract_strided_slice %458 {offsets = [0, 32], sizes = [2, 32], strides = [1, 1]} : vector<2x96xf32> to vector<2x32xf32>
    %469 = vector.extract_strided_slice %459 {offsets = [0, 32], sizes = [2, 32], strides = [1, 1]} : vector<2x96xf32> to vector<2x32xf32>
    %470 = arith.addf %468, %469 : vector<2x32xf32>
    %471 = arith.negf %470 : vector<2x32xf32>
    %472 = math.exp %471 : vector<2x32xf32>
    %cst_85 = arith.constant 1.000000e+00 : f32
    %473 = vector.broadcast %cst_85 : f32 to vector<2x32xf32>
    %474 = arith.addf %473, %472 : vector<2x32xf32>
    %475 = arith.divf %473, %474 : vector<2x32xf32>
    %476 = vector.extract_strided_slice %458 {offsets = [0, 64], sizes = [2, 32], strides = [1, 1]} : vector<2x96xf32> to vector<2x32xf32>
    %477 = vector.extract_strided_slice %459 {offsets = [0, 64], sizes = [2, 32], strides = [1, 1]} : vector<2x96xf32> to vector<2x32xf32>
    %478 = vector.broadcast %8 : vector<1x32xf32> to vector<2x32xf32>
    %479 = arith.addf %477, %478 : vector<2x32xf32>
    %480 = arith.mulf %467, %479 : vector<2x32xf32>
    %481 = arith.addf %476, %480 : vector<2x32xf32>
    %482 = math.tanh %481 : vector<2x32xf32>
    %cst_86 = arith.constant 1.000000e+00 : f32
    %483 = vector.broadcast %cst_86 : f32 to vector<2x32xf32>
    %484 = arith.subf %483, %475 : vector<2x32xf32>
    %485 = arith.mulf %484, %482 : vector<2x32xf32>
    %486 = arith.mulf %475, %455 : vector<2x32xf32>
    %487 = arith.addf %485, %486 : vector<2x32xf32>
    %cst_87 = arith.constant dense<0.000000e+00> : vector<2x96xf32>
    %488 = tpu.matmul %262, %2, %cst_87 {dimension_numbers = #tpu.dot_dimension_numbers<[1], [0], [0], [1], [0, 0, 1, 1], [], []>} : vector<2x32xf32>, vector<32x96xf32>, vector<2x96xf32> -> vector<2x96xf32>
    %489 = vector.broadcast %6 : vector<1x96xf32> to vector<2x96xf32>
    %490 = arith.addf %488, %489 : vector<2x96xf32>
    %cst_88 = arith.constant dense<0.000000e+00> : vector<2x96xf32>
    %491 = tpu.matmul %487, %4, %cst_88 {dimension_numbers = #tpu.dot_dimension_numbers<[1], [0], [0], [1], [0, 0, 1, 1], [], []>} : vector<2x32xf32>, vector<32x96xf32>, vector<2x96xf32> -> vector<2x96xf32>
    %492 = vector.extract_strided_slice %490 {offsets = [0, 0], sizes = [2, 32], strides = [1, 1]} : vector<2x96xf32> to vector<2x32xf32>
    %493 = vector.extract_strided_slice %491 {offsets = [0, 0], sizes = [2, 32], strides = [1, 1]} : vector<2x96xf32> to vector<2x32xf32>
    %494 = arith.addf %492, %493 : vector<2x32xf32>
    %495 = arith.negf %494 : vector<2x32xf32>
    %496 = math.exp %495 : vector<2x32xf32>
    %cst_89 = arith.constant 1.000000e+00 : f32
    %497 = vector.broadcast %cst_89 : f32 to vector<2x32xf32>
    %498 = arith.addf %497, %496 : vector<2x32xf32>
    %499 = arith.divf %497, %498 : vector<2x32xf32>
    %500 = vector.extract_strided_slice %490 {offsets = [0, 32], sizes = [2, 32], strides = [1, 1]} : vector<2x96xf32> to vector<2x32xf32>
    %501 = vector.extract_strided_slice %491 {offsets = [0, 32], sizes = [2, 32], strides = [1, 1]} : vector<2x96xf32> to vector<2x32xf32>
    %502 = arith.addf %500, %501 : vector<2x32xf32>
    %503 = arith.negf %502 : vector<2x32xf32>
    %504 = math.exp %503 : vector<2x32xf32>
    %cst_90 = arith.constant 1.000000e+00 : f32
    %505 = vector.broadcast %cst_90 : f32 to vector<2x32xf32>
    %506 = arith.addf %505, %504 : vector<2x32xf32>
    %507 = arith.divf %505, %506 : vector<2x32xf32>
    %508 = vector.extract_strided_slice %490 {offsets = [0, 64], sizes = [2, 32], strides = [1, 1]} : vector<2x96xf32> to vector<2x32xf32>
    %509 = vector.extract_strided_slice %491 {offsets = [0, 64], sizes = [2, 32], strides = [1, 1]} : vector<2x96xf32> to vector<2x32xf32>
    %510 = vector.broadcast %8 : vector<1x32xf32> to vector<2x32xf32>
    %511 = arith.addf %509, %510 : vector<2x32xf32>
    %512 = arith.mulf %499, %511 : vector<2x32xf32>
    %513 = arith.addf %508, %512 : vector<2x32xf32>
    %514 = math.tanh %513 : vector<2x32xf32>
    %cst_91 = arith.constant 1.000000e+00 : f32
    %515 = vector.broadcast %cst_91 : f32 to vector<2x32xf32>
    %516 = arith.subf %515, %507 : vector<2x32xf32>
    %517 = arith.mulf %516, %514 : vector<2x32xf32>
    %518 = arith.mulf %507, %487 : vector<2x32xf32>
    %519 = arith.addf %517, %518 : vector<2x32xf32>
    %c0_92 = arith.constant 0 : index
    %c0_93 = arith.constant 0 : index
    %520 = vector.load %arg9[%c0_92, %c0_93] : memref<1x32xf32, #tpu.memory_space<vmem>>, vector<1x32xf32>
    %521 = vector.broadcast %520 : vector<1x32xf32> to vector<2x32xf32>
    %522 = arith.mulf %519, %521 : vector<2x32xf32>
    %cst_94 = arith.constant dense<0.000000e+00> : vector<2xf32>
    %523 = vector.multi_reduction <add>, %522, %cst_94 [1] : vector<2x32xf32> to vector<2xf32>
    %524 = vector.shape_cast %523 : vector<2xf32> to vector<2x1xf32>
    %c0_95 = arith.constant 0 : index
    %c0_96 = arith.constant 0 : index
    %525 = vector.load %arg10[%c0_95, %c0_96] : memref<1x1xf32, #tpu.memory_space<vmem>>, vector<1x1xf32>
    %526 = vector.broadcast %525 : vector<1x1xf32> to vector<2x1xf32>
    %527 = arith.addf %524, %526 : vector<2x1xf32>
    %528 = arith.negf %527 : vector<2x1xf32>
    %529 = math.exp %528 : vector<2x1xf32>
    %cst_97 = arith.constant 1.000000e+00 : f32
    %530 = vector.broadcast %cst_97 : f32 to vector<2x1xf32>
    %531 = arith.addf %530, %529 : vector<2x1xf32>
    %532 = arith.divf %530, %531 : vector<2x1xf32>
    %c0_98 = arith.constant 0 : index
    %c0_99 = arith.constant 0 : index
    %533 = vector.load %arg11[%c0_98, %c0_99] : memref<2x1xf32, #tpu.memory_space<vmem>>, vector<2x1xf32>
    tpu.vector_store %arg11[%c0_98, %c0_99], %532 {strides = array<i32>} : memref<2x1xf32, #tpu.memory_space<vmem>>, vector<2x1xf32>,
    return
  }
}

</mosaic_0001>

<llo_original>
// kernel: gru_discriminator_forward.1
$region0: #{gru_discriminator_forward.1}
  #allocation0 [shape = 'u32[]', space=smem, size = 0x4, offset = 0x4, fixed_abs, tag = 'smem constant byte address 0x4 - core index']
  #allocation1 [shape = 'u32[144,128]{1,0:T(1,128)}', space=vmem, size = 0x12000, scoped, tag = 'internal scratch']
  #allocation2 [shape = 'f32[1,1]{1,0:T(1,128)S(1)}', space=vmem, size = 0x200, scoped, tag = 'scoped memory for gru_discriminator_forward.1']
  %s0 = inlined_call_operand.hbm [shape: f32[2,8,16], index: 0, kind: input, shape index: {}]
  %s1 = inlined_call_operand.hbm [shape: f32[16,96], index: 1, kind: input, shape index: {}]
  %s2 = inlined_call_operand.hbm [shape: f32[32,96], index: 2, kind: input, shape index: {}]
  %s3 = inlined_call_operand.vmem [shape: f32[1,96], index: 3, kind: input, shape index: {}]
  %s4 = inlined_call_operand.vmem [shape: f32[1,32], index: 4, kind: input, shape index: {}]
  %s5 = inlined_call_operand.vmem [shape: f32[32,96], index: 5, kind: input, shape index: {}]
  %s6 = inlined_call_operand.hbm [shape: f32[32,96], index: 6, kind: input, shape index: {}]
  %s7 = inlined_call_operand.hbm [shape: f32[1,96], index: 7, kind: input, shape index: {}]
  %s8 = inlined_call_operand.hbm [shape: f32[1,32], index: 8, kind: input, shape index: {}]
  %s9 = inlined_call_operand.vmem [shape: f32[1,32], index: 9, kind: input, shape index: {}]
  %s10 = inlined_call_operand.<no memory space> [shape: f32[1,1], index: 10, kind: input, shape index: {}]
  %s11 = inlined_call_operand.vmem [shape: f32[2,1], index: 11, kind: output, shape index: {}]
  %s12 = sld [smem:[#allocation0]]
  $region78: #{gru_discriminator_forward.1} parent=0
    _
  %s14 = ssub.s32 1, %s12
  %s15 = scalar_select 0, %s14, %s12
  %v16 = vstv %s10
  %17 = vst [vmem:[#allocation2] sm:$0x1] %v16
  $region1: #{gru_discriminator_forward.1} parent=0
    #allocation3 [shape = 'u8[8192]{0}', space=vmem, size = 0x2000, scoped, tag = 'input window, operand 0, single buffered']
    #allocation4 [shape = 's32[1]{0}', space=sflag, size = 0x4, scoped, tag = 'scoped memory for gru_discriminator_forward.1']
    #allocation5 [shape = 'u8[8192]{0}', space=vmem, size = 0x2000, scoped, tag = 'input window, operand 1, single buffered']
    #allocation6 [shape = 's32[1]{0}', space=sflag, size = 0x4, scoped, tag = 'scoped memory for gru_discriminator_forward.1']
    #allocation7 [shape = 'u8[16384]{0}', space=vmem, size = 0x4000, scoped, tag = 'input window, operand 2, single buffered']
    #allocation8 [shape = 'u8[16384]{0}', space=vmem, size = 0x4000, scoped, tag = 'input window, operand 6, single buffered']
    #allocation9 [shape = 's32[1]{0}', space=sflag, size = 0x4, scoped, tag = 'scoped memory for gru_discriminator_forward.1']
    #allocation10 [shape = 'u8[512]{0}', space=vmem, size = 0x400, scoped, tag = 'input window, operand 7, single buffered']
    #allocation11 [shape = 'u8[512]{0}', space=vmem, size = 0x400, scoped, tag = 'input window, operand 8, single buffered']
    #allocation12 [shape = 's32[1]{0}', space=sflag, size = 0x4, scoped, tag = 'scoped memory for gru_discriminator_forward.1']
    %18 = vsyncpa [#allocation4], 0
    %19 = vsyncpa [#allocation6], 0
    %20 = vsyncpa [#allocation9], 0
    %21 = vsyncpa [#allocation12], 0
    // Predicated region
    $region2: #{gru_discriminator_forward.1} parent=1 // pred_check
      _
    $region3: #{gru_discriminator_forward.1} parent=1 // pred_check_branch
      %23 = sbr.rel (0) target = $region5
    $region4: #{gru_discriminator_forward.1} parent=1 // pred_region
      %s25 = ssub.s32 256, 256
      %26 = vsyncadd [#allocation4], %s25
      %s27 = sshll.u32 [#allocation3], 4
      %s28 = int_to_ptr.vmem [resolvable:$true] %s27
      %33 = dma.hbm_to_vmem [thread:$0]  %s0, 256, %s28, [#allocation4], 128, 128, 8
    $region5: #{gru_discriminator_forward.1} parent=1 // pred_fallthru
      _
    // Predicated region
    $region6: #{gru_discriminator_forward.1} parent=1 // pred_check
      _
    $region7: #{gru_discriminator_forward.1} parent=1 // pred_check_branch
      %35 = sbr.rel (0) target = $region9
    $region8: #{gru_discriminator_forward.1} parent=1 // pred_region
      %s37 = ssub.s32 256, 256
      %38 = vsyncadd [#allocation6], %s37
      %s39 = sshll.u32 [#allocation5], 4
      %s40 = int_to_ptr.vmem [resolvable:$true] %s39
      %45 = dma.hbm_to_vmem [thread:$0]  %s1, 256, %s40, [#allocation6], 128, 128, 8
    $region9: #{gru_discriminator_forward.1} parent=1 // pred_fallthru
      _
    // Predicated region
    $region10: #{gru_discriminator_forward.1} parent=1 // pred_check
      _
    $region11: #{gru_discriminator_forward.1} parent=1 // pred_check_branch
      %47 = sbr.rel (0) target = $region13
    $region12: #{gru_discriminator_forward.1} parent=1 // pred_region
      %s49 = ssub.s32 512, 512
      %50 = vsyncadd [#allocation6], %s49
      %s51 = sshll.u32 [#allocation7], 4
      %s52 = int_to_ptr.vmem [resolvable:$true] %s51
      %57 = dma.hbm_to_vmem [thread:$0]  %s2, 512, %s52, [#allocation6], 128, 128, 8
    $region13: #{gru_discriminator_forward.1} parent=1 // pred_fallthru
      _
    // Predicated region
    $region14: #{gru_discriminator_forward.1} parent=1 // pred_check
      _
    $region15: #{gru_discriminator_forward.1} parent=1 // pred_check_branch
      %59 = sbr.rel (0) target = $region17
    $region16: #{gru_discriminator_forward.1} parent=1 // pred_region
      _
    $region17: #{gru_discriminator_forward.1} parent=1 // pred_fallthru
      _
    // Predicated region
    $region18: #{gru_discriminator_forward.1} parent=1 // pred_check
      _
    $region19: #{gru_discriminator_forward.1} parent=1 // pred_check_branch
      %61 = sbr.rel (0) target = $region21
    $region20: #{gru_discriminator_forward.1} parent=1 // pred_region
      _
    $region21: #{gru_discriminator_forward.1} parent=1 // pred_fallthru
      _
    // Predicated region
    $region22: #{gru_discriminator_forward.1} parent=1 // pred_check
      _
    $region23: #{gru_discriminator_forward.1} parent=1 // pred_check_branch
      %63 = sbr.rel (0) target = $region25
    $region24: #{gru_discriminator_forward.1} parent=1 // pred_region
      _
    $region25: #{gru_discriminator_forward.1} parent=1 // pred_fallthru
      _
    // Predicated region
    $region26: #{gru_discriminator_forward.1} parent=1 // pred_check
      _
    $region27: #{gru_discriminator_forward.1} parent=1 // pred_check_branch
      %65 = sbr.rel (0) target = $region29
    $region28: #{gru_discriminator_forward.1} parent=1 // pred_region
      %s67 = ssub.s32 512, 512
      %68 = vsyncadd [#allocation9], %s67
      %s69 = sshll.u32 [#allocation8], 4
      %s70 = int_to_ptr.vmem [resolvable:$true] %s69
      %75 = dma.hbm_to_vmem [thread:$0]  %s6, 512, %s70, [#allocation9], 128, 128, 8
    $region29: #{gru_discriminator_forward.1} parent=1 // pred_fallthru
      _
    // Predicated region
    $region30: #{gru_discriminator_forward.1} parent=1 // pred_check
      _
    $region31: #{gru_discriminator_forward.1} parent=1 // pred_check_branch
      %77 = sbr.rel (0) target = $region33
    $region32: #{gru_discriminator_forward.1} parent=1 // pred_region
      %s79 = ssub.s32 16, 16
      %80 = vsyncadd [#allocation9], %s79
      %s82 = sshll.u32 [#allocation10], 4
      %s83 = int_to_ptr.vmem [resolvable:$true] %s82
      %85 = dma.hbm_to_vmem [thread:$0]  %s7, 16, %s83, [#allocation9]
    $region33: #{gru_discriminator_forward.1} parent=1 // pred_fallthru
      _
    // Predicated region
    $region34: #{gru_discriminator_forward.1} parent=1 // pred_check
      _
    $region35: #{gru_discriminator_forward.1} parent=1 // pred_check_branch
      %87 = sbr.rel (0) target = $region37
    $region36: #{gru_discriminator_forward.1} parent=1 // pred_region
      %s89 = ssub.s32 16, 16
      %90 = vsyncadd [#allocation12], %s89
      %s92 = sshll.u32 [#allocation11], 4
      %s93 = int_to_ptr.vmem [resolvable:$true] %s92
      %95 = dma.hbm_to_vmem [thread:$0]  %s8, 16, %s93, [#allocation12]
    $region37: #{gru_discriminator_forward.1} parent=1 // pred_fallthru
      _
    // Predicated region
    $region38: #{gru_discriminator_forward.1} parent=1 // pred_check
      _
    $region39: #{gru_discriminator_forward.1} parent=1 // pred_check_branch
      %97 = sbr.rel (0) target = $region41
    $region40: #{gru_discriminator_forward.1} parent=1 // pred_region
      _
    $region41: #{gru_discriminator_forward.1} parent=1 // pred_fallthru
      _
    // Predicated region
    $region42: #{gru_discriminator_forward.1} parent=1 // pred_check
      _
    $region43: #{gru_discriminator_forward.1} parent=1 // pred_check_branch
      %99 = sbr.rel (0) target = $region45
    $region44: #{gru_discriminator_forward.1} parent=1 // pred_region
      _
    $region45: #{gru_discriminator_forward.1} parent=1 // pred_fallthru
      _
    // Predicated region
    $region46: #{gru_discriminator_forward.1} parent=1 // pred_check
      _
    $region47: #{gru_discriminator_forward.1} parent=1 // pred_check_branch
      %101 = sbr.rel (0) target = $region49
    $region48: #{gru_discriminator_forward.1} parent=1 // pred_region
      %102 = dma.done [#allocation4], 256
    $region49: #{gru_discriminator_forward.1} parent=1 // pred_fallthru
      _
    // Predicated region
    $region50: #{gru_discriminator_forward.1} parent=1 // pred_check
      _
    $region51: #{gru_discriminator_forward.1} parent=1 // pred_check_branch
      %104 = sbr.rel (0) target = $region53
    $region52: #{gru_discriminator_forward.1} parent=1 // pred_region
      %105 = dma.done [#allocation6], 256
    $region53: #{gru_discriminator_forward.1} parent=1 // pred_fallthru
      _
    // Predicated region
    $region54: #{gru_discriminator_forward.1} parent=1 // pred_check
      _
    $region55: #{gru_discriminator_forward.1} parent=1 // pred_check_branch
      %107 = sbr.rel (0) target = $region57
    $region56: #{gru_discriminator_forward.1} parent=1 // pred_region
      %108 = dma.done [#allocation6], 512
    $region57: #{gru_discriminator_forward.1} parent=1 // pred_fallthru
      _
    // Predicated region
    $region58: #{gru_discriminator_forward.1} parent=1 // pred_check
      _
    $region59: #{gru_discriminator_forward.1} parent=1 // pred_check_branch
      %110 = sbr.rel (0) target = $region61
    $region60: #{gru_discriminator_forward.1} parent=1 // pred_region
      %111 = dma.done [#allocation9], 512
    $region61: #{gru_discriminator_forward.1} parent=1 // pred_fallthru
      _
    // Predicated region
    $region62: #{gru_discriminator_forward.1} parent=1 // pred_check
      _
    $region63: #{gru_discriminator_forward.1} parent=1 // pred_check_branch
      %113 = sbr.rel (0) target = $region65
    $region64: #{gru_discriminator_forward.1} parent=1 // pred_region
      %114 = dma.done [#allocation9], 16
    $region65: #{gru_discriminator_forward.1} parent=1 // pred_fallthru
      _
    // Predicated region
    $region66: #{gru_discriminator_forward.1} parent=1 // pred_check
      _
    $region67: #{gru_discriminator_forward.1} parent=1 // pred_check_branch
      %116 = sbr.rel (0) target = $region69
    $region68: #{gru_discriminator_forward.1} parent=1 // pred_region
      %117 = dma.done [#allocation12], 16
    $region69: #{gru_discriminator_forward.1} parent=1 // pred_fallthru
      _
    %v118 = vld [vmem:[#allocation3] sm:$0xff]
    %v119 = vld [vmem:[#allocation3 + $0x8] sm:$0xff]
    %v120 = vld [vmem:[#allocation5] sm:$0xff]
    %v121 = vld [vmem:[#allocation5 + $0x8] sm:$0xff]
    %v122 = vld [vmem:[%s5] sm:$0xff]
    %v123 = vld [vmem:[%s5 + $0x8] sm:$0xff]
    %v124 = vld [vmem:[%s5 + $0x10] sm:$0xff]
    %v125 = vld [vmem:[%s5 + $0x18] sm:$0xff]
    %v126 = vld [vmem:[#allocation7] sm:$0xff]
    %v127 = vld [vmem:[#allocation7 + $0x8] sm:$0xff]
    %v128 = vld [vmem:[#allocation7 + $0x10] sm:$0xff]
    %v129 = vld [vmem:[#allocation7 + $0x18] sm:$0xff]
    %v130 = vld [vmem:[#allocation8] sm:$0xff]
    %v131 = vld [vmem:[#allocation8 + $0x8] sm:$0xff]
    %v132 = vld [vmem:[#allocation8 + $0x10] sm:$0xff]
    %v133 = vld [vmem:[#allocation8 + $0x18] sm:$0xff]
    %v134 = vld [vmem:[%s3] sm:$0x1]
    %v135 = vld [vmem:[#allocation10] sm:$0x1]
    %v136 = vld [vmem:[%s4] sm:$0x1]
    %v137 = vld [vmem:[#allocation11] sm:$0x1]
    %v139 = vlaneseq
    %v140 = vshrl.u32 %v139, 7
    %v141 = vsub.s32 0, %v140
    %v142 = vrot.slane %v134, %v141
    %vm144 = vcmask 130048
    %v146 = vsel %vm144, %v118, 0
    %v149 = vsel %vm144, %v119, 0
    %151 = vmatprep.subr.mxu0 0.0
    %152 = vmatpush1.msra.mxu0 %v120
    %153 = vmatprep.subr.mxu0 0.0
    %154 = vmatpush1.msra.mxu0 %v121
    %155 = vmatprep.subr.mxu0 0.0
    %156 = vmatpush1.msra.mxu0 0.0
    %157 = vmatprep.subr.mxu0 0.0
    %158 = vmatpush1.msra.mxu0 0.0
    %159 = vmatprep.subr.mxu0 0.0
    %160 = vmatpush1.msra.mxu0 0.0
    %161 = vmatprep.subr.mxu0 0.0
    %162 = vmatpush1.msra.mxu0 0.0
    %163 = vmatprep.subr.mxu0 0.0
    %164 = vmatpush1.msra.mxu0 0.0
    %165 = vmatprep.subr.mxu0 0.0
    %166 = vmatpush1.msra.mxu0 0.0
    %167 = vmatprep.subr.mxu0 0.0
    %168 = vmatpush1.msra.mxu0 0.0
    %169 = vmatprep.subr.mxu0 0.0
    %170 = vmatpush1.msra.mxu0 0.0
    %171 = vmatprep.subr.mxu0 0.0
    %172 = vmatpush1.msra.mxu0 0.0
    %173 = vmatprep.subr.mxu0 0.0
    %174 = vmatpush1.msra.mxu0 0.0
    %175 = vmatprep.subr.mxu0 0.0
    %176 = vmatpush1.msra.mxu0 0.0
    %177 = vmatprep.subr.mxu0 0.0
    %178 = vmatpush1.msra.mxu0 0.0
    %179 = vmatprep.subr.mxu0 0.0
    %180 = vmatpush1.msra.mxu0 0.0
    %181 = vmatprep.subr.mxu0 0.0
    %182 = vmatpush1.msra.mxu0 0.0
    %183 = vmatprep.subr.mxu0 0.0
    %184 = vmatpush1.msra.mxu0 0.0
    %185 = vmatprep.subr.mxu0 0.0
    %186 = vmatpush1.msra.mxu0 0.0
    %187 = vmatprep.subr.mxu0 0.0
    %188 = vmatpush1.msra.mxu0 0.0
    %189 = vmatprep.subr.mxu0 0.0
    %190 = vmatpush1.msra.mxu0 0.0
    %191 = vmatprep.subr.mxu0 0.0
    %192 = vmatpush1.msra.mxu0 0.0
    %193 = vmatprep.subr.mxu0 0.0
    %194 = vmatpush1.msra.mxu0 0.0
    %195 = vmatprep.subr.mxu0 0.0
    %196 = vmatpush1.msra.mxu0 0.0
    %197 = vmatprep.subr.mxu0 0.0
    %198 = vmatpush1.msra.mxu0 0.0
    %199 = vmatprep.subr.mxu0 0.0
    %200 = vmatpush1.msra.mxu0 0.0
    %201 = vmatprep.subr.mxu0 0.0
    %202 = vmatpush1.msra.mxu0 0.0
    %203 = vmatprep.subr.mxu0 0.0
    %204 = vmatpush1.msra.mxu0 0.0
    %205 = vmatprep.subr.mxu0 0.0
    %206 = vmatpush1.msra.mxu0 0.0
    %207 = vmatprep.subr.mxu0 0.0
    %208 = vmatpush1.msra.mxu0 0.0
    %209 = vmatprep.subr.mxu0 0.0
    %210 = vmatpush1.msra.mxu0 0.0
    %211 = vmatprep.subr.mxu0 0.0
    %212 = vmatpush1.msra.mxu0 0.0
    %213 = vmatprep.subr.mxu0 0.0
    %214 = vmatpush1.msra.mxu0 0.0
    %215 = vmatprep.mubr.f32.mxu0 0.0
    %216 = vmatmul.mubr.f32.gmra.mrb[0].mxu0 %v146
    %v217 = vpop.f32.mrb[0].mxu0
    %v218 = vadd.f32 %v142, %v217
    %v219 = vpop.f32.mrb[0].mxu0
    %220 = vmatprep.mubr.f32.mxu0 0.0
    %221 = vmatmul.mubr.f32.gmra.mrb[0].mxu0 %v149
    %v222 = vpop.f32.mrb[0].mxu0
    %v223 = vadd.f32 %v142, %v222
    %v224 = vpop.f32.mrb[0].mxu0
    %225 = vdwg.mxu0
    %vm226 = vcmask 261120
    %v228 = vsel %vm226, 0.0, 0
    %230 = vmatprep.subr.mxu0 0.0
    %231 = vmatpush1.msra.mxu0 %v126
    %232 = vmatprep.subr.mxu0 0.0
    %233 = vmatpush1.msra.mxu0 %v127
    %234 = vmatprep.subr.mxu0 0.0
    %235 = vmatpush1.msra.mxu0 %v128
    %236 = vmatprep.subr.mxu0 0.0
    %237 = vmatpush1.msra.mxu0 %v129
    %238 = vmatprep.subr.mxu0 0.0
    %239 = vmatpush1.msra.mxu0 0.0
    %240 = vmatprep.subr.mxu0 0.0
    %241 = vmatpush1.msra.mxu0 0.0
    %242 = vmatprep.subr.mxu0 0.0
    %243 = vmatpush1.msra.mxu0 0.0
    %244 = vmatprep.subr.mxu0 0.0
    %245 = vmatpush1.msra.mxu0 0.0
    %246 = vmatprep.subr.mxu0 0.0
    %247 = vmatpush1.msra.mxu0 0.0
    %248 = vmatprep.subr.mxu0 0.0
    %249 = vmatpush1.msra.mxu0 0.0
    %250 = vmatprep.subr.mxu0 0.0
    %251 = vmatpush1.msra.mxu0 0.0
    %252 = vmatprep.subr.mxu0 0.0
    %253 = vmatpush1.msra.mxu0 0.0
    %254 = vmatprep.subr.mxu0 0.0
    %255 = vmatpush1.msra.mxu0 0.0
    %256 = vmatprep.subr.mxu0 0.0
    %257 = vmatpush1.msra.mxu0 0.0
    %258 = vmatprep.subr.mxu0 0.0
    %259 = vmatpush1.msra.mxu0 0.0
    %260 = vmatprep.subr.mxu0 0.0
    %261 = vmatpush1.msra.mxu0 0.0
    %262 = vmatprep.subr.mxu0 0.0
    %263 = vmatpush1.msra.mxu0 0.0
    %264 = vmatprep.subr.mxu0 0.0
    %265 = vmatpush1.msra.mxu0 0.0
    %266 = vmatprep.subr.mxu0 0.0
    %267 = vmatpush1.msra.mxu0 0.0
    %268 = vmatprep.subr.mxu0 0.0
    %269 = vmatpush1.msra.mxu0 0.0
    %270 = vmatprep.subr.mxu0 0.0
    %271 = vmatpush1.msra.mxu0 0.0
    %272 = vmatprep.subr.mxu0 0.0
    %273 = vmatpush1.msra.mxu0 0.0
    %274 = vmatprep.subr.mxu0 0.0
    %275 = vmatpush1.msra.mxu0 0.0
    %276 = vmatprep.subr.mxu0 0.0
    %277 = vmatpush1.msra.mxu0 0.0
    %278 = vmatprep.subr.mxu0 0.0
    %279 = vmatpush1.msra.mxu0 0.0
    %280 = vmatprep.subr.mxu0 0.0
    %281 = vmatpush1.msra.mxu0 0.0
    %282 = vmatprep.subr.mxu0 0.0
    %283 = vmatpush1.msra.mxu0 0.0
    %284 = vmatprep.subr.mxu0 0.0
    %285 = vmatpush1.msra.mxu0 0.0
    %286 = vmatprep.subr.mxu0 0.0
    %287 = vmatpush1.msra.mxu0 0.0
    %288 = vmatprep.subr.mxu0 0.0
    %289 = vmatpush1.msra.mxu0 0.0
    %290 = vmatprep.subr.mxu0 0.0
    %291 = vmatpush1.msra.mxu0 0.0
    %292 = vmatprep.subr.mxu0 0.0
    %293 = vmatpush1.msra.mxu0 0.0
    %294 = vmatprep.mubr.f32.mxu0 0.0
    %295 = vmatmul.mubr.f32.gmra.mrb[0].mxu0 %v228
    %v296 = vpop.f32.mrb[0].mxu0
    %v297 = vadd.f32 0.0, %v296
    %v298 = vpop.f32.mrb[0].mxu0
    %299 = vdwg.mxu0
    %v301 = vrot.slane %v297, 1
    %v304 = vadd.f32 %v218, %v297
    %v305 = vadd.f32 %v223, %v301
    %v306 = vxor.u32 %v304, 2147483648
    %v307 = vxor.u32 %v305, 2147483648
    %v308 = vmul.f32 %v306, 1.442695
    %v309 = vpow.pop %v308
    %v310 = vmul.f32 %v307, 1.442695
    %v311 = vpow.pop %v310
    %v312 = vadd.f32 %v309, 1.0
    %v313 = vadd.f32 %v311, 1.0
    %v314 = vrcp.pop %v312
    %v315 = vmul.f32 1.0, %v314
    %v316 = vrcp.pop %v313
    %v317 = vmul.f32 1.0, %v316
    %v319 = vlaneseq
    %v320 = vshrl.u32 %v319, 7
    %v321 = vsub.s32 0, %v320
    %v322 = vrot.slane %v136, %v321
    %323 = vrot.lane.b32.xlu0 %v322, 64
    %v324 = vpop.permute.xlu0 %323
    %v326 = vadd.f32 %v297, %v324
    %v328 = vrot.slane %v326, 1
    %329 = vrot.lane.b32.xlu0 %v326, 64
    %v330 = vpop.permute.xlu0 %329
    %331 = vrot.lane.b32.xlu0 %v328, 64
    %v332 = vpop.permute.xlu0 %331
    %v335 = vmul.f32 %v315, %v330
    %v336 = vmul.f32 %v317, %v332
    %339 = vrot.lane.b32.xlu0 %v335, 64
    %v340 = vpop.permute.xlu0 %339
    %341 = vrot.lane.b32.xlu0 %v336, 64
    %v342 = vpop.permute.xlu0 %341
    %v345 = vadd.f32 %v218, %v340
    %v346 = vadd.f32 %v223, %v342
    %v347 = vtanh.pop %v345
    %v348 = vtanh.pop %v346
    %v349 = vsub.f32 1.0, %v315
    %v350 = vsub.f32 1.0, %v317
    %353 = vrot.lane.b32.xlu0 %v347, 96
    %v354 = vpop.permute.xlu0 %353
    %355 = vrot.lane.b32.xlu0 %v348, 96
    %v356 = vpop.permute.xlu0 %355
    %v359 = vmul.f32 %v349, %v354
    %v360 = vmul.f32 %v350, %v356
    %v361 = vmul.f32 %v315, 0.0
    %v362 = vmul.f32 %v317, 0.0
    %v363 = vadd.f32 %v359, %v361
    %v364 = vadd.f32 %v360, %v362
    %v367 = vrot.slane %v364, 7
    %vm368 = vcmask 1041409
    %v369 = vsel %vm368, %v367, %v363
    %370 = vrot.lane.b32.xlu0 %v369, 96
    %v371 = vpop.permute.xlu0 %370
    %v372 = vsel %vm226, %v371, 0
    %374 = vmatprep.subr.mxu0 0.0
    %375 = vmatpush1.msra.mxu0 %v126
    %376 = vmatprep.subr.mxu0 0.0
    %377 = vmatpush1.msra.mxu0 %v127
    %378 = vmatprep.subr.mxu0 0.0
    %379 = vmatpush1.msra.mxu0 %v128
    %380 = vmatprep.subr.mxu0 0.0
    %381 = vmatpush1.msra.mxu0 %v129
    %382 = vmatprep.subr.mxu0 0.0
    %383 = vmatpush1.msra.mxu0 0.0
    %384 = vmatprep.subr.mxu0 0.0
    %385 = vmatpush1.msra.mxu0 0.0
    %386 = vmatprep.subr.mxu0 0.0
    %387 = vmatpush1.msra.mxu0 0.0
    %388 = vmatprep.subr.mxu0 0.0
    %389 = vmatpush1.msra.mxu0 0.0
    %390 = vmatprep.subr.mxu0 0.0
    %391 = vmatpush1.msra.mxu0 0.0
    %392 = vmatprep.subr.mxu0 0.0
    %393 = vmatpush1.msra.mxu0 0.0
    %394 = vmatprep.subr.mxu0 0.0
    %395 = vmatpush1.msra.mxu0 0.0
    %396 = vmatprep.subr.mxu0 0.0
    %397 = vmatpush1.msra.mxu0 0.0
    %398 = vmatprep.subr.mxu0 0.0
    %399 = vmatpush1.msra.mxu0 0.0
    %400 = vmatprep.subr.mxu0 0.0
    %401 = vmatpush1.msra.mxu0 0.0
    %402 = vmatprep.subr.mxu0 0.0
    %403 = vmatpush1.msra.mxu0 0.0
    %404 = vmatprep.subr.mxu0 0.0
    %405 = vmatpush1.msra.mxu0 0.0
    %406 = vmatprep.subr.mxu0 0.0
    %407 = vmatpush1.msra.mxu0 0.0
    %408 = vmatprep.subr.mxu0 0.0
    %409 = vmatpush1.msra.mxu0 0.0
    %410 = vmatprep.subr.mxu0 0.0
    %411 = vmatpush1.msra.mxu0 0.0
    %412 = vmatprep.subr.mxu0 0.0
    %413 = vmatpush1.msra.mxu0 0.0
    %414 = vmatprep.subr.mxu0 0.0
    %415 = vmatpush1.msra.mxu0 0.0
    %416 = vmatprep.subr.mxu0 0.0
    %417 = vmatpush1.msra.mxu0 0.0
    %418 = vmatprep.subr.mxu0 0.0
    %419 = vmatpush1.msra.mxu0 0.0
    %420 = vmatprep.subr.mxu0 0.0
    %421 = vmatpush1.msra.mxu0 0.0
    %422 = vmatprep.subr.mxu0 0.0
    %423 = vmatpush1.msra.mxu0 0.0
    %424 = vmatprep.subr.mxu0 0.0
    %425 = vmatpush1.msra.mxu0 0.0
    %426 = vmatprep.subr.mxu0 0.0
    %427 = vmatpush1.msra.mxu0 0.0
    %428 = vmatprep.subr.mxu0 0.0
    %429 = vmatpush1.msra.mxu0 0.0
    %430 = vmatprep.subr.mxu0 0.0
    %431 = vmatpush1.msra.mxu0 0.0
    %432 = vmatprep.subr.mxu0 0.0
    %433 = vmatpush1.msra.mxu0 0.0
    %434 = vmatprep.subr.mxu0 0.0
    %435 = vmatpush1.msra.mxu0 0.0
    %436 = vmatprep.subr.mxu0 0.0
    %437 = vmatpush1.msra.mxu0 0.0
    %438 = vmatprep.mubr.f32.mxu0 0.0
    %439 = vmatmul.mubr.f32.gmra.mrb[0].mxu0 %v372
    %v440 = vpop.f32.mrb[0].mxu0
    %v441 = vadd.f32 0.0, %v440
    %v442 = vpop.f32.mrb[0].mxu0
    %443 = vdwg.mxu0
    %v445 = vrot.slane %v441, 7
    %v448 = vadd.f32 %v218, %v445
    %v449 = vadd.f32 %v223, %v441
    %v450 = vxor.u32 %v448, 2147483648
    %v451 = vxor.u32 %v449, 2147483648
    %v452 = vmul.f32 %v450, 1.442695
    %v453 = vpow.pop %v452
    %v454 = vmul.f32 %v451, 1.442695
    %v455 = vpow.pop %v454
    %v456 = vadd.f32 %v453, 1.0
    %v457 = vadd.f32 %v455, 1.0
    %v458 = vrcp.pop %v456
    %v459 = vmul.f32 1.0, %v458
    %v460 = vrcp.pop %v457
    %v461 = vmul.f32 1.0, %v460
    %v462 = vadd.f32 %v441, %v324
    %v464 = vrot.slane %v462, 7
    %465 = vrot.lane.b32.xlu0 %v464, 64
    %v466 = vpop.permute.xlu0 %465
    %467 = vrot.lane.b32.xlu0 %v462, 64
    %v468 = vpop.permute.xlu0 %467
    %v471 = vmul.f32 %v459, %v466
    %v472 = vmul.f32 %v461, %v468
    %475 = vrot.lane.b32.xlu0 %v471, 64
    %v476 = vpop.permute.xlu0 %475
    %477 = vrot.lane.b32.xlu0 %v472, 64
    %v478 = vpop.permute.xlu0 %477
    %v481 = vadd.f32 %v218, %v476
    %v482 = vadd.f32 %v223, %v478
    %v483 = vtanh.pop %v481
    %v484 = vtanh.pop %v482
    %v485 = vsub.f32 1.0, %v459
    %v486 = vsub.f32 1.0, %v461
    %489 = vrot.lane.b32.xlu0 %v483, 96
    %v490 = vpop.permute.xlu0 %489
    %491 = vrot.lane.b32.xlu0 %v484, 96
    %v492 = vpop.permute.xlu0 %491
    %v495 = vmul.f32 %v485, %v490
    %v496 = vmul.f32 %v486, %v492
    %v497 = vrot.slane %v363, 7
    %v500 = vmul.f32 %v459, %v497
    %v501 = vmul.f32 %v461, %v367
    %v502 = vadd.f32 %v495, %v500
    %v503 = vadd.f32 %v496, %v501
    %v506 = vrot.slane %v502, 1
    %v507 = vsel %vm368, %v503, %v506
    %508 = vrot.lane.b32.xlu0 %v507, 96
    %v509 = vpop.permute.xlu0 %508
    %v510 = vsel %vm226, %v509, 0
    %512 = vmatprep.subr.mxu0 0.0
    %513 = vmatpush1.msra.mxu0 %v126
    %514 = vmatprep.subr.mxu0 0.0
    %515 = vmatpush1.msra.mxu0 %v127
    %516 = vmatprep.subr.mxu0 0.0
    %517 = vmatpush1.msra.mxu0 %v128
    %518 = vmatprep.subr.mxu0 0.0
    %519 = vmatpush1.msra.mxu0 %v129
    %520 = vmatprep.subr.mxu0 0.0
    %521 = vmatpush1.msra.mxu0 0.0
    %522 = vmatprep.subr.mxu0 0.0
    %523 = vmatpush1.msra.mxu0 0.0
    %524 = vmatprep.subr.mxu0 0.0
    %525 = vmatpush1.msra.mxu0 0.0
    %526 = vmatprep.subr.mxu0 0.0
    %527 = vmatpush1.msra.mxu0 0.0
    %528 = vmatprep.subr.mxu0 0.0
    %529 = vmatpush1.msra.mxu0 0.0
    %530 = vmatprep.subr.mxu0 0.0
    %531 = vmatpush1.msra.mxu0 0.0
    %532 = vmatprep.subr.mxu0 0.0
    %533 = vmatpush1.msra.mxu0 0.0
    %534 = vmatprep.subr.mxu0 0.0
    %535 = vmatpush1.msra.mxu0 0.0
    %536 = vmatprep.subr.mxu0 0.0
    %537 = vmatpush1.msra.mxu0 0.0
    %538 = vmatprep.subr.mxu0 0.0
    %539 = vmatpush1.msra.mxu0 0.0
    %540 = vmatprep.subr.mxu0 0.0
    %541 = vmatpush1.msra.mxu0 0.0
    %542 = vmatprep.subr.mxu0 0.0
    %543 = vmatpush1.msra.mxu0 0.0
    %544 = vmatprep.subr.mxu0 0.0
    %545 = vmatpush1.msra.mxu0 0.0
    %546 = vmatprep.subr.mxu0 0.0
    %547 = vmatpush1.msra.mxu0 0.0
    %548 = vmatprep.subr.mxu0 0.0
    %549 = vmatpush1.msra.mxu0 0.0
    %550 = vmatprep.subr.mxu0 0.0
    %551 = vmatpush1.msra.mxu0 0.0
    %552 = vmatprep.subr.mxu0 0.0
    %553 = vmatpush1.msra.mxu0 0.0
    %554 = vmatprep.subr.mxu0 0.0
    %555 = vmatpush1.msra.mxu0 0.0
    %556 = vmatprep.subr.mxu0 0.0
    %557 = vmatpush1.msra.mxu0 0.0
    %558 = vmatprep.subr.mxu0 0.0
    %559 = vmatpush1.msra.mxu0 0.0
    %560 = vmatprep.subr.mxu0 0.0
    %561 = vmatpush1.msra.mxu0 0.0
    %562 = vmatprep.subr.mxu0 0.0
    %563 = vmatpush1.msra.mxu0 0.0
    %564 = vmatprep.subr.mxu0 0.0
    %565 = vmatpush1.msra.mxu0 0.0
    %566 = vmatprep.subr.mxu0 0.0
    %567 = vmatpush1.msra.mxu0 0.0
    %568 = vmatprep.subr.mxu0 0.0
    %569 = vmatpush1.msra.mxu0 0.0
    %570 = vmatprep.subr.mxu0 0.0
    %571 = vmatpush1.msra.mxu0 0.0
    %572 = vmatprep.subr.mxu0 0.0
    %573 = vmatpush1.msra.mxu0 0.0
    %574 = vmatprep.subr.mxu0 0.0
    %575 = vmatpush1.msra.mxu0 0.0
    %576 = vmatprep.mubr.f32.mxu0 0.0
    %577 = vmatmul.mubr.f32.gmra.mrb[0].mxu0 %v510
    %v578 = vpop.f32.mrb[0].mxu0
    %v579 = vadd.f32 0.0, %v578
    %v580 = vpop.f32.mrb[0].mxu0
    %581 = vdwg.mxu0
    %v583 = vrot.slane %v579, 6
    %v584 = vrot.slane %v579, 7
    %v587 = vadd.f32 %v218, %v583
    %v588 = vadd.f32 %v223, %v584
    %v589 = vxor.u32 %v587, 2147483648
    %v590 = vxor.u32 %v588, 2147483648
    %v591 = vmul.f32 %v589, 1.442695
    %v592 = vpow.pop %v591
    %v593 = vmul.f32 %v590, 1.442695
    %v594 = vpow.pop %v593
    %v595 = vadd.f32 %v592, 1.0
    %v596 = vadd.f32 %v594, 1.0
    %v597 = vrcp.pop %v595
    %v598 = vmul.f32 1.0, %v597
    %v599 = vrcp.pop %v596
    %v600 = vmul.f32 1.0, %v599
    %v601 = vadd.f32 %v579, %v324
    %v603 = vrot.slane %v601, 6
    %v604 = vrot.slane %v601, 7
    %605 = vrot.lane.b32.xlu0 %v603, 64
    %v606 = vpop.permute.xlu0 %605
    %607 = vrot.lane.b32.xlu0 %v604, 64
    %v608 = vpop.permute.xlu0 %607
    %v611 = vmul.f32 %v598, %v606
    %v612 = vmul.f32 %v600, %v608
    %615 = vrot.lane.b32.xlu0 %v611, 64
    %v616 = vpop.permute.xlu0 %615
    %617 = vrot.lane.b32.xlu0 %v612, 64
    %v618 = vpop.permute.xlu0 %617
    %v621 = vadd.f32 %v218, %v616
    %v622 = vadd.f32 %v223, %v618
    %v623 = vtanh.pop %v621
    %v624 = vtanh.pop %v622
    %v625 = vsub.f32 1.0, %v598
    %v626 = vsub.f32 1.0, %v600
    %629 = vrot.lane.b32.xlu0 %v623, 96
    %v630 = vpop.permute.xlu0 %629
    %631 = vrot.lane.b32.xlu0 %v624, 96
    %v632 = vpop.permute.xlu0 %631
    %v635 = vmul.f32 %v625, %v630
    %v636 = vmul.f32 %v626, %v632
    %v637 = vrot.slane %v502, 7
    %v638 = vrot.slane %v503, 7
    %v641 = vmul.f32 %v598, %v637
    %v642 = vmul.f32 %v600, %v638
    %v643 = vadd.f32 %v635, %v641
    %v644 = vadd.f32 %v636, %v642
    %v647 = vrot.slane %v643, 2
    %v648 = vrot.slane %v644, 1
    %v649 = vsel %vm368, %v648, %v647
    %650 = vrot.lane.b32.xlu0 %v649, 96
    %v651 = vpop.permute.xlu0 %650
    %v652 = vsel %vm226, %v651, 0
    %654 = vmatprep.subr.mxu0 0.0
    %655 = vmatpush1.msra.mxu0 %v126
    %656 = vmatprep.subr.mxu0 0.0
    %657 = vmatpush1.msra.mxu0 %v127
    %658 = vmatprep.subr.mxu0 0.0
    %659 = vmatpush1.msra.mxu0 %v128
    %660 = vmatprep.subr.mxu0 0.0
    %661 = vmatpush1.msra.mxu0 %v129
    %662 = vmatprep.subr.mxu0 0.0
    %663 = vmatpush1.msra.mxu0 0.0
    %664 = vmatprep.subr.mxu0 0.0
    %665 = vmatpush1.msra.mxu0 0.0
    %666 = vmatprep.subr.mxu0 0.0
    %667 = vmatpush1.msra.mxu0 0.0
    %668 = vmatprep.subr.mxu0 0.0
    %669 = vmatpush1.msra.mxu0 0.0
    %670 = vmatprep.subr.mxu0 0.0
    %671 = vmatpush1.msra.mxu0 0.0
    %672 = vmatprep.subr.mxu0 0.0
    %673 = vmatpush1.msra.mxu0 0.0
    %674 = vmatprep.subr.mxu0 0.0
    %675 = vmatpush1.msra.mxu0 0.0
    %676 = vmatprep.subr.mxu0 0.0
    %677 = vmatpush1.msra.mxu0 0.0
    %678 = vmatprep.subr.mxu0 0.0
    %679 = vmatpush1.msra.mxu0 0.0
    %680 = vmatprep.subr.mxu0 0.0
    %681 = vmatpush1.msra.mxu0 0.0
    %682 = vmatprep.subr.mxu0 0.0
    %683 = vmatpush1.msra.mxu0 0.0
    %684 = vmatprep.subr.mxu0 0.0
    %685 = vmatpush1.msra.mxu0 0.0
    %686 = vmatprep.subr.mxu0 0.0
    %687 = vmatpush1.msra.mxu0 0.0
    %688 = vmatprep.subr.mxu0 0.0
    %689 = vmatpush1.msra.mxu0 0.0
    %690 = vmatprep.subr.mxu0 0.0
    %691 = vmatpush1.msra.mxu0 0.0
    %692 = vmatprep.subr.mxu0 0.0
    %693 = vmatpush1.msra.mxu0 0.0
    %694 = vmatprep.subr.mxu0 0.0
    %695 = vmatpush1.msra.mxu0 0.0
    %696 = vmatprep.subr.mxu0 0.0
    %697 = vmatpush1.msra.mxu0 0.0
    %698 = vmatprep.subr.mxu0 0.0
    %699 = vmatpush1.msra.mxu0 0.0
    %700 = vmatprep.subr.mxu0 0.0
    %701 = vmatpush1.msra.mxu0 0.0
    %702 = vmatprep.subr.mxu0 0.0
    %703 = vmatpush1.msra.mxu0 0.0
    %704 = vmatprep.subr.mxu0 0.0
    %705 = vmatpush1.msra.mxu0 0.0
    %706 = vmatprep.subr.mxu0 0.0
    %707 = vmatpush1.msra.mxu0 0.0
    %708 = vmatprep.subr.mxu0 0.0
    %709 = vmatpush1.msra.mxu0 0.0
    %710 = vmatprep.subr.mxu0 0.0
    %711 = vmatpush1.msra.mxu0 0.0
    %712 = vmatprep.subr.mxu0 0.0
    %713 = vmatpush1.msra.mxu0 0.0
    %714 = vmatprep.subr.mxu0 0.0
    %715 = vmatpush1.msra.mxu0 0.0
    %716 = vmatprep.subr.mxu0 0.0
    %717 = vmatpush1.msra.mxu0 0.0
    %718 = vmatprep.mubr.f32.mxu0 0.0
    %719 = vmatmul.mubr.f32.gmra.mrb[0].mxu0 %v652
    %v720 = vpop.f32.mrb[0].mxu0
    %v721 = vadd.f32 0.0, %v720
    %v722 = vpop.f32.mrb[0].mxu0
    %723 = vdwg.mxu0
    %v725 = vrot.slane %v721, 5
    %v726 = vrot.slane %v721, 6
    %v729 = vadd.f32 %v218, %v725
    %v730 = vadd.f32 %v223, %v726
    %v731 = vxor.u32 %v729, 2147483648
    %v732 = vxor.u32 %v730, 2147483648
    %v733 = vmul.f32 %v731, 1.442695
    %v734 = vpow.pop %v733
    %v735 = vmul.f32 %v732, 1.442695
    %v736 = vpow.pop %v735
    %v737 = vadd.f32 %v734, 1.0
    %v738 = vadd.f32 %v736, 1.0
    %v739 = vrcp.pop %v737
    %v740 = vmul.f32 1.0, %v739
    %v741 = vrcp.pop %v738
    %v742 = vmul.f32 1.0, %v741
    %v743 = vadd.f32 %v721, %v324
    %v745 = vrot.slane %v743, 5
    %v746 = vrot.slane %v743, 6
    %747 = vrot.lane.b32.xlu0 %v745, 64
    %v748 = vpop.permute.xlu0 %747
    %749 = vrot.lane.b32.xlu0 %v746, 64
    %v750 = vpop.permute.xlu0 %749
    %v753 = vmul.f32 %v740, %v748
    %v754 = vmul.f32 %v742, %v750
    %757 = vrot.lane.b32.xlu0 %v753, 64
    %v758 = vpop.permute.xlu0 %757
    %759 = vrot.lane.b32.xlu0 %v754, 64
    %v760 = vpop.permute.xlu0 %759
    %v763 = vadd.f32 %v218, %v758
    %v764 = vadd.f32 %v223, %v760
    %v765 = vtanh.pop %v763
    %v766 = vtanh.pop %v764
    %v767 = vsub.f32 1.0, %v740
    %v768 = vsub.f32 1.0, %v742
    %771 = vrot.lane.b32.xlu0 %v765, 96
    %v772 = vpop.permute.xlu0 %771
    %773 = vrot.lane.b32.xlu0 %v766, 96
    %v774 = vpop.permute.xlu0 %773
    %v777 = vmul.f32 %v767, %v772
    %v778 = vmul.f32 %v768, %v774
    %v779 = vrot.slane %v643, 7
    %v780 = vrot.slane %v644, 7
    %v783 = vmul.f32 %v740, %v779
    %v784 = vmul.f32 %v742, %v780
    %v785 = vadd.f32 %v777, %v783
    %v786 = vadd.f32 %v778, %v784
    %v789 = vrot.slane %v785, 3
    %v790 = vrot.slane %v786, 2
    %v791 = vsel %vm368, %v790, %v789
    %792 = vrot.lane.b32.xlu0 %v791, 96
    %v793 = vpop.permute.xlu0 %792
    %v794 = vsel %vm226, %v793, 0
    %796 = vmatprep.subr.mxu0 0.0
    %797 = vmatpush1.msra.mxu0 %v126
    %798 = vmatprep.subr.mxu0 0.0
    %799 = vmatpush1.msra.mxu0 %v127
    %800 = vmatprep.subr.mxu0 0.0
    %801 = vmatpush1.msra.mxu0 %v128
    %802 = vmatprep.subr.mxu0 0.0
    %803 = vmatpush1.msra.mxu0 %v129
    %804 = vmatprep.subr.mxu0 0.0
    %805 = vmatpush1.msra.mxu0 0.0
    %806 = vmatprep.subr.mxu0 0.0
    %807 = vmatpush1.msra.mxu0 0.0
    %808 = vmatprep.subr.mxu0 0.0
    %809 = vmatpush1.msra.mxu0 0.0
    %810 = vmatprep.subr.mxu0 0.0
    %811 = vmatpush1.msra.mxu0 0.0
    %812 = vmatprep.subr.mxu0 0.0
    %813 = vmatpush1.msra.mxu0 0.0
    %814 = vmatprep.subr.mxu0 0.0
    %815 = vmatpush1.msra.mxu0 0.0
    %816 = vmatprep.subr.mxu0 0.0
    %817 = vmatpush1.msra.mxu0 0.0
    %818 = vmatprep.subr.mxu0 0.0
    %819 = vmatpush1.msra.mxu0 0.0
    %820 = vmatprep.subr.mxu0 0.0
    %821 = vmatpush1.msra.mxu0 0.0
    %822 = vmatprep.subr.mxu0 0.0
    %823 = vmatpush1.msra.mxu0 0.0
    %824 = vmatprep.subr.mxu0 0.0
    %825 = vmatpush1.msra.mxu0 0.0
    %826 = vmatprep.subr.mxu0 0.0
    %827 = vmatpush1.msra.mxu0 0.0
    %828 = vmatprep.subr.mxu0 0.0
    %829 = vmatpush1.msra.mxu0 0.0
    %830 = vmatprep.subr.mxu0 0.0
    %831 = vmatpush1.msra.mxu0 0.0
    %832 = vmatprep.subr.mxu0 0.0
    %833 = vmatpush1.msra.mxu0 0.0
    %834 = vmatprep.subr.mxu0 0.0
    %835 = vmatpush1.msra.mxu0 0.0
    %836 = vmatprep.subr.mxu0 0.0
    %837 = vmatpush1.msra.mxu0 0.0
    %838 = vmatprep.subr.mxu0 0.0
    %839 = vmatpush1.msra.mxu0 0.0
    %840 = vmatprep.subr.mxu0 0.0
    %841 = vmatpush1.msra.mxu0 0.0
    %842 = vmatprep.subr.mxu0 0.0
    %843 = vmatpush1.msra.mxu0 0.0
    %844 = vmatprep.subr.mxu0 0.0
    %845 = vmatpush1.msra.mxu0 0.0
    %846 = vmatprep.subr.mxu0 0.0
    %847 = vmatpush1.msra.mxu0 0.0
    %848 = vmatprep.subr.mxu0 0.0
    %849 = vmatpush1.msra.mxu0 0.0
    %850 = vmatprep.subr.mxu0 0.0
    %851 = vmatpush1.msra.mxu0 0.0
    %852 = vmatprep.subr.mxu0 0.0
    %853 = vmatpush1.msra.mxu0 0.0
    %854 = vmatprep.subr.mxu0 0.0
    %855 = vmatpush1.msra.mxu0 0.0
    %856 = vmatprep.subr.mxu0 0.0
    %857 = vmatpush1.msra.mxu0 0.0
    %858 = vmatprep.subr.mxu0 0.0
    %859 = vmatpush1.msra.mxu0 0.0
    %860 = vmatprep.mubr.f32.mxu0 0.0
    %861 = vmatmul.mubr.f32.gmra.mrb[0].mxu0 %v794
    %v862 = vpop.f32.mrb[0].mxu0
    %v863 = vadd.f32 0.0, %v862
    %v864 = vpop.f32.mrb[0].mxu0
    %865 = vdwg.mxu0
    %v867 = vrot.slane %v863, 4
    %v868 = vrot.slane %v863, 5
    %v871 = vadd.f32 %v218, %v867
    %v872 = vadd.f32 %v223, %v868
    %v873 = vxor.u32 %v871, 2147483648
    %v874 = vxor.u32 %v872, 2147483648
    %v875 = vmul.f32 %v873, 1.442695
    %v876 = vpow.pop %v875
    %v877 = vmul.f32 %v874, 1.442695
    %v878 = vpow.pop %v877
    %v879 = vadd.f32 %v876, 1.0
    %v880 = vadd.f32 %v878, 1.0
    %v881 = vrcp.pop %v879
    %v882 = vmul.f32 1.0, %v881
    %v883 = vrcp.pop %v880
    %v884 = vmul.f32 1.0, %v883
    %v885 = vadd.f32 %v863, %v324
    %v887 = vrot.slane %v885, 4
    %v888 = vrot.slane %v885, 5
    %889 = vrot.lane.b32.xlu0 %v887, 64
    %v890 = vpop.permute.xlu0 %889
    %891 = vrot.lane.b32.xlu0 %v888, 64
    %v892 = vpop.permute.xlu0 %891
    %v895 = vmul.f32 %v882, %v890
    %v896 = vmul.f32 %v884, %v892
    %899 = vrot.lane.b32.xlu0 %v895, 64
    %v900 = vpop.permute.xlu0 %899
    %901 = vrot.lane.b32.xlu0 %v896, 64
    %v902 = vpop.permute.xlu0 %901
    %v905 = vadd.f32 %v218, %v900
    %v906 = vadd.f32 %v223, %v902
    %v907 = vtanh.pop %v905
    %v908 = vtanh.pop %v906
    %v909 = vsub.f32 1.0, %v882
    %v910 = vsub.f32 1.0, %v884
    %913 = vrot.lane.b32.xlu0 %v907, 96
    %v914 = vpop.permute.xlu0 %913
    %915 = vrot.lane.b32.xlu0 %v908, 96
    %v916 = vpop.permute.xlu0 %915
    %v919 = vmul.f32 %v909, %v914
    %v920 = vmul.f32 %v910, %v916
    %v921 = vrot.slane %v785, 7
    %v922 = vrot.slane %v786, 7
    %v925 = vmul.f32 %v882, %v921
    %v926 = vmul.f32 %v884, %v922
    %v927 = vadd.f32 %v919, %v925
    %v928 = vadd.f32 %v920, %v926
    %v931 = vrot.slane %v927, 4
    %v932 = vrot.slane %v928, 3
    %v933 = vsel %vm368, %v932, %v931
    %934 = vrot.lane.b32.xlu0 %v933, 96
    %v935 = vpop.permute.xlu0 %934
    %v936 = vsel %vm226, %v935, 0
    %938 = vmatprep.subr.mxu0 0.0
    %939 = vmatpush1.msra.mxu0 %v126
    %940 = vmatprep.subr.mxu0 0.0
    %941 = vmatpush1.msra.mxu0 %v127
    %942 = vmatprep.subr.mxu0 0.0
    %943 = vmatpush1.msra.mxu0 %v128
    %944 = vmatprep.subr.mxu0 0.0
    %945 = vmatpush1.msra.mxu0 %v129
    %946 = vmatprep.subr.mxu0 0.0
    %947 = vmatpush1.msra.mxu0 0.0
    %948 = vmatprep.subr.mxu0 0.0
    %949 = vmatpush1.msra.mxu0 0.0
    %950 = vmatprep.subr.mxu0 0.0
    %951 = vmatpush1.msra.mxu0 0.0
    %952 = vmatprep.subr.mxu0 0.0
    %953 = vmatpush1.msra.mxu0 0.0
    %954 = vmatprep.subr.mxu0 0.0
    %955 = vmatpush1.msra.mxu0 0.0
    %956 = vmatprep.subr.mxu0 0.0
    %957 = vmatpush1.msra.mxu0 0.0
    %958 = vmatprep.subr.mxu0 0.0
    %959 = vmatpush1.msra.mxu0 0.0
    %960 = vmatprep.subr.mxu0 0.0
    %961 = vmatpush1.msra.mxu0 0.0
    %962 = vmatprep.subr.mxu0 0.0
    %963 = vmatpush1.msra.mxu0 0.0
    %964 = vmatprep.subr.mxu0 0.0
    %965 = vmatpush1.msra.mxu0 0.0
    %966 = vmatprep.subr.mxu0 0.0
    %967 = vmatpush1.msra.mxu0 0.0
    %968 = vmatprep.subr.mxu0 0.0
    %969 = vmatpush1.msra.mxu0 0.0
    %970 = vmatprep.subr.mxu0 0.0
    %971 = vmatpush1.msra.mxu0 0.0
    %972 = vmatprep.subr.mxu0 0.0
    %973 = vmatpush1.msra.mxu0 0.0
    %974 = vmatprep.subr.mxu0 0.0
    %975 = vmatpush1.msra.mxu0 0.0
    %976 = vmatprep.subr.mxu0 0.0
    %977 = vmatpush1.msra.mxu0 0.0
    %978 = vmatprep.subr.mxu0 0.0
    %979 = vmatpush1.msra.mxu0 0.0
    %980 = vmatprep.subr.mxu0 0.0
    %981 = vmatpush1.msra.mxu0 0.0
    %982 = vmatprep.subr.mxu0 0.0
    %983 = vmatpush1.msra.mxu0 0.0
    %984 = vmatprep.subr.mxu0 0.0
    %985 = vmatpush1.msra.mxu0 0.0
    %986 = vmatprep.subr.mxu0 0.0
    %987 = vmatpush1.msra.mxu0 0.0
    %988 = vmatprep.subr.mxu0 0.0
    %989 = vmatpush1.msra.mxu0 0.0
    %990 = vmatprep.subr.mxu0 0.0
    %991 = vmatpush1.msra.mxu0 0.0
    %992 = vmatprep.subr.mxu0 0.0
    %993 = vmatpush1.msra.mxu0 0.0
    %994 = vmatprep.subr.mxu0 0.0
    %995 = vmatpush1.msra.mxu0 0.0
    %996 = vmatprep.subr.mxu0 0.0
    %997 = vmatpush1.msra.mxu0 0.0
    %998 = vmatprep.subr.mxu0 0.0
    %999 = vmatpush1.msra.mxu0 0.0
    %1000 = vmatprep.subr.mxu0 0.0
    %1001 = vmatpush1.msra.mxu0 0.0
    %1002 = vmatprep.mubr.f32.mxu0 0.0
    %1003 = vmatmul.mubr.f32.gmra.mrb[0].mxu0 %v936
    %v1004 = vpop.f32.mrb[0].mxu0
    %v1005 = vadd.f32 0.0, %v1004
    %v1006 = vpop.f32.mrb[0].mxu0
    %1007 = vdwg.mxu0
    %v1009 = vrot.slane %v1005, 3
    %v1010 = vrot.slane %v1005, 4
    %v1013 = vadd.f32 %v218, %v1009
    %v1014 = vadd.f32 %v223, %v1010
    %v1015 = vxor.u32 %v1013, 2147483648
    %v1016 = vxor.u32 %v1014, 2147483648
    %v1017 = vmul.f32 %v1015, 1.442695
    %v1018 = vpow.pop %v1017
    %v1019 = vmul.f32 %v1016, 1.442695
    %v1020 = vpow.pop %v1019
    %v1021 = vadd.f32 %v1018, 1.0
    %v1022 = vadd.f32 %v1020, 1.0
    %v1023 = vrcp.pop %v1021
    %v1024 = vmul.f32 1.0, %v1023
    %v1025 = vrcp.pop %v1022
    %v1026 = vmul.f32 1.0, %v1025
    %v1027 = vadd.f32 %v1005, %v324
    %v1029 = vrot.slane %v1027, 3
    %v1030 = vrot.slane %v1027, 4
    %1031 = vrot.lane.b32.xlu0 %v1029, 64
    %v1032 = vpop.permute.xlu0 %1031
    %1033 = vrot.lane.b32.xlu0 %v1030, 64
    %v1034 = vpop.permute.xlu0 %1033
    %v1037 = vmul.f32 %v1024, %v1032
    %v1038 = vmul.f32 %v1026, %v1034
    %1041 = vrot.lane.b32.xlu0 %v1037, 64
    %v1042 = vpop.permute.xlu0 %1041
    %1043 = vrot.lane.b32.xlu0 %v1038, 64
    %v1044 = vpop.permute.xlu0 %1043
    %v1047 = vadd.f32 %v218, %v1042
    %v1048 = vadd.f32 %v223, %v1044
    %v1049 = vtanh.pop %v1047
    %v1050 = vtanh.pop %v1048
    %v1051 = vsub.f32 1.0, %v1024
    %v1052 = vsub.f32 1.0, %v1026
    %1055 = vrot.lane.b32.xlu0 %v1049, 96
    %v1056 = vpop.permute.xlu0 %1055
    %1057 = vrot.lane.b32.xlu0 %v1050, 96
    %v1058 = vpop.permute.xlu0 %1057
    %v1061 = vmul.f32 %v1051, %v1056
    %v1062 = vmul.f32 %v1052, %v1058
    %v1063 = vrot.slane %v927, 7
    %v1064 = vrot.slane %v928, 7
    %v1067 = vmul.f32 %v1024, %v1063
    %v1068 = vmul.f32 %v1026, %v1064
    %v1069 = vadd.f32 %v1061, %v1067
    %v1070 = vadd.f32 %v1062, %v1068
    %v1073 = vrot.slane %v1069, 5
    %v1074 = vrot.slane %v1070, 4
    %v1075 = vsel %vm368, %v1074, %v1073
    %1076 = vrot.lane.b32.xlu0 %v1075, 96
    %v1077 = vpop.permute.xlu0 %1076
    %v1078 = vsel %vm226, %v1077, 0
    %1080 = vmatprep.subr.mxu0 0.0
    %1081 = vmatpush1.msra.mxu0 %v126
    %1082 = vmatprep.subr.mxu0 0.0
    %1083 = vmatpush1.msra.mxu0 %v127
    %1084 = vmatprep.subr.mxu0 0.0
    %1085 = vmatpush1.msra.mxu0 %v128
    %1086 = vmatprep.subr.mxu0 0.0
    %1087 = vmatpush1.msra.mxu0 %v129
    %1088 = vmatprep.subr.mxu0 0.0
    %1089 = vmatpush1.msra.mxu0 0.0
    %1090 = vmatprep.subr.mxu0 0.0
    %1091 = vmatpush1.msra.mxu0 0.0
    %1092 = vmatprep.subr.mxu0 0.0
    %1093 = vmatpush1.msra.mxu0 0.0
    %1094 = vmatprep.subr.mxu0 0.0
    %1095 = vmatpush1.msra.mxu0 0.0
    %1096 = vmatprep.subr.mxu0 0.0
    %1097 = vmatpush1.msra.mxu0 0.0
    %1098 = vmatprep.subr.mxu0 0.0
    %1099 = vmatpush1.msra.mxu0 0.0
    %1100 = vmatprep.subr.mxu0 0.0
    %1101 = vmatpush1.msra.mxu0 0.0
    %1102 = vmatprep.subr.mxu0 0.0
    %1103 = vmatpush1.msra.mxu0 0.0
    %1104 = vmatprep.subr.mxu0 0.0
    %1105 = vmatpush1.msra.mxu0 0.0
    %1106 = vmatprep.subr.mxu0 0.0
    %1107 = vmatpush1.msra.mxu0 0.0
    %1108 = vmatprep.subr.mxu0 0.0
    %1109 = vmatpush1.msra.mxu0 0.0
    %1110 = vmatprep.subr.mxu0 0.0
    %1111 = vmatpush1.msra.mxu0 0.0
    %1112 = vmatprep.subr.mxu0 0.0
    %1113 = vmatpush1.msra.mxu0 0.0
    %1114 = vmatprep.subr.mxu0 0.0
    %1115 = vmatpush1.msra.mxu0 0.0
    %1116 = vmatprep.subr.mxu0 0.0
    %1117 = vmatpush1.msra.mxu0 0.0
    %1118 = vmatprep.subr.mxu0 0.0
    %1119 = vmatpush1.msra.mxu0 0.0
    %1120 = vmatprep.subr.mxu0 0.0
    %1121 = vmatpush1.msra.mxu0 0.0
    %1122 = vmatprep.subr.mxu0 0.0
    %1123 = vmatpush1.msra.mxu0 0.0
    %1124 = vmatprep.subr.mxu0 0.0
    %1125 = vmatpush1.msra.mxu0 0.0
    %1126 = vmatprep.subr.mxu0 0.0
    %1127 = vmatpush1.msra.mxu0 0.0
    %1128 = vmatprep.subr.mxu0 0.0
    %1129 = vmatpush1.msra.mxu0 0.0
    %1130 = vmatprep.subr.mxu0 0.0
    %1131 = vmatpush1.msra.mxu0 0.0
    %1132 = vmatprep.subr.mxu0 0.0
    %1133 = vmatpush1.msra.mxu0 0.0
    %1134 = vmatprep.subr.mxu0 0.0
    %1135 = vmatpush1.msra.mxu0 0.0
    %1136 = vmatprep.subr.mxu0 0.0
    %1137 = vmatpush1.msra.mxu0 0.0
    %1138 = vmatprep.subr.mxu0 0.0
    %1139 = vmatpush1.msra.mxu0 0.0
    %1140 = vmatprep.subr.mxu0 0.0
    %1141 = vmatpush1.msra.mxu0 0.0
    %1142 = vmatprep.subr.mxu0 0.0
    %1143 = vmatpush1.msra.mxu0 0.0
    %1144 = vmatprep.mubr.f32.mxu0 0.0
    %1145 = vmatmul.mubr.f32.gmra.mrb[0].mxu0 %v1078
    %v1146 = vpop.f32.mrb[0].mxu0
    %v1147 = vadd.f32 0.0, %v1146
    %v1148 = vpop.f32.mrb[0].mxu0
    %1149 = vdwg.mxu0
    %v1151 = vrot.slane %v1147, 2
    %v1152 = vrot.slane %v1147, 3
    %v1155 = vadd.f32 %v218, %v1151
    %v1156 = vadd.f32 %v223, %v1152
    %v1157 = vxor.u32 %v1155, 2147483648
    %v1158 = vxor.u32 %v1156, 2147483648
    %v1159 = vmul.f32 %v1157, 1.442695
    %v1160 = vpow.pop %v1159
    %v1161 = vmul.f32 %v1158, 1.442695
    %v1162 = vpow.pop %v1161
    %v1163 = vadd.f32 %v1160, 1.0
    %v1164 = vadd.f32 %v1162, 1.0
    %v1165 = vrcp.pop %v1163
    %v1166 = vmul.f32 1.0, %v1165
    %v1167 = vrcp.pop %v1164
    %v1168 = vmul.f32 1.0, %v1167
    %v1169 = vadd.f32 %v1147, %v324
    %v1171 = vrot.slane %v1169, 2
    %v1172 = vrot.slane %v1169, 3
    %1173 = vrot.lane.b32.xlu0 %v1171, 64
    %v1174 = vpop.permute.xlu0 %1173
    %1175 = vrot.lane.b32.xlu0 %v1172, 64
    %v1176 = vpop.permute.xlu0 %1175
    %v1179 = vmul.f32 %v1166, %v1174
    %v1180 = vmul.f32 %v1168, %v1176
    %1183 = vrot.lane.b32.xlu0 %v1179, 64
    %v1184 = vpop.permute.xlu0 %1183
    %1185 = vrot.lane.b32.xlu0 %v1180, 64
    %v1186 = vpop.permute.xlu0 %1185
    %v1189 = vadd.f32 %v218, %v1184
    %v1190 = vadd.f32 %v223, %v1186
    %v1191 = vtanh.pop %v1189
    %v1192 = vtanh.pop %v1190
    %v1193 = vsub.f32 1.0, %v1166
    %v1194 = vsub.f32 1.0, %v1168
    %1197 = vrot.lane.b32.xlu0 %v1191, 96
    %v1198 = vpop.permute.xlu0 %1197
    %1199 = vrot.lane.b32.xlu0 %v1192, 96
    %v1200 = vpop.permute.xlu0 %1199
    %v1203 = vmul.f32 %v1193, %v1198
    %v1204 = vmul.f32 %v1194, %v1200
    %v1205 = vrot.slane %v1069, 7
    %v1206 = vrot.slane %v1070, 7
    %v1209 = vmul.f32 %v1166, %v1205
    %v1210 = vmul.f32 %v1168, %v1206
    %v1211 = vadd.f32 %v1203, %v1209
    %v1212 = vadd.f32 %v1204, %v1210
    %v1215 = vrot.slane %v1211, 6
    %v1216 = vrot.slane %v1212, 5
    %v1217 = vsel %vm368, %v1216, %v1215
    %1218 = vrot.lane.b32.xlu0 %v1217, 96
    %v1219 = vpop.permute.xlu0 %1218
    %v1220 = vsel %vm226, %v1219, 0
    %1222 = vmatprep.subr.mxu0 0.0
    %1223 = vmatpush1.msra.mxu0 %v126
    %1224 = vmatprep.subr.mxu0 0.0
    %1225 = vmatpush1.msra.mxu0 %v127
    %1226 = vmatprep.subr.mxu0 0.0
    %1227 = vmatpush1.msra.mxu0 %v128
    %1228 = vmatprep.subr.mxu0 0.0
    %1229 = vmatpush1.msra.mxu0 %v129
    %1230 = vmatprep.subr.mxu0 0.0
    %1231 = vmatpush1.msra.mxu0 0.0
    %1232 = vmatprep.subr.mxu0 0.0
    %1233 = vmatpush1.msra.mxu0 0.0
    %1234 = vmatprep.subr.mxu0 0.0
    %1235 = vmatpush1.msra.mxu0 0.0
    %1236 = vmatprep.subr.mxu0 0.0
    %1237 = vmatpush1.msra.mxu0 0.0
    %1238 = vmatprep.subr.mxu0 0.0
    %1239 = vmatpush1.msra.mxu0 0.0
    %1240 = vmatprep.subr.mxu0 0.0
    %1241 = vmatpush1.msra.mxu0 0.0
    %1242 = vmatprep.subr.mxu0 0.0
    %1243 = vmatpush1.msra.mxu0 0.0
    %1244 = vmatprep.subr.mxu0 0.0
    %1245 = vmatpush1.msra.mxu0 0.0
    %1246 = vmatprep.subr.mxu0 0.0
    %1247 = vmatpush1.msra.mxu0 0.0
    %1248 = vmatprep.subr.mxu0 0.0
    %1249 = vmatpush1.msra.mxu0 0.0
    %1250 = vmatprep.subr.mxu0 0.0
    %1251 = vmatpush1.msra.mxu0 0.0
    %1252 = vmatprep.subr.mxu0 0.0
    %1253 = vmatpush1.msra.mxu0 0.0
    %1254 = vmatprep.subr.mxu0 0.0
    %1255 = vmatpush1.msra.mxu0 0.0
    %1256 = vmatprep.subr.mxu0 0.0
    %1257 = vmatpush1.msra.mxu0 0.0
    %1258 = vmatprep.subr.mxu0 0.0
    %1259 = vmatpush1.msra.mxu0 0.0
    %1260 = vmatprep.subr.mxu0 0.0
    %1261 = vmatpush1.msra.mxu0 0.0
    %1262 = vmatprep.subr.mxu0 0.0
    %1263 = vmatpush1.msra.mxu0 0.0
    %1264 = vmatprep.subr.mxu0 0.0
    %1265 = vmatpush1.msra.mxu0 0.0
    %1266 = vmatprep.subr.mxu0 0.0
    %1267 = vmatpush1.msra.mxu0 0.0
    %1268 = vmatprep.subr.mxu0 0.0
    %1269 = vmatpush1.msra.mxu0 0.0
    %1270 = vmatprep.subr.mxu0 0.0
    %1271 = vmatpush1.msra.mxu0 0.0
    %1272 = vmatprep.subr.mxu0 0.0
    %1273 = vmatpush1.msra.mxu0 0.0
    %1274 = vmatprep.subr.mxu0 0.0
    %1275 = vmatpush1.msra.mxu0 0.0
    %1276 = vmatprep.subr.mxu0 0.0
    %1277 = vmatpush1.msra.mxu0 0.0
    %1278 = vmatprep.subr.mxu0 0.0
    %1279 = vmatpush1.msra.mxu0 0.0
    %1280 = vmatprep.subr.mxu0 0.0
    %1281 = vmatpush1.msra.mxu0 0.0
    %1282 = vmatprep.subr.mxu0 0.0
    %1283 = vmatpush1.msra.mxu0 0.0
    %1284 = vmatprep.subr.mxu0 0.0
    %1285 = vmatpush1.msra.mxu0 0.0
    %1286 = vmatprep.mubr.f32.mxu0 0.0
    %1287 = vmatmul.mubr.f32.gmra.mrb[0].mxu0 %v1220
    %v1288 = vpop.f32.mrb[0].mxu0
    %v1289 = vadd.f32 0.0, %v1288
    %v1290 = vpop.f32.mrb[0].mxu0
    %1291 = vdwg.mxu0
    %v1293 = vrot.slane %v1289, 1
    %v1294 = vrot.slane %v1289, 2
    %v1297 = vadd.f32 %v218, %v1293
    %v1298 = vadd.f32 %v223, %v1294
    %v1299 = vxor.u32 %v1297, 2147483648
    %v1300 = vxor.u32 %v1298, 2147483648
    %v1301 = vmul.f32 %v1299, 1.442695
    %v1302 = vpow.pop %v1301
    %v1303 = vmul.f32 %v1300, 1.442695
    %v1304 = vpow.pop %v1303
    %v1305 = vadd.f32 %v1302, 1.0
    %v1306 = vadd.f32 %v1304, 1.0
    %v1307 = vrcp.pop %v1305
    %v1308 = vmul.f32 1.0, %v1307
    %v1309 = vrcp.pop %v1306
    %v1310 = vmul.f32 1.0, %v1309
    %v1311 = vadd.f32 %v1289, %v324
    %v1313 = vrot.slane %v1311, 1
    %v1314 = vrot.slane %v1311, 2
    %1315 = vrot.lane.b32.xlu0 %v1313, 64
    %v1316 = vpop.permute.xlu0 %1315
    %1317 = vrot.lane.b32.xlu0 %v1314, 64
    %v1318 = vpop.permute.xlu0 %1317
    %v1321 = vmul.f32 %v1308, %v1316
    %v1322 = vmul.f32 %v1310, %v1318
    %1325 = vrot.lane.b32.xlu0 %v1321, 64
    %v1326 = vpop.permute.xlu0 %1325
    %1327 = vrot.lane.b32.xlu0 %v1322, 64
    %v1328 = vpop.permute.xlu0 %1327
    %v1331 = vadd.f32 %v218, %v1326
    %v1332 = vadd.f32 %v223, %v1328
    %v1333 = vtanh.pop %v1331
    %v1334 = vtanh.pop %v1332
    %v1335 = vsub.f32 1.0, %v1308
    %v1336 = vsub.f32 1.0, %v1310
    %1339 = vrot.lane.b32.xlu0 %v1333, 96
    %v1340 = vpop.permute.xlu0 %1339
    %1341 = vrot.lane.b32.xlu0 %v1334, 96
    %v1342 = vpop.permute.xlu0 %1341
    %v1345 = vmul.f32 %v1335, %v1340
    %v1346 = vmul.f32 %v1336, %v1342
    %v1347 = vrot.slane %v1211, 7
    %v1348 = vrot.slane %v1212, 7
    %v1351 = vmul.f32 %v1308, %v1347
    %v1352 = vmul.f32 %v1310, %v1348
    %v1353 = vadd.f32 %v1345, %v1351
    %v1354 = vadd.f32 %v1346, %v1352
    %v1356 = vlaneseq
    %v1357 = vshrl.u32 %v1356, 7
    %v1358 = vsub.s32 0, %v1357
    %v1359 = vrot.slane %v135, %v1358
    %1361 = vmatprep.subr.mxu0 0.0
    %1362 = vmatpush1.msra.mxu0 %v122
    %1363 = vmatprep.subr.mxu0 0.0
    %1364 = vmatpush1.msra.mxu0 %v123
    %1365 = vmatprep.subr.mxu0 0.0
    %1366 = vmatpush1.msra.mxu0 %v124
    %1367 = vmatprep.subr.mxu0 0.0
    %1368 = vmatpush1.msra.mxu0 %v125
    %1369 = vmatprep.subr.mxu0 0.0
    %1370 = vmatpush1.msra.mxu0 0.0
    %1371 = vmatprep.subr.mxu0 0.0
    %1372 = vmatpush1.msra.mxu0 0.0
    %1373 = vmatprep.subr.mxu0 0.0
    %1374 = vmatpush1.msra.mxu0 0.0
    %1375 = vmatprep.subr.mxu0 0.0
    %1376 = vmatpush1.msra.mxu0 0.0
    %1377 = vmatprep.subr.mxu0 0.0
    %1378 = vmatpush1.msra.mxu0 0.0
    %1379 = vmatprep.subr.mxu0 0.0
    %1380 = vmatpush1.msra.mxu0 0.0
    %1381 = vmatprep.subr.mxu0 0.0
    %1382 = vmatpush1.msra.mxu0 0.0
    %1383 = vmatprep.subr.mxu0 0.0
    %1384 = vmatpush1.msra.mxu0 0.0
    %1385 = vmatprep.subr.mxu0 0.0
    %1386 = vmatpush1.msra.mxu0 0.0
    %1387 = vmatprep.subr.mxu0 0.0
    %1388 = vmatpush1.msra.mxu0 0.0
    %1389 = vmatprep.subr.mxu0 0.0
    %1390 = vmatpush1.msra.mxu0 0.0
    %1391 = vmatprep.subr.mxu0 0.0
    %1392 = vmatpush1.msra.mxu0 0.0
    %1393 = vmatprep.subr.mxu0 0.0
    %1394 = vmatpush1.msra.mxu0 0.0
    %1395 = vmatprep.subr.mxu0 0.0
    %1396 = vmatpush1.msra.mxu0 0.0
    %1397 = vmatprep.subr.mxu0 0.0
    %1398 = vmatpush1.msra.mxu0 0.0
    %1399 = vmatprep.subr.mxu0 0.0
    %1400 = vmatpush1.msra.mxu0 0.0
    %1401 = vmatprep.subr.mxu0 0.0
    %1402 = vmatpush1.msra.mxu0 0.0
    %1403 = vmatprep.subr.mxu0 0.0
    %1404 = vmatpush1.msra.mxu0 0.0
    %1405 = vmatprep.subr.mxu0 0.0
    %1406 = vmatpush1.msra.mxu0 0.0
    %1407 = vmatprep.subr.mxu0 0.0
    %1408 = vmatpush1.msra.mxu0 0.0
    %1409 = vmatprep.subr.mxu0 0.0
    %1410 = vmatpush1.msra.mxu0 0.0
    %1411 = vmatprep.subr.mxu0 0.0
    %1412 = vmatpush1.msra.mxu0 0.0
    %1413 = vmatprep.subr.mxu0 0.0
    %1414 = vmatpush1.msra.mxu0 0.0
    %1415 = vmatprep.subr.mxu0 0.0
    %1416 = vmatpush1.msra.mxu0 0.0
    %1417 = vmatprep.subr.mxu0 0.0
    %1418 = vmatpush1.msra.mxu0 0.0
    %1419 = vmatprep.subr.mxu0 0.0
    %1420 = vmatpush1.msra.mxu0 0.0
    %1421 = vmatprep.subr.mxu0 0.0
    %1422 = vmatpush1.msra.mxu0 0.0
    %1423 = vmatprep.subr.mxu0 0.0
    %1424 = vmatpush1.msra.mxu0 0.0
    %1425 = vmatprep.mubr.f32.mxu0 0.0
    %1426 = vmatmul.mubr.f32.gmra.mrb[0].mxu0 %v372
    %v1427 = vpop.f32.mrb[0].mxu0
    %v1428 = vadd.f32 %v1359, %v1427
    %v1429 = vpop.f32.mrb[0].mxu0
    %1430 = vdwg.mxu0
    %1431 = vmatprep.subr.mxu0 0.0
    %1432 = vmatpush1.msra.mxu0 %v130
    %1433 = vmatprep.subr.mxu0 0.0
    %1434 = vmatpush1.msra.mxu0 %v131
    %1435 = vmatprep.subr.mxu0 0.0
    %1436 = vmatpush1.msra.mxu0 %v132
    %1437 = vmatprep.subr.mxu0 0.0
    %1438 = vmatpush1.msra.mxu0 %v133
    %1439 = vmatprep.subr.mxu0 0.0
    %1440 = vmatpush1.msra.mxu0 0.0
    %1441 = vmatprep.subr.mxu0 0.0
    %1442 = vmatpush1.msra.mxu0 0.0
    %1443 = vmatprep.subr.mxu0 0.0
    %1444 = vmatpush1.msra.mxu0 0.0
    %1445 = vmatprep.subr.mxu0 0.0
    %1446 = vmatpush1.msra.mxu0 0.0
    %1447 = vmatprep.subr.mxu0 0.0
    %1448 = vmatpush1.msra.mxu0 0.0
    %1449 = vmatprep.subr.mxu0 0.0
    %1450 = vmatpush1.msra.mxu0 0.0
    %1451 = vmatprep.subr.mxu0 0.0
    %1452 = vmatpush1.msra.mxu0 0.0
    %1453 = vmatprep.subr.mxu0 0.0
    %1454 = vmatpush1.msra.mxu0 0.0
    %1455 = vmatprep.subr.mxu0 0.0
    %1456 = vmatpush1.msra.mxu0 0.0
    %1457 = vmatprep.subr.mxu0 0.0
    %1458 = vmatpush1.msra.mxu0 0.0
    %1459 = vmatprep.subr.mxu0 0.0
    %1460 = vmatpush1.msra.mxu0 0.0
    %1461 = vmatprep.subr.mxu0 0.0
    %1462 = vmatpush1.msra.mxu0 0.0
    %1463 = vmatprep.subr.mxu0 0.0
    %1464 = vmatpush1.msra.mxu0 0.0
    %1465 = vmatprep.subr.mxu0 0.0
    %1466 = vmatpush1.msra.mxu0 0.0
    %1467 = vmatprep.subr.mxu0 0.0
    %1468 = vmatpush1.msra.mxu0 0.0
    %1469 = vmatprep.subr.mxu0 0.0
    %1470 = vmatpush1.msra.mxu0 0.0
    %1471 = vmatprep.subr.mxu0 0.0
    %1472 = vmatpush1.msra.mxu0 0.0
    %1473 = vmatprep.subr.mxu0 0.0
    %1474 = vmatpush1.msra.mxu0 0.0
    %1475 = vmatprep.subr.mxu0 0.0
    %1476 = vmatpush1.msra.mxu0 0.0
    %1477 = vmatprep.subr.mxu0 0.0
    %1478 = vmatpush1.msra.mxu0 0.0
    %1479 = vmatprep.subr.mxu0 0.0
    %1480 = vmatpush1.msra.mxu0 0.0
    %1481 = vmatprep.subr.mxu0 0.0
    %1482 = vmatpush1.msra.mxu0 0.0
    %1483 = vmatprep.subr.mxu0 0.0
    %1484 = vmatpush1.msra.mxu0 0.0
    %1485 = vmatprep.subr.mxu0 0.0
    %1486 = vmatpush1.msra.mxu0 0.0
    %1487 = vmatprep.subr.mxu0 0.0
    %1488 = vmatpush1.msra.mxu0 0.0
    %1489 = vmatprep.subr.mxu0 0.0
    %1490 = vmatpush1.msra.mxu0 0.0
    %1491 = vmatprep.subr.mxu0 0.0
    %1492 = vmatpush1.msra.mxu0 0.0
    %1493 = vmatprep.subr.mxu0 0.0
    %1494 = vmatpush1.msra.mxu0 0.0
    %1495 = vmatprep.mubr.f32.mxu0 0.0
    %1496 = vmatmul.mubr.f32.gmra.mrb[0].mxu0 %v228
    %v1497 = vpop.f32.mrb[0].mxu0
    %v1498 = vadd.f32 0.0, %v1497
    %v1499 = vpop.f32.mrb[0].mxu0
    %1500 = vdwg.mxu0
    %v1501 = vadd.f32 %v1428, %v1498
    %v1502 = vxor.u32 %v1501, 2147483648
    %v1503 = vmul.f32 %v1502, 1.442695
    %v1504 = vpow.pop %v1503
    %v1505 = vadd.f32 %v1504, 1.0
    %v1506 = vrcp.pop %v1505
    %v1507 = vmul.f32 1.0, %v1506
    %v1509 = vlaneseq
    %v1510 = vshrl.u32 %v1509, 7
    %v1511 = vsub.s32 0, %v1510
    %v1512 = vrot.slane %v137, %v1511
    %1513 = vrot.lane.b32.xlu0 %v1512, 64
    %v1514 = vpop.permute.xlu0 %1513
    %v1516 = vadd.f32 %v1498, %v1514
    %1518 = vrot.lane.b32.xlu0 %v1516, 64
    %v1519 = vpop.permute.xlu0 %1518
    %v1521 = vmul.f32 %v1507, %v1519
    %1523 = vrot.lane.b32.xlu0 %v1521, 64
    %v1524 = vpop.permute.xlu0 %1523
    %v1526 = vadd.f32 %v1428, %v1524
    %v1527 = vtanh.pop %v1526
    %v1528 = vsub.f32 1.0, %v1507
    %1530 = vrot.lane.b32.xlu0 %v1527, 96
    %v1531 = vpop.permute.xlu0 %1530
    %v1533 = vmul.f32 %v1528, %v1531
    %v1534 = vmul.f32 %v1507, 0.0
    %v1535 = vadd.f32 %v1533, %v1534
    %1536 = vmatprep.subr.mxu0 0.0
    %1537 = vmatpush1.msra.mxu0 %v122
    %1538 = vmatprep.subr.mxu0 0.0
    %1539 = vmatpush1.msra.mxu0 %v123
    %1540 = vmatprep.subr.mxu0 0.0
    %1541 = vmatpush1.msra.mxu0 %v124
    %1542 = vmatprep.subr.mxu0 0.0
    %1543 = vmatpush1.msra.mxu0 %v125
    %1544 = vmatprep.subr.mxu0 0.0
    %1545 = vmatpush1.msra.mxu0 0.0
    %1546 = vmatprep.subr.mxu0 0.0
    %1547 = vmatpush1.msra.mxu0 0.0
    %1548 = vmatprep.subr.mxu0 0.0
    %1549 = vmatpush1.msra.mxu0 0.0
    %1550 = vmatprep.subr.mxu0 0.0
    %1551 = vmatpush1.msra.mxu0 0.0
    %1552 = vmatprep.subr.mxu0 0.0
    %1553 = vmatpush1.msra.mxu0 0.0
    %1554 = vmatprep.subr.mxu0 0.0
    %1555 = vmatpush1.msra.mxu0 0.0
    %1556 = vmatprep.subr.mxu0 0.0
    %1557 = vmatpush1.msra.mxu0 0.0
    %1558 = vmatprep.subr.mxu0 0.0
    %1559 = vmatpush1.msra.mxu0 0.0
    %1560 = vmatprep.subr.mxu0 0.0
    %1561 = vmatpush1.msra.mxu0 0.0
    %1562 = vmatprep.subr.mxu0 0.0
    %1563 = vmatpush1.msra.mxu0 0.0
    %1564 = vmatprep.subr.mxu0 0.0
    %1565 = vmatpush1.msra.mxu0 0.0
    %1566 = vmatprep.subr.mxu0 0.0
    %1567 = vmatpush1.msra.mxu0 0.0
    %1568 = vmatprep.subr.mxu0 0.0
    %1569 = vmatpush1.msra.mxu0 0.0
    %1570 = vmatprep.subr.mxu0 0.0
    %1571 = vmatpush1.msra.mxu0 0.0
    %1572 = vmatprep.subr.mxu0 0.0
    %1573 = vmatpush1.msra.mxu0 0.0
    %1574 = vmatprep.subr.mxu0 0.0
    %1575 = vmatpush1.msra.mxu0 0.0
    %1576 = vmatprep.subr.mxu0 0.0
    %1577 = vmatpush1.msra.mxu0 0.0
    %1578 = vmatprep.subr.mxu0 0.0
    %1579 = vmatpush1.msra.mxu0 0.0
    %1580 = vmatprep.subr.mxu0 0.0
    %1581 = vmatpush1.msra.mxu0 0.0
    %1582 = vmatprep.subr.mxu0 0.0
    %1583 = vmatpush1.msra.mxu0 0.0
    %1584 = vmatprep.subr.mxu0 0.0
    %1585 = vmatpush1.msra.mxu0 0.0
    %1586 = vmatprep.subr.mxu0 0.0
    %1587 = vmatpush1.msra.mxu0 0.0
    %1588 = vmatprep.subr.mxu0 0.0
    %1589 = vmatpush1.msra.mxu0 0.0
    %1590 = vmatprep.subr.mxu0 0.0
    %1591 = vmatpush1.msra.mxu0 0.0
    %1592 = vmatprep.subr.mxu0 0.0
    %1593 = vmatpush1.msra.mxu0 0.0
    %1594 = vmatprep.subr.mxu0 0.0
    %1595 = vmatpush1.msra.mxu0 0.0
    %1596 = vmatprep.subr.mxu0 0.0
    %1597 = vmatpush1.msra.mxu0 0.0
    %1598 = vmatprep.subr.mxu0 0.0
    %1599 = vmatpush1.msra.mxu0 0.0
    %1600 = vmatprep.mubr.f32.mxu0 0.0
    %1601 = vmatmul.mubr.f32.gmra.mrb[0].mxu0 %v510
    %v1602 = vpop.f32.mrb[0].mxu0
    %v1603 = vadd.f32 %v1359, %v1602
    %v1604 = vpop.f32.mrb[0].mxu0
    %1605 = vdwg.mxu0
    %1607 = vrot.lane.b32.xlu0 %v1535, 96
    %v1608 = vpop.permute.xlu0 %1607
    %v1609 = vsel %vm226, %v1608, 0
    %1611 = vmatprep.subr.mxu0 0.0
    %1612 = vmatpush1.msra.mxu0 %v130
    %1613 = vmatprep.subr.mxu0 0.0
    %1614 = vmatpush1.msra.mxu0 %v131
    %1615 = vmatprep.subr.mxu0 0.0
    %1616 = vmatpush1.msra.mxu0 %v132
    %1617 = vmatprep.subr.mxu0 0.0
    %1618 = vmatpush1.msra.mxu0 %v133
    %1619 = vmatprep.subr.mxu0 0.0
    %1620 = vmatpush1.msra.mxu0 0.0
    %1621 = vmatprep.subr.mxu0 0.0
    %1622 = vmatpush1.msra.mxu0 0.0
    %1623 = vmatprep.subr.mxu0 0.0
    %1624 = vmatpush1.msra.mxu0 0.0
    %1625 = vmatprep.subr.mxu0 0.0
    %1626 = vmatpush1.msra.mxu0 0.0
    %1627 = vmatprep.subr.mxu0 0.0
    %1628 = vmatpush1.msra.mxu0 0.0
    %1629 = vmatprep.subr.mxu0 0.0
    %1630 = vmatpush1.msra.mxu0 0.0
    %1631 = vmatprep.subr.mxu0 0.0
    %1632 = vmatpush1.msra.mxu0 0.0
    %1633 = vmatprep.subr.mxu0 0.0
    %1634 = vmatpush1.msra.mxu0 0.0
    %1635 = vmatprep.subr.mxu0 0.0
    %1636 = vmatpush1.msra.mxu0 0.0
    %1637 = vmatprep.subr.mxu0 0.0
    %1638 = vmatpush1.msra.mxu0 0.0
    %1639 = vmatprep.subr.mxu0 0.0
    %1640 = vmatpush1.msra.mxu0 0.0
    %1641 = vmatprep.subr.mxu0 0.0
    %1642 = vmatpush1.msra.mxu0 0.0
    %1643 = vmatprep.subr.mxu0 0.0
    %1644 = vmatpush1.msra.mxu0 0.0
    %1645 = vmatprep.subr.mxu0 0.0
    %1646 = vmatpush1.msra.mxu0 0.0
    %1647 = vmatprep.subr.mxu0 0.0
    %1648 = vmatpush1.msra.mxu0 0.0
    %1649 = vmatprep.subr.mxu0 0.0
    %1650 = vmatpush1.msra.mxu0 0.0
    %1651 = vmatprep.subr.mxu0 0.0
    %1652 = vmatpush1.msra.mxu0 0.0
    %1653 = vmatprep.subr.mxu0 0.0
    %1654 = vmatpush1.msra.mxu0 0.0
    %1655 = vmatprep.subr.mxu0 0.0
    %1656 = vmatpush1.msra.mxu0 0.0
    %1657 = vmatprep.subr.mxu0 0.0
    %1658 = vmatpush1.msra.mxu0 0.0
    %1659 = vmatprep.subr.mxu0 0.0
    %1660 = vmatpush1.msra.mxu0 0.0
    %1661 = vmatprep.subr.mxu0 0.0
    %1662 = vmatpush1.msra.mxu0 0.0
    %1663 = vmatprep.subr.mxu0 0.0
    %1664 = vmatpush1.msra.mxu0 0.0
    %1665 = vmatprep.subr.mxu0 0.0
    %1666 = vmatpush1.msra.mxu0 0.0
    %1667 = vmatprep.subr.mxu0 0.0
    %1668 = vmatpush1.msra.mxu0 0.0
    %1669 = vmatprep.subr.mxu0 0.0
    %1670 = vmatpush1.msra.mxu0 0.0
    %1671 = vmatprep.subr.mxu0 0.0
    %1672 = vmatpush1.msra.mxu0 0.0
    %1673 = vmatprep.subr.mxu0 0.0
    %1674 = vmatpush1.msra.mxu0 0.0
    %1675 = vmatprep.mubr.f32.mxu0 0.0
    %1676 = vmatmul.mubr.f32.gmra.mrb[0].mxu0 %v1609
    %v1677 = vpop.f32.mrb[0].mxu0
    %v1678 = vadd.f32 0.0, %v1677
    %v1679 = vpop.f32.mrb[0].mxu0
    %1680 = vdwg.mxu0
    %v1681 = vadd.f32 %v1603, %v1678
    %v1682 = vxor.u32 %v1681, 2147483648
    %v1683 = vmul.f32 %v1682, 1.442695
    %v1684 = vpow.pop %v1683
    %v1685 = vadd.f32 %v1684, 1.0
    %v1686 = vrcp.pop %v1685
    %v1687 = vmul.f32 1.0, %v1686
    %v1688 = vadd.f32 %v1678, %v1514
    %1690 = vrot.lane.b32.xlu0 %v1688, 64
    %v1691 = vpop.permute.xlu0 %1690
    %v1693 = vmul.f32 %v1687, %v1691
    %1695 = vrot.lane.b32.xlu0 %v1693, 64
    %v1696 = vpop.permute.xlu0 %1695
    %v1698 = vadd.f32 %v1603, %v1696
    %v1699 = vtanh.pop %v1698
    %v1700 = vsub.f32 1.0, %v1687
    %1702 = vrot.lane.b32.xlu0 %v1699, 96
    %v1703 = vpop.permute.xlu0 %1702
    %v1705 = vmul.f32 %v1700, %v1703
    %v1706 = vmul.f32 %v1687, %v1535
    %v1707 = vadd.f32 %v1705, %v1706
    %1708 = vmatprep.subr.mxu0 0.0
    %1709 = vmatpush1.msra.mxu0 %v122
    %1710 = vmatprep.subr.mxu0 0.0
    %1711 = vmatpush1.msra.mxu0 %v123
    %1712 = vmatprep.subr.mxu0 0.0
    %1713 = vmatpush1.msra.mxu0 %v124
    %1714 = vmatprep.subr.mxu0 0.0
    %1715 = vmatpush1.msra.mxu0 %v125
    %1716 = vmatprep.subr.mxu0 0.0
    %1717 = vmatpush1.msra.mxu0 0.0
    %1718 = vmatprep.subr.mxu0 0.0
    %1719 = vmatpush1.msra.mxu0 0.0
    %1720 = vmatprep.subr.mxu0 0.0
    %1721 = vmatpush1.msra.mxu0 0.0
    %1722 = vmatprep.subr.mxu0 0.0
    %1723 = vmatpush1.msra.mxu0 0.0
    %1724 = vmatprep.subr.mxu0 0.0
    %1725 = vmatpush1.msra.mxu0 0.0
    %1726 = vmatprep.subr.mxu0 0.0
    %1727 = vmatpush1.msra.mxu0 0.0
    %1728 = vmatprep.subr.mxu0 0.0
    %1729 = vmatpush1.msra.mxu0 0.0
    %1730 = vmatprep.subr.mxu0 0.0
    %1731 = vmatpush1.msra.mxu0 0.0
    %1732 = vmatprep.subr.mxu0 0.0
    %1733 = vmatpush1.msra.mxu0 0.0
    %1734 = vmatprep.subr.mxu0 0.0
    %1735 = vmatpush1.msra.mxu0 0.0
    %1736 = vmatprep.subr.mxu0 0.0
    %1737 = vmatpush1.msra.mxu0 0.0
    %1738 = vmatprep.subr.mxu0 0.0
    %1739 = vmatpush1.msra.mxu0 0.0
    %1740 = vmatprep.subr.mxu0 0.0
    %1741 = vmatpush1.msra.mxu0 0.0
    %1742 = vmatprep.subr.mxu0 0.0
    %1743 = vmatpush1.msra.mxu0 0.0
    %1744 = vmatprep.subr.mxu0 0.0
    %1745 = vmatpush1.msra.mxu0 0.0
    %1746 = vmatprep.subr.mxu0 0.0
    %1747 = vmatpush1.msra.mxu0 0.0
    %1748 = vmatprep.subr.mxu0 0.0
    %1749 = vmatpush1.msra.mxu0 0.0
    %1750 = vmatprep.subr.mxu0 0.0
    %1751 = vmatpush1.msra.mxu0 0.0
    %1752 = vmatprep.subr.mxu0 0.0
    %1753 = vmatpush1.msra.mxu0 0.0
    %1754 = vmatprep.subr.mxu0 0.0
    %1755 = vmatpush1.msra.mxu0 0.0
    %1756 = vmatprep.subr.mxu0 0.0
    %1757 = vmatpush1.msra.mxu0 0.0
    %1758 = vmatprep.subr.mxu0 0.0
    %1759 = vmatpush1.msra.mxu0 0.0
    %1760 = vmatprep.subr.mxu0 0.0
    %1761 = vmatpush1.msra.mxu0 0.0
    %1762 = vmatprep.subr.mxu0 0.0
    %1763 = vmatpush1.msra.mxu0 0.0
    %1764 = vmatprep.subr.mxu0 0.0
    %1765 = vmatpush1.msra.mxu0 0.0
    %1766 = vmatprep.subr.mxu0 0.0
    %1767 = vmatpush1.msra.mxu0 0.0
    %1768 = vmatprep.subr.mxu0 0.0
    %1769 = vmatpush1.msra.mxu0 0.0
    %1770 = vmatprep.subr.mxu0 0.0
    %1771 = vmatpush1.msra.mxu0 0.0
    %1772 = vmatprep.mubr.f32.mxu0 0.0
    %1773 = vmatmul.mubr.f32.gmra.mrb[0].mxu0 %v652
    %v1774 = vpop.f32.mrb[0].mxu0
    %v1775 = vadd.f32 %v1359, %v1774
    %v1776 = vpop.f32.mrb[0].mxu0
    %1777 = vdwg.mxu0
    %1779 = vrot.lane.b32.xlu0 %v1707, 96
    %v1780 = vpop.permute.xlu0 %1779
    %v1781 = vsel %vm226, %v1780, 0
    %1783 = vmatprep.subr.mxu0 0.0
    %1784 = vmatpush1.msra.mxu0 %v130
    %1785 = vmatprep.subr.mxu0 0.0
    %1786 = vmatpush1.msra.mxu0 %v131
    %1787 = vmatprep.subr.mxu0 0.0
    %1788 = vmatpush1.msra.mxu0 %v132
    %1789 = vmatprep.subr.mxu0 0.0
    %1790 = vmatpush1.msra.mxu0 %v133
    %1791 = vmatprep.subr.mxu0 0.0
    %1792 = vmatpush1.msra.mxu0 0.0
    %1793 = vmatprep.subr.mxu0 0.0
    %1794 = vmatpush1.msra.mxu0 0.0
    %1795 = vmatprep.subr.mxu0 0.0
    %1796 = vmatpush1.msra.mxu0 0.0
    %1797 = vmatprep.subr.mxu0 0.0
    %1798 = vmatpush1.msra.mxu0 0.0
    %1799 = vmatprep.subr.mxu0 0.0
    %1800 = vmatpush1.msra.mxu0 0.0
    %1801 = vmatprep.subr.mxu0 0.0
    %1802 = vmatpush1.msra.mxu0 0.0
    %1803 = vmatprep.subr.mxu0 0.0
    %1804 = vmatpush1.msra.mxu0 0.0
    %1805 = vmatprep.subr.mxu0 0.0
    %1806 = vmatpush1.msra.mxu0 0.0
    %1807 = vmatprep.subr.mxu0 0.0
    %1808 = vmatpush1.msra.mxu0 0.0
    %1809 = vmatprep.subr.mxu0 0.0
    %1810 = vmatpush1.msra.mxu0 0.0
    %1811 = vmatprep.subr.mxu0 0.0
    %1812 = vmatpush1.msra.mxu0 0.0
    %1813 = vmatprep.subr.mxu0 0.0
    %1814 = vmatpush1.msra.mxu0 0.0
    %1815 = vmatprep.subr.mxu0 0.0
    %1816 = vmatpush1.msra.mxu0 0.0
    %1817 = vmatprep.subr.mxu0 0.0
    %1818 = vmatpush1.msra.mxu0 0.0
    %1819 = vmatprep.subr.mxu0 0.0
    %1820 = vmatpush1.msra.mxu0 0.0
    %1821 = vmatprep.subr.mxu0 0.0
    %1822 = vmatpush1.msra.mxu0 0.0
    %1823 = vmatprep.subr.mxu0 0.0
    %1824 = vmatpush1.msra.mxu0 0.0
    %1825 = vmatprep.subr.mxu0 0.0
    %1826 = vmatpush1.msra.mxu0 0.0
    %1827 = vmatprep.subr.mxu0 0.0
    %1828 = vmatpush1.msra.mxu0 0.0
    %1829 = vmatprep.subr.mxu0 0.0
    %1830 = vmatpush1.msra.mxu0 0.0
    %1831 = vmatprep.subr.mxu0 0.0
    %1832 = vmatpush1.msra.mxu0 0.0
    %1833 = vmatprep.subr.mxu0 0.0
    %1834 = vmatpush1.msra.mxu0 0.0
    %1835 = vmatprep.subr.mxu0 0.0
    %1836 = vmatpush1.msra.mxu0 0.0
    %1837 = vmatprep.subr.mxu0 0.0
    %1838 = vmatpush1.msra.mxu0 0.0
    %1839 = vmatprep.subr.mxu0 0.0
    %1840 = vmatpush1.msra.mxu0 0.0
    %1841 = vmatprep.subr.mxu0 0.0
    %1842 = vmatpush1.msra.mxu0 0.0
    %1843 = vmatprep.subr.mxu0 0.0
    %1844 = vmatpush1.msra.mxu0 0.0
    %1845 = vmatprep.subr.mxu0 0.0
    %1846 = vmatpush1.msra.mxu0 0.0
    %1847 = vmatprep.mubr.f32.mxu0 0.0
    %1848 = vmatmul.mubr.f32.gmra.mrb[0].mxu0 %v1781
    %v1849 = vpop.f32.mrb[0].mxu0
    %v1850 = vadd.f32 0.0, %v1849
    %v1851 = vpop.f32.mrb[0].mxu0
    %1852 = vdwg.mxu0
    %v1853 = vadd.f32 %v1775, %v1850
    %v1854 = vxor.u32 %v1853, 2147483648
    %v1855 = vmul.f32 %v1854, 1.442695
    %v1856 = vpow.pop %v1855
    %v1857 = vadd.f32 %v1856, 1.0
    %v1858 = vrcp.pop %v1857
    %v1859 = vmul.f32 1.0, %v1858
    %v1860 = vadd.f32 %v1850, %v1514
    %1862 = vrot.lane.b32.xlu0 %v1860, 64
    %v1863 = vpop.permute.xlu0 %1862
    %v1865 = vmul.f32 %v1859, %v1863
    %1867 = vrot.lane.b32.xlu0 %v1865, 64
    %v1868 = vpop.permute.xlu0 %1867
    %v1870 = vadd.f32 %v1775, %v1868
    %v1871 = vtanh.pop %v1870
    %v1872 = vsub.f32 1.0, %v1859
    %1874 = vrot.lane.b32.xlu0 %v1871, 96
    %v1875 = vpop.permute.xlu0 %1874
    %v1877 = vmul.f32 %v1872, %v1875
    %v1878 = vmul.f32 %v1859, %v1707
    %v1879 = vadd.f32 %v1877, %v1878
    %1880 = vmatprep.subr.mxu0 0.0
    %1881 = vmatpush1.msra.mxu0 %v122
    %1882 = vmatprep.subr.mxu0 0.0
    %1883 = vmatpush1.msra.mxu0 %v123
    %1884 = vmatprep.subr.mxu0 0.0
    %1885 = vmatpush1.msra.mxu0 %v124
    %1886 = vmatprep.subr.mxu0 0.0
    %1887 = vmatpush1.msra.mxu0 %v125
    %1888 = vmatprep.subr.mxu0 0.0
    %1889 = vmatpush1.msra.mxu0 0.0
    %1890 = vmatprep.subr.mxu0 0.0
    %1891 = vmatpush1.msra.mxu0 0.0
    %1892 = vmatprep.subr.mxu0 0.0
    %1893 = vmatpush1.msra.mxu0 0.0
    %1894 = vmatprep.subr.mxu0 0.0
    %1895 = vmatpush1.msra.mxu0 0.0
    %1896 = vmatprep.subr.mxu0 0.0
    %1897 = vmatpush1.msra.mxu0 0.0
    %1898 = vmatprep.subr.mxu0 0.0
    %1899 = vmatpush1.msra.mxu0 0.0
    %1900 = vmatprep.subr.mxu0 0.0
    %1901 = vmatpush1.msra.mxu0 0.0
    %1902 = vmatprep.subr.mxu0 0.0
    %1903 = vmatpush1.msra.mxu0 0.0
    %1904 = vmatprep.subr.mxu0 0.0
    %1905 = vmatpush1.msra.mxu0 0.0
    %1906 = vmatprep.subr.mxu0 0.0
    %1907 = vmatpush1.msra.mxu0 0.0
    %1908 = vmatprep.subr.mxu0 0.0
    %1909 = vmatpush1.msra.mxu0 0.0
    %1910 = vmatprep.subr.mxu0 0.0
    %1911 = vmatpush1.msra.mxu0 0.0
    %1912 = vmatprep.subr.mxu0 0.0
    %1913 = vmatpush1.msra.mxu0 0.0
    %1914 = vmatprep.subr.mxu0 0.0
    %1915 = vmatpush1.msra.mxu0 0.0
    %1916 = vmatprep.subr.mxu0 0.0
    %1917 = vmatpush1.msra.mxu0 0.0
    %1918 = vmatprep.subr.mxu0 0.0
    %1919 = vmatpush1.msra.mxu0 0.0
    %1920 = vmatprep.subr.mxu0 0.0
    %1921 = vmatpush1.msra.mxu0 0.0
    %1922 = vmatprep.subr.mxu0 0.0
    %1923 = vmatpush1.msra.mxu0 0.0
    %1924 = vmatprep.subr.mxu0 0.0
    %1925 = vmatpush1.msra.mxu0 0.0
    %1926 = vmatprep.subr.mxu0 0.0
    %1927 = vmatpush1.msra.mxu0 0.0
    %1928 = vmatprep.subr.mxu0 0.0
    %1929 = vmatpush1.msra.mxu0 0.0
    %1930 = vmatprep.subr.mxu0 0.0
    %1931 = vmatpush1.msra.mxu0 0.0
    %1932 = vmatprep.subr.mxu0 0.0
    %1933 = vmatpush1.msra.mxu0 0.0
    %1934 = vmatprep.subr.mxu0 0.0
    %1935 = vmatpush1.msra.mxu0 0.0
    %1936 = vmatprep.subr.mxu0 0.0
    %1937 = vmatpush1.msra.mxu0 0.0
    %1938 = vmatprep.subr.mxu0 0.0
    %1939 = vmatpush1.msra.mxu0 0.0
    %1940 = vmatprep.subr.mxu0 0.0
    %1941 = vmatpush1.msra.mxu0 0.0
    %1942 = vmatprep.subr.mxu0 0.0
    %1943 = vmatpush1.msra.mxu0 0.0
    %1944 = vmatprep.mubr.f32.mxu0 0.0
    %1945 = vmatmul.mubr.f32.gmra.mrb[0].mxu0 %v794
    %v1946 = vpop.f32.mrb[0].mxu0
    %v1947 = vadd.f32 %v1359, %v1946
    %v1948 = vpop.f32.mrb[0].mxu0
    %1949 = vdwg.mxu0
    %1951 = vrot.lane.b32.xlu0 %v1879, 96
    %v1952 = vpop.permute.xlu0 %1951
    %v1953 = vsel %vm226, %v1952, 0
    %1955 = vmatprep.subr.mxu0 0.0
    %1956 = vmatpush1.msra.mxu0 %v130
    %1957 = vmatprep.subr.mxu0 0.0
    %1958 = vmatpush1.msra.mxu0 %v131
    %1959 = vmatprep.subr.mxu0 0.0
    %1960 = vmatpush1.msra.mxu0 %v132
    %1961 = vmatprep.subr.mxu0 0.0
    %1962 = vmatpush1.msra.mxu0 %v133
    %1963 = vmatprep.subr.mxu0 0.0
    %1964 = vmatpush1.msra.mxu0 0.0
    %1965 = vmatprep.subr.mxu0 0.0
    %1966 = vmatpush1.msra.mxu0 0.0
    %1967 = vmatprep.subr.mxu0 0.0
    %1968 = vmatpush1.msra.mxu0 0.0
    %1969 = vmatprep.subr.mxu0 0.0
    %1970 = vmatpush1.msra.mxu0 0.0
    %1971 = vmatprep.subr.mxu0 0.0
    %1972 = vmatpush1.msra.mxu0 0.0
    %1973 = vmatprep.subr.mxu0 0.0
    %1974 = vmatpush1.msra.mxu0 0.0
    %1975 = vmatprep.subr.mxu0 0.0
    %1976 = vmatpush1.msra.mxu0 0.0
    %1977 = vmatprep.subr.mxu0 0.0
    %1978 = vmatpush1.msra.mxu0 0.0
    %1979 = vmatprep.subr.mxu0 0.0
    %1980 = vmatpush1.msra.mxu0 0.0
    %1981 = vmatprep.subr.mxu0 0.0
    %1982 = vmatpush1.msra.mxu0 0.0
    %1983 = vmatprep.subr.mxu0 0.0
    %1984 = vmatpush1.msra.mxu0 0.0
    %1985 = vmatprep.subr.mxu0 0.0
    %1986 = vmatpush1.msra.mxu0 0.0
    %1987 = vmatprep.subr.mxu0 0.0
    %1988 = vmatpush1.msra.mxu0 0.0
    %1989 = vmatprep.subr.mxu0 0.0
    %1990 = vmatpush1.msra.mxu0 0.0
    %1991 = vmatprep.subr.mxu0 0.0
    %1992 = vmatpush1.msra.mxu0 0.0
    %1993 = vmatprep.subr.mxu0 0.0
    %1994 = vmatpush1.msra.mxu0 0.0
    %1995 = vmatprep.subr.mxu0 0.0
    %1996 = vmatpush1.msra.mxu0 0.0
    %1997 = vmatprep.subr.mxu0 0.0
    %1998 = vmatpush1.msra.mxu0 0.0
    %1999 = vmatprep.subr.mxu0 0.0
    %2000 = vmatpush1.msra.mxu0 0.0
    %2001 = vmatprep.subr.mxu0 0.0
    %2002 = vmatpush1.msra.mxu0 0.0
    %2003 = vmatprep.subr.mxu0 0.0
    %2004 = vmatpush1.msra.mxu0 0.0
    %2005 = vmatprep.subr.mxu0 0.0
    %2006 = vmatpush1.msra.mxu0 0.0
    %2007 = vmatprep.subr.mxu0 0.0
    %2008 = vmatpush1.msra.mxu0 0.0
    %2009 = vmatprep.subr.mxu0 0.0
    %2010 = vmatpush1.msra.mxu0 0.0
    %2011 = vmatprep.subr.mxu0 0.0
    %2012 = vmatpush1.msra.mxu0 0.0
    %2013 = vmatprep.subr.mxu0 0.0
    %2014 = vmatpush1.msra.mxu0 0.0
    %2015 = vmatprep.subr.mxu0 0.0
    %2016 = vmatpush1.msra.mxu0 0.0
    %2017 = vmatprep.subr.mxu0 0.0
    %2018 = vmatpush1.msra.mxu0 0.0
    %2019 = vmatprep.mubr.f32.mxu0 0.0
    %2020 = vmatmul.mubr.f32.gmra.mrb[0].mxu0 %v1953
    %v2021 = vpop.f32.mrb[0].mxu0
    %v2022 = vadd.f32 0.0, %v2021
    %v2023 = vpop.f32.mrb[0].mxu0
    %2024 = vdwg.mxu0
    %v2025 = vadd.f32 %v1947, %v2022
    %v2026 = vxor.u32 %v2025, 2147483648
    %v2027 = vmul.f32 %v2026, 1.442695
    %v2028 = vpow.pop %v2027
    %v2029 = vadd.f32 %v2028, 1.0
    %v2030 = vrcp.pop %v2029
    %v2031 = vmul.f32 1.0, %v2030
    %v2032 = vadd.f32 %v2022, %v1514
    %2034 = vrot.lane.b32.xlu0 %v2032, 64
    %v2035 = vpop.permute.xlu0 %2034
    %v2037 = vmul.f32 %v2031, %v2035
    %2039 = vrot.lane.b32.xlu0 %v2037, 64
    %v2040 = vpop.permute.xlu0 %2039
    %v2042 = vadd.f32 %v1947, %v2040
    %v2043 = vtanh.pop %v2042
    %v2044 = vsub.f32 1.0, %v2031
    %2046 = vrot.lane.b32.xlu0 %v2043, 96
    %v2047 = vpop.permute.xlu0 %2046
    %v2049 = vmul.f32 %v2044, %v2047
    %v2050 = vmul.f32 %v2031, %v1879
    %v2051 = vadd.f32 %v2049, %v2050
    %2052 = vmatprep.subr.mxu0 0.0
    %2053 = vmatpush1.msra.mxu0 %v122
    %2054 = vmatprep.subr.mxu0 0.0
    %2055 = vmatpush1.msra.mxu0 %v123
    %2056 = vmatprep.subr.mxu0 0.0
    %2057 = vmatpush1.msra.mxu0 %v124
    %2058 = vmatprep.subr.mxu0 0.0
    %2059 = vmatpush1.msra.mxu0 %v125
    %2060 = vmatprep.subr.mxu0 0.0
    %2061 = vmatpush1.msra.mxu0 0.0
    %2062 = vmatprep.subr.mxu0 0.0
    %2063 = vmatpush1.msra.mxu0 0.0
    %2064 = vmatprep.subr.mxu0 0.0
    %2065 = vmatpush1.msra.mxu0 0.0
    %2066 = vmatprep.subr.mxu0 0.0
    %2067 = vmatpush1.msra.mxu0 0.0
    %2068 = vmatprep.subr.mxu0 0.0
    %2069 = vmatpush1.msra.mxu0 0.0
    %2070 = vmatprep.subr.mxu0 0.0
    %2071 = vmatpush1.msra.mxu0 0.0
    %2072 = vmatprep.subr.mxu0 0.0
    %2073 = vmatpush1.msra.mxu0 0.0
    %2074 = vmatprep.subr.mxu0 0.0
    %2075 = vmatpush1.msra.mxu0 0.0
    %2076 = vmatprep.subr.mxu0 0.0
    %2077 = vmatpush1.msra.mxu0 0.0
    %2078 = vmatprep.subr.mxu0 0.0
    %2079 = vmatpush1.msra.mxu0 0.0
    %2080 = vmatprep.subr.mxu0 0.0
    %2081 = vmatpush1.msra.mxu0 0.0
    %2082 = vmatprep.subr.mxu0 0.0
    %2083 = vmatpush1.msra.mxu0 0.0
    %2084 = vmatprep.subr.mxu0 0.0
    %2085 = vmatpush1.msra.mxu0 0.0
    %2086 = vmatprep.subr.mxu0 0.0
    %2087 = vmatpush1.msra.mxu0 0.0
    %2088 = vmatprep.subr.mxu0 0.0
    %2089 = vmatpush1.msra.mxu0 0.0
    %2090 = vmatprep.subr.mxu0 0.0
    %2091 = vmatpush1.msra.mxu0 0.0
    %2092 = vmatprep.subr.mxu0 0.0
    %2093 = vmatpush1.msra.mxu0 0.0
    %2094 = vmatprep.subr.mxu0 0.0
    %2095 = vmatpush1.msra.mxu0 0.0
    %2096 = vmatprep.subr.mxu0 0.0
    %2097 = vmatpush1.msra.mxu0 0.0
    %2098 = vmatprep.subr.mxu0 0.0
    %2099 = vmatpush1.msra.mxu0 0.0
    %2100 = vmatprep.subr.mxu0 0.0
    %2101 = vmatpush1.msra.mxu0 0.0
    %2102 = vmatprep.subr.mxu0 0.0
    %2103 = vmatpush1.msra.mxu0 0.0
    %2104 = vmatprep.subr.mxu0 0.0
    %2105 = vmatpush1.msra.mxu0 0.0
    %2106 = vmatprep.subr.mxu0 0.0
    %2107 = vmatpush1.msra.mxu0 0.0
    %2108 = vmatprep.subr.mxu0 0.0
    %2109 = vmatpush1.msra.mxu0 0.0
    %2110 = vmatprep.subr.mxu0 0.0
    %2111 = vmatpush1.msra.mxu0 0.0
    %2112 = vmatprep.subr.mxu0 0.0
    %2113 = vmatpush1.msra.mxu0 0.0
    %2114 = vmatprep.subr.mxu0 0.0
    %2115 = vmatpush1.msra.mxu0 0.0
    %2116 = vmatprep.mubr.f32.mxu0 0.0
    %2117 = vmatmul.mubr.f32.gmra.mrb[0].mxu0 %v936
    %v2118 = vpop.f32.mrb[0].mxu0
    %v2119 = vadd.f32 %v1359, %v2118
    %v2120 = vpop.f32.mrb[0].mxu0
    %2121 = vdwg.mxu0
    %2123 = vrot.lane.b32.xlu0 %v2051, 96
    %v2124 = vpop.permute.xlu0 %2123
    %v2125 = vsel %vm226, %v2124, 0
    %2127 = vmatprep.subr.mxu0 0.0
    %2128 = vmatpush1.msra.mxu0 %v130
    %2129 = vmatprep.subr.mxu0 0.0
    %2130 = vmatpush1.msra.mxu0 %v131
    %2131 = vmatprep.subr.mxu0 0.0
    %2132 = vmatpush1.msra.mxu0 %v132
    %2133 = vmatprep.subr.mxu0 0.0
    %2134 = vmatpush1.msra.mxu0 %v133
    %2135 = vmatprep.subr.mxu0 0.0
    %2136 = vmatpush1.msra.mxu0 0.0
    %2137 = vmatprep.subr.mxu0 0.0
    %2138 = vmatpush1.msra.mxu0 0.0
    %2139 = vmatprep.subr.mxu0 0.0
    %2140 = vmatpush1.msra.mxu0 0.0
    %2141 = vmatprep.subr.mxu0 0.0
    %2142 = vmatpush1.msra.mxu0 0.0
    %2143 = vmatprep.subr.mxu0 0.0
    %2144 = vmatpush1.msra.mxu0 0.0
    %2145 = vmatprep.subr.mxu0 0.0
    %2146 = vmatpush1.msra.mxu0 0.0
    %2147 = vmatprep.subr.mxu0 0.0
    %2148 = vmatpush1.msra.mxu0 0.0
    %2149 = vmatprep.subr.mxu0 0.0
    %2150 = vmatpush1.msra.mxu0 0.0
    %2151 = vmatprep.subr.mxu0 0.0
    %2152 = vmatpush1.msra.mxu0 0.0
    %2153 = vmatprep.subr.mxu0 0.0
    %2154 = vmatpush1.msra.mxu0 0.0
    %2155 = vmatprep.subr.mxu0 0.0
    %2156 = vmatpush1.msra.mxu0 0.0
    %2157 = vmatprep.subr.mxu0 0.0
    %2158 = vmatpush1.msra.mxu0 0.0
    %2159 = vmatprep.subr.mxu0 0.0
    %2160 = vmatpush1.msra.mxu0 0.0
    %2161 = vmatprep.subr.mxu0 0.0
    %2162 = vmatpush1.msra.mxu0 0.0
    %2163 = vmatprep.subr.mxu0 0.0
    %2164 = vmatpush1.msra.mxu0 0.0
    %2165 = vmatprep.subr.mxu0 0.0
    %2166 = vmatpush1.msra.mxu0 0.0
    %2167 = vmatprep.subr.mxu0 0.0
    %2168 = vmatpush1.msra.mxu0 0.0
    %2169 = vmatprep.subr.mxu0 0.0
    %2170 = vmatpush1.msra.mxu0 0.0
    %2171 = vmatprep.subr.mxu0 0.0
    %2172 = vmatpush1.msra.mxu0 0.0
    %2173 = vmatprep.subr.mxu0 0.0
    %2174 = vmatpush1.msra.mxu0 0.0
    %2175 = vmatprep.subr.mxu0 0.0
    %2176 = vmatpush1.msra.mxu0 0.0
    %2177 = vmatprep.subr.mxu0 0.0
    %2178 = vmatpush1.msra.mxu0 0.0
    %2179 = vmatprep.subr.mxu0 0.0
    %2180 = vmatpush1.msra.mxu0 0.0
    %2181 = vmatprep.subr.mxu0 0.0
    %2182 = vmatpush1.msra.mxu0 0.0
    %2183 = vmatprep.subr.mxu0 0.0
    %2184 = vmatpush1.msra.mxu0 0.0
    %2185 = vmatprep.subr.mxu0 0.0
    %2186 = vmatpush1.msra.mxu0 0.0
    %2187 = vmatprep.subr.mxu0 0.0
    %2188 = vmatpush1.msra.mxu0 0.0
    %2189 = vmatprep.subr.mxu0 0.0
    %2190 = vmatpush1.msra.mxu0 0.0
    %2191 = vmatprep.mubr.f32.mxu0 0.0
    %2192 = vmatmul.mubr.f32.gmra.mrb[0].mxu0 %v2125
    %v2193 = vpop.f32.mrb[0].mxu0
    %v2194 = vadd.f32 0.0, %v2193
    %v2195 = vpop.f32.mrb[0].mxu0
    %2196 = vdwg.mxu0
    %v2197 = vadd.f32 %v2119, %v2194
    %v2198 = vxor.u32 %v2197, 2147483648
    %v2199 = vmul.f32 %v2198, 1.442695
    %v2200 = vpow.pop %v2199
    %v2201 = vadd.f32 %v2200, 1.0
    %v2202 = vrcp.pop %v2201
    %v2203 = vmul.f32 1.0, %v2202
    %v2204 = vadd.f32 %v2194, %v1514
    %2206 = vrot.lane.b32.xlu0 %v2204, 64
    %v2207 = vpop.permute.xlu0 %2206
    %v2209 = vmul.f32 %v2203, %v2207
    %2211 = vrot.lane.b32.xlu0 %v2209, 64
    %v2212 = vpop.permute.xlu0 %2211
    %v2214 = vadd.f32 %v2119, %v2212
    %v2215 = vtanh.pop %v2214
    %v2216 = vsub.f32 1.0, %v2203
    %2218 = vrot.lane.b32.xlu0 %v2215, 96
    %v2219 = vpop.permute.xlu0 %2218
    %v2221 = vmul.f32 %v2216, %v2219
    %v2222 = vmul.f32 %v2203, %v2051
    %v2223 = vadd.f32 %v2221, %v2222
    %2224 = vmatprep.subr.mxu0 0.0
    %2225 = vmatpush1.msra.mxu0 %v122
    %2226 = vmatprep.subr.mxu0 0.0
    %2227 = vmatpush1.msra.mxu0 %v123
    %2228 = vmatprep.subr.mxu0 0.0
    %2229 = vmatpush1.msra.mxu0 %v124
    %2230 = vmatprep.subr.mxu0 0.0
    %2231 = vmatpush1.msra.mxu0 %v125
    %2232 = vmatprep.subr.mxu0 0.0
    %2233 = vmatpush1.msra.mxu0 0.0
    %2234 = vmatprep.subr.mxu0 0.0
    %2235 = vmatpush1.msra.mxu0 0.0
    %2236 = vmatprep.subr.mxu0 0.0
    %2237 = vmatpush1.msra.mxu0 0.0
    %2238 = vmatprep.subr.mxu0 0.0
    %2239 = vmatpush1.msra.mxu0 0.0
    %2240 = vmatprep.subr.mxu0 0.0
    %2241 = vmatpush1.msra.mxu0 0.0
    %2242 = vmatprep.subr.mxu0 0.0
    %2243 = vmatpush1.msra.mxu0 0.0
    %2244 = vmatprep.subr.mxu0 0.0
    %2245 = vmatpush1.msra.mxu0 0.0
    %2246 = vmatprep.subr.mxu0 0.0
    %2247 = vmatpush1.msra.mxu0 0.0
    %2248 = vmatprep.subr.mxu0 0.0
    %2249 = vmatpush1.msra.mxu0 0.0
    %2250 = vmatprep.subr.mxu0 0.0
    %2251 = vmatpush1.msra.mxu0 0.0
    %2252 = vmatprep.subr.mxu0 0.0
    %2253 = vmatpush1.msra.mxu0 0.0
    %2254 = vmatprep.subr.mxu0 0.0
    %2255 = vmatpush1.msra.mxu0 0.0
    %2256 = vmatprep.subr.mxu0 0.0
    %2257 = vmatpush1.msra.mxu0 0.0
    %2258 = vmatprep.subr.mxu0 0.0
    %2259 = vmatpush1.msra.mxu0 0.0
    %2260 = vmatprep.subr.mxu0 0.0
    %2261 = vmatpush1.msra.mxu0 0.0
    %2262 = vmatprep.subr.mxu0 0.0
    %2263 = vmatpush1.msra.mxu0 0.0
    %2264 = vmatprep.subr.mxu0 0.0
    %2265 = vmatpush1.msra.mxu0 0.0
    %2266 = vmatprep.subr.mxu0 0.0
    %2267 = vmatpush1.msra.mxu0 0.0
    %2268 = vmatprep.subr.mxu0 0.0
    %2269 = vmatpush1.msra.mxu0 0.0
    %2270 = vmatprep.subr.mxu0 0.0
    %2271 = vmatpush1.msra.mxu0 0.0
    %2272 = vmatprep.subr.mxu0 0.0
    %2273 = vmatpush1.msra.mxu0 0.0
    %2274 = vmatprep.subr.mxu0 0.0
    %2275 = vmatpush1.msra.mxu0 0.0
    %2276 = vmatprep.subr.mxu0 0.0
    %2277 = vmatpush1.msra.mxu0 0.0
    %2278 = vmatprep.subr.mxu0 0.0
    %2279 = vmatpush1.msra.mxu0 0.0
    %2280 = vmatprep.subr.mxu0 0.0
    %2281 = vmatpush1.msra.mxu0 0.0
    %2282 = vmatprep.subr.mxu0 0.0
    %2283 = vmatpush1.msra.mxu0 0.0
    %2284 = vmatprep.subr.mxu0 0.0
    %2285 = vmatpush1.msra.mxu0 0.0
    %2286 = vmatprep.subr.mxu0 0.0
    %2287 = vmatpush1.msra.mxu0 0.0
    %2288 = vmatprep.mubr.f32.mxu0 0.0
    %2289 = vmatmul.mubr.f32.gmra.mrb[0].mxu0 %v1078
    %v2290 = vpop.f32.mrb[0].mxu0
    %v2291 = vadd.f32 %v1359, %v2290
    %v2292 = vpop.f32.mrb[0].mxu0
    %2293 = vdwg.mxu0
    %2295 = vrot.lane.b32.xlu0 %v2223, 96
    %v2296 = vpop.permute.xlu0 %2295
    %v2297 = vsel %vm226, %v2296, 0
    %2299 = vmatprep.subr.mxu0 0.0
    %2300 = vmatpush1.msra.mxu0 %v130
    %2301 = vmatprep.subr.mxu0 0.0
    %2302 = vmatpush1.msra.mxu0 %v131
    %2303 = vmatprep.subr.mxu0 0.0
    %2304 = vmatpush1.msra.mxu0 %v132
    %2305 = vmatprep.subr.mxu0 0.0
    %2306 = vmatpush1.msra.mxu0 %v133
    %2307 = vmatprep.subr.mxu0 0.0
    %2308 = vmatpush1.msra.mxu0 0.0
    %2309 = vmatprep.subr.mxu0 0.0
    %2310 = vmatpush1.msra.mxu0 0.0
    %2311 = vmatprep.subr.mxu0 0.0
    %2312 = vmatpush1.msra.mxu0 0.0
    %2313 = vmatprep.subr.mxu0 0.0
    %2314 = vmatpush1.msra.mxu0 0.0
    %2315 = vmatprep.subr.mxu0 0.0
    %2316 = vmatpush1.msra.mxu0 0.0
    %2317 = vmatprep.subr.mxu0 0.0
    %2318 = vmatpush1.msra.mxu0 0.0
    %2319 = vmatprep.subr.mxu0 0.0
    %2320 = vmatpush1.msra.mxu0 0.0
    %2321 = vmatprep.subr.mxu0 0.0
    %2322 = vmatpush1.msra.mxu0 0.0
    %2323 = vmatprep.subr.mxu0 0.0
    %2324 = vmatpush1.msra.mxu0 0.0
    %2325 = vmatprep.subr.mxu0 0.0
    %2326 = vmatpush1.msra.mxu0 0.0
    %2327 = vmatprep.subr.mxu0 0.0
    %2328 = vmatpush1.msra.mxu0 0.0
    %2329 = vmatprep.subr.mxu0 0.0
    %2330 = vmatpush1.msra.mxu0 0.0
    %2331 = vmatprep.subr.mxu0 0.0
    %2332 = vmatpush1.msra.mxu0 0.0
    %2333 = vmatprep.subr.mxu0 0.0
    %2334 = vmatpush1.msra.mxu0 0.0
    %2335 = vmatprep.subr.mxu0 0.0
    %2336 = vmatpush1.msra.mxu0 0.0
    %2337 = vmatprep.subr.mxu0 0.0
    %2338 = vmatpush1.msra.mxu0 0.0
    %2339 = vmatprep.subr.mxu0 0.0
    %2340 = vmatpush1.msra.mxu0 0.0
    %2341 = vmatprep.subr.mxu0 0.0
    %2342 = vmatpush1.msra.mxu0 0.0
    %2343 = vmatprep.subr.mxu0 0.0
    %2344 = vmatpush1.msra.mxu0 0.0
    %2345 = vmatprep.subr.mxu0 0.0
    %2346 = vmatpush1.msra.mxu0 0.0
    %2347 = vmatprep.subr.mxu0 0.0
    %2348 = vmatpush1.msra.mxu0 0.0
    %2349 = vmatprep.subr.mxu0 0.0
    %2350 = vmatpush1.msra.mxu0 0.0
    %2351 = vmatprep.subr.mxu0 0.0
    %2352 = vmatpush1.msra.mxu0 0.0
    %2353 = vmatprep.subr.mxu0 0.0
    %2354 = vmatpush1.msra.mxu0 0.0
    %2355 = vmatprep.subr.mxu0 0.0
    %2356 = vmatpush1.msra.mxu0 0.0
    %2357 = vmatprep.subr.mxu0 0.0
    %2358 = vmatpush1.msra.mxu0 0.0
    %2359 = vmatprep.subr.mxu0 0.0
    %2360 = vmatpush1.msra.mxu0 0.0
    %2361 = vmatprep.subr.mxu0 0.0
    %2362 = vmatpush1.msra.mxu0 0.0
    %2363 = vmatprep.mubr.f32.mxu0 0.0
    %2364 = vmatmul.mubr.f32.gmra.mrb[0].mxu0 %v2297
    %v2365 = vpop.f32.mrb[0].mxu0
    %v2366 = vadd.f32 0.0, %v2365
    %v2367 = vpop.f32.mrb[0].mxu0
    %2368 = vdwg.mxu0
    %v2369 = vadd.f32 %v2291, %v2366
    %v2370 = vxor.u32 %v2369, 2147483648
    %v2371 = vmul.f32 %v2370, 1.442695
    %v2372 = vpow.pop %v2371
    %v2373 = vadd.f32 %v2372, 1.0
    %v2374 = vrcp.pop %v2373
    %v2375 = vmul.f32 1.0, %v2374
    %v2376 = vadd.f32 %v2366, %v1514
    %2378 = vrot.lane.b32.xlu0 %v2376, 64
    %v2379 = vpop.permute.xlu0 %2378
    %v2381 = vmul.f32 %v2375, %v2379
    %2383 = vrot.lane.b32.xlu0 %v2381, 64
    %v2384 = vpop.permute.xlu0 %2383
    %v2386 = vadd.f32 %v2291, %v2384
    %v2387 = vtanh.pop %v2386
    %v2388 = vsub.f32 1.0, %v2375
    %2390 = vrot.lane.b32.xlu0 %v2387, 96
    %v2391 = vpop.permute.xlu0 %2390
    %v2393 = vmul.f32 %v2388, %v2391
    %v2394 = vmul.f32 %v2375, %v2223
    %v2395 = vadd.f32 %v2393, %v2394
    %2396 = vmatprep.subr.mxu0 0.0
    %2397 = vmatpush1.msra.mxu0 %v122
    %2398 = vmatprep.subr.mxu0 0.0
    %2399 = vmatpush1.msra.mxu0 %v123
    %2400 = vmatprep.subr.mxu0 0.0
    %2401 = vmatpush1.msra.mxu0 %v124
    %2402 = vmatprep.subr.mxu0 0.0
    %2403 = vmatpush1.msra.mxu0 %v125
    %2404 = vmatprep.subr.mxu0 0.0
    %2405 = vmatpush1.msra.mxu0 0.0
    %2406 = vmatprep.subr.mxu0 0.0
    %2407 = vmatpush1.msra.mxu0 0.0
    %2408 = vmatprep.subr.mxu0 0.0
    %2409 = vmatpush1.msra.mxu0 0.0
    %2410 = vmatprep.subr.mxu0 0.0
    %2411 = vmatpush1.msra.mxu0 0.0
    %2412 = vmatprep.subr.mxu0 0.0
    %2413 = vmatpush1.msra.mxu0 0.0
    %2414 = vmatprep.subr.mxu0 0.0
    %2415 = vmatpush1.msra.mxu0 0.0
    %2416 = vmatprep.subr.mxu0 0.0
    %2417 = vmatpush1.msra.mxu0 0.0
    %2418 = vmatprep.subr.mxu0 0.0
    %2419 = vmatpush1.msra.mxu0 0.0
    %2420 = vmatprep.subr.mxu0 0.0
    %2421 = vmatpush1.msra.mxu0 0.0
    %2422 = vmatprep.subr.mxu0 0.0
    %2423 = vmatpush1.msra.mxu0 0.0
    %2424 = vmatprep.subr.mxu0 0.0
    %2425 = vmatpush1.msra.mxu0 0.0
    %2426 = vmatprep.subr.mxu0 0.0
    %2427 = vmatpush1.msra.mxu0 0.0
    %2428 = vmatprep.subr.mxu0 0.0
    %2429 = vmatpush1.msra.mxu0 0.0
    %2430 = vmatprep.subr.mxu0 0.0
    %2431 = vmatpush1.msra.mxu0 0.0
    %2432 = vmatprep.subr.mxu0 0.0
    %2433 = vmatpush1.msra.mxu0 0.0
    %2434 = vmatprep.subr.mxu0 0.0
    %2435 = vmatpush1.msra.mxu0 0.0
    %2436 = vmatprep.subr.mxu0 0.0
    %2437 = vmatpush1.msra.mxu0 0.0
    %2438 = vmatprep.subr.mxu0 0.0
    %2439 = vmatpush1.msra.mxu0 0.0
    %2440 = vmatprep.subr.mxu0 0.0
    %2441 = vmatpush1.msra.mxu0 0.0
    %2442 = vmatprep.subr.mxu0 0.0
    %2443 = vmatpush1.msra.mxu0 0.0
    %2444 = vmatprep.subr.mxu0 0.0
    %2445 = vmatpush1.msra.mxu0 0.0
    %2446 = vmatprep.subr.mxu0 0.0
    %2447 = vmatpush1.msra.mxu0 0.0
    %2448 = vmatprep.subr.mxu0 0.0
    %2449 = vmatpush1.msra.mxu0 0.0
    %2450 = vmatprep.subr.mxu0 0.0
    %2451 = vmatpush1.msra.mxu0 0.0
    %2452 = vmatprep.subr.mxu0 0.0
    %2453 = vmatpush1.msra.mxu0 0.0
    %2454 = vmatprep.subr.mxu0 0.0
    %2455 = vmatpush1.msra.mxu0 0.0
    %2456 = vmatprep.subr.mxu0 0.0
    %2457 = vmatpush1.msra.mxu0 0.0
    %2458 = vmatprep.subr.mxu0 0.0
    %2459 = vmatpush1.msra.mxu0 0.0
    %2460 = vmatprep.mubr.f32.mxu0 0.0
    %2461 = vmatmul.mubr.f32.gmra.mrb[0].mxu0 %v1220
    %v2462 = vpop.f32.mrb[0].mxu0
    %v2463 = vadd.f32 %v1359, %v2462
    %v2464 = vpop.f32.mrb[0].mxu0
    %2465 = vdwg.mxu0
    %2467 = vrot.lane.b32.xlu0 %v2395, 96
    %v2468 = vpop.permute.xlu0 %2467
    %v2469 = vsel %vm226, %v2468, 0
    %2471 = vmatprep.subr.mxu0 0.0
    %2472 = vmatpush1.msra.mxu0 %v130
    %2473 = vmatprep.subr.mxu0 0.0
    %2474 = vmatpush1.msra.mxu0 %v131
    %2475 = vmatprep.subr.mxu0 0.0
    %2476 = vmatpush1.msra.mxu0 %v132
    %2477 = vmatprep.subr.mxu0 0.0
    %2478 = vmatpush1.msra.mxu0 %v133
    %2479 = vmatprep.subr.mxu0 0.0
    %2480 = vmatpush1.msra.mxu0 0.0
    %2481 = vmatprep.subr.mxu0 0.0
    %2482 = vmatpush1.msra.mxu0 0.0
    %2483 = vmatprep.subr.mxu0 0.0
    %2484 = vmatpush1.msra.mxu0 0.0
    %2485 = vmatprep.subr.mxu0 0.0
    %2486 = vmatpush1.msra.mxu0 0.0
    %2487 = vmatprep.subr.mxu0 0.0
    %2488 = vmatpush1.msra.mxu0 0.0
    %2489 = vmatprep.subr.mxu0 0.0
    %2490 = vmatpush1.msra.mxu0 0.0
    %2491 = vmatprep.subr.mxu0 0.0
    %2492 = vmatpush1.msra.mxu0 0.0
    %2493 = vmatprep.subr.mxu0 0.0
    %2494 = vmatpush1.msra.mxu0 0.0
    %2495 = vmatprep.subr.mxu0 0.0
    %2496 = vmatpush1.msra.mxu0 0.0
    %2497 = vmatprep.subr.mxu0 0.0
    %2498 = vmatpush1.msra.mxu0 0.0
    %2499 = vmatprep.subr.mxu0 0.0
    %2500 = vmatpush1.msra.mxu0 0.0
    %2501 = vmatprep.subr.mxu0 0.0
    %2502 = vmatpush1.msra.mxu0 0.0
    %2503 = vmatprep.subr.mxu0 0.0
    %2504 = vmatpush1.msra.mxu0 0.0
    %2505 = vmatprep.subr.mxu0 0.0
    %2506 = vmatpush1.msra.mxu0 0.0
    %2507 = vmatprep.subr.mxu0 0.0
    %2508 = vmatpush1.msra.mxu0 0.0
    %2509 = vmatprep.subr.mxu0 0.0
    %2510 = vmatpush1.msra.mxu0 0.0
    %2511 = vmatprep.subr.mxu0 0.0
    %2512 = vmatpush1.msra.mxu0 0.0
    %2513 = vmatprep.subr.mxu0 0.0
    %2514 = vmatpush1.msra.mxu0 0.0
    %2515 = vmatprep.subr.mxu0 0.0
    %2516 = vmatpush1.msra.mxu0 0.0
    %2517 = vmatprep.subr.mxu0 0.0
    %2518 = vmatpush1.msra.mxu0 0.0
    %2519 = vmatprep.subr.mxu0 0.0
    %2520 = vmatpush1.msra.mxu0 0.0
    %2521 = vmatprep.subr.mxu0 0.0
    %2522 = vmatpush1.msra.mxu0 0.0
    %2523 = vmatprep.subr.mxu0 0.0
    %2524 = vmatpush1.msra.mxu0 0.0
    %2525 = vmatprep.subr.mxu0 0.0
    %2526 = vmatpush1.msra.mxu0 0.0
    %2527 = vmatprep.subr.mxu0 0.0
    %2528 = vmatpush1.msra.mxu0 0.0
    %2529 = vmatprep.subr.mxu0 0.0
    %2530 = vmatpush1.msra.mxu0 0.0
    %2531 = vmatprep.subr.mxu0 0.0
    %2532 = vmatpush1.msra.mxu0 0.0
    %2533 = vmatprep.subr.mxu0 0.0
    %2534 = vmatpush1.msra.mxu0 0.0
    %2535 = vmatprep.mubr.f32.mxu0 0.0
    %2536 = vmatmul.mubr.f32.gmra.mrb[0].mxu0 %v2469
    %v2537 = vpop.f32.mrb[0].mxu0
    %v2538 = vadd.f32 0.0, %v2537
    %v2539 = vpop.f32.mrb[0].mxu0
    %2540 = vdwg.mxu0
    %v2541 = vadd.f32 %v2463, %v2538
    %v2542 = vxor.u32 %v2541, 2147483648
    %v2543 = vmul.f32 %v2542, 1.442695
    %v2544 = vpow.pop %v2543
    %v2545 = vadd.f32 %v2544, 1.0
    %v2546 = vrcp.pop %v2545
    %v2547 = vmul.f32 1.0, %v2546
    %v2548 = vadd.f32 %v2538, %v1514
    %2550 = vrot.lane.b32.xlu0 %v2548, 64
    %v2551 = vpop.permute.xlu0 %2550
    %v2553 = vmul.f32 %v2547, %v2551
    %2555 = vrot.lane.b32.xlu0 %v2553, 64
    %v2556 = vpop.permute.xlu0 %2555
    %v2558 = vadd.f32 %v2463, %v2556
    %v2559 = vtanh.pop %v2558
    %v2560 = vsub.f32 1.0, %v2547
    %2562 = vrot.lane.b32.xlu0 %v2559, 96
    %v2563 = vpop.permute.xlu0 %2562
    %v2565 = vmul.f32 %v2560, %v2563
    %v2566 = vmul.f32 %v2547, %v2395
    %v2567 = vadd.f32 %v2565, %v2566
    %v2570 = vrot.slane %v1353, 7
    %v2571 = vrot.slane %v1354, 6
    %v2572 = vsel %vm368, %v2571, %v2570
    %2573 = vrot.lane.b32.xlu0 %v2572, 96
    %v2574 = vpop.permute.xlu0 %2573
    %v2575 = vsel %vm226, %v2574, 0
    %2577 = vmatprep.subr.mxu0 0.0
    %2578 = vmatpush1.msra.mxu0 %v122
    %2579 = vmatprep.subr.mxu0 0.0
    %2580 = vmatpush1.msra.mxu0 %v123
    %2581 = vmatprep.subr.mxu0 0.0
    %2582 = vmatpush1.msra.mxu0 %v124
    %2583 = vmatprep.subr.mxu0 0.0
    %2584 = vmatpush1.msra.mxu0 %v125
    %2585 = vmatprep.subr.mxu0 0.0
    %2586 = vmatpush1.msra.mxu0 0.0
    %2587 = vmatprep.subr.mxu0 0.0
    %2588 = vmatpush1.msra.mxu0 0.0
    %2589 = vmatprep.subr.mxu0 0.0
    %2590 = vmatpush1.msra.mxu0 0.0
    %2591 = vmatprep.subr.mxu0 0.0
    %2592 = vmatpush1.msra.mxu0 0.0
    %2593 = vmatprep.subr.mxu0 0.0
    %2594 = vmatpush1.msra.mxu0 0.0
    %2595 = vmatprep.subr.mxu0 0.0
    %2596 = vmatpush1.msra.mxu0 0.0
    %2597 = vmatprep.subr.mxu0 0.0
    %2598 = vmatpush1.msra.mxu0 0.0
    %2599 = vmatprep.subr.mxu0 0.0
    %2600 = vmatpush1.msra.mxu0 0.0
    %2601 = vmatprep.subr.mxu0 0.0
    %2602 = vmatpush1.msra.mxu0 0.0
    %2603 = vmatprep.subr.mxu0 0.0
    %2604 = vmatpush1.msra.mxu0 0.0
    %2605 = vmatprep.subr.mxu0 0.0
    %2606 = vmatpush1.msra.mxu0 0.0
    %2607 = vmatprep.subr.mxu0 0.0
    %2608 = vmatpush1.msra.mxu0 0.0
    %2609 = vmatprep.subr.mxu0 0.0
    %2610 = vmatpush1.msra.mxu0 0.0
    %2611 = vmatprep.subr.mxu0 0.0
    %2612 = vmatpush1.msra.mxu0 0.0
    %2613 = vmatprep.subr.mxu0 0.0
    %2614 = vmatpush1.msra.mxu0 0.0
    %2615 = vmatprep.subr.mxu0 0.0
    %2616 = vmatpush1.msra.mxu0 0.0
    %2617 = vmatprep.subr.mxu0 0.0
    %2618 = vmatpush1.msra.mxu0 0.0
    %2619 = vmatprep.subr.mxu0 0.0
    %2620 = vmatpush1.msra.mxu0 0.0
    %2621 = vmatprep.subr.mxu0 0.0
    %2622 = vmatpush1.msra.mxu0 0.0
    %2623 = vmatprep.subr.mxu0 0.0
    %2624 = vmatpush1.msra.mxu0 0.0
    %2625 = vmatprep.subr.mxu0 0.0
    %2626 = vmatpush1.msra.mxu0 0.0
    %2627 = vmatprep.subr.mxu0 0.0
    %2628 = vmatpush1.msra.mxu0 0.0
    %2629 = vmatprep.subr.mxu0 0.0
    %2630 = vmatpush1.msra.mxu0 0.0
    %2631 = vmatprep.subr.mxu0 0.0
    %2632 = vmatpush1.msra.mxu0 0.0
    %2633 = vmatprep.subr.mxu0 0.0
    %2634 = vmatpush1.msra.mxu0 0.0
    %2635 = vmatprep.subr.mxu0 0.0
    %2636 = vmatpush1.msra.mxu0 0.0
    %2637 = vmatprep.subr.mxu0 0.0
    %2638 = vmatpush1.msra.mxu0 0.0
    %2639 = vmatprep.subr.mxu0 0.0
    %2640 = vmatpush1.msra.mxu0 0.0
    %2641 = vmatprep.mubr.f32.mxu0 0.0
    %2642 = vmatmul.mubr.f32.gmra.mrb[0].mxu0 %v2575
    %v2643 = vpop.f32.mrb[0].mxu0
    %v2644 = vadd.f32 %v1359, %v2643
    %v2645 = vpop.f32.mrb[0].mxu0
    %2646 = vdwg.mxu0
    %2648 = vrot.lane.b32.xlu0 %v2567, 96
    %v2649 = vpop.permute.xlu0 %2648
    %v2650 = vsel %vm226, %v2649, 0
    %2652 = vmatprep.subr.mxu0 0.0
    %2653 = vmatpush1.msra.mxu0 %v130
    %2654 = vmatprep.subr.mxu0 0.0
    %2655 = vmatpush1.msra.mxu0 %v131
    %2656 = vmatprep.subr.mxu0 0.0
    %2657 = vmatpush1.msra.mxu0 %v132
    %2658 = vmatprep.subr.mxu0 0.0
    %2659 = vmatpush1.msra.mxu0 %v133
    %2660 = vmatprep.subr.mxu0 0.0
    %2661 = vmatpush1.msra.mxu0 0.0
    %2662 = vmatprep.subr.mxu0 0.0
    %2663 = vmatpush1.msra.mxu0 0.0
    %2664 = vmatprep.subr.mxu0 0.0
    %2665 = vmatpush1.msra.mxu0 0.0
    %2666 = vmatprep.subr.mxu0 0.0
    %2667 = vmatpush1.msra.mxu0 0.0
    %2668 = vmatprep.subr.mxu0 0.0
    %2669 = vmatpush1.msra.mxu0 0.0
    %2670 = vmatprep.subr.mxu0 0.0
    %2671 = vmatpush1.msra.mxu0 0.0
    %2672 = vmatprep.subr.mxu0 0.0
    %2673 = vmatpush1.msra.mxu0 0.0
    %2674 = vmatprep.subr.mxu0 0.0
    %2675 = vmatpush1.msra.mxu0 0.0
    %2676 = vmatprep.subr.mxu0 0.0
    %2677 = vmatpush1.msra.mxu0 0.0
    %2678 = vmatprep.subr.mxu0 0.0
    %2679 = vmatpush1.msra.mxu0 0.0
    %2680 = vmatprep.subr.mxu0 0.0
    %2681 = vmatpush1.msra.mxu0 0.0
    %2682 = vmatprep.subr.mxu0 0.0
    %2683 = vmatpush1.msra.mxu0 0.0
    %2684 = vmatprep.subr.mxu0 0.0
    %2685 = vmatpush1.msra.mxu0 0.0
    %2686 = vmatprep.subr.mxu0 0.0
    %2687 = vmatpush1.msra.mxu0 0.0
    %2688 = vmatprep.subr.mxu0 0.0
    %2689 = vmatpush1.msra.mxu0 0.0
    %2690 = vmatprep.subr.mxu0 0.0
    %2691 = vmatpush1.msra.mxu0 0.0
    %2692 = vmatprep.subr.mxu0 0.0
    %2693 = vmatpush1.msra.mxu0 0.0
    %2694 = vmatprep.subr.mxu0 0.0
    %2695 = vmatpush1.msra.mxu0 0.0
    %2696 = vmatprep.subr.mxu0 0.0
    %2697 = vmatpush1.msra.mxu0 0.0
    %2698 = vmatprep.subr.mxu0 0.0
    %2699 = vmatpush1.msra.mxu0 0.0
    %2700 = vmatprep.subr.mxu0 0.0
    %2701 = vmatpush1.msra.mxu0 0.0
    %2702 = vmatprep.subr.mxu0 0.0
    %2703 = vmatpush1.msra.mxu0 0.0
    %2704 = vmatprep.subr.mxu0 0.0
    %2705 = vmatpush1.msra.mxu0 0.0
    %2706 = vmatprep.subr.mxu0 0.0
    %2707 = vmatpush1.msra.mxu0 0.0
    %2708 = vmatprep.subr.mxu0 0.0
    %2709 = vmatpush1.msra.mxu0 0.0
    %2710 = vmatprep.subr.mxu0 0.0
    %2711 = vmatpush1.msra.mxu0 0.0
    %2712 = vmatprep.subr.mxu0 0.0
    %2713 = vmatpush1.msra.mxu0 0.0
    %2714 = vmatprep.subr.mxu0 0.0
    %2715 = vmatpush1.msra.mxu0 0.0
    %2716 = vmatprep.mubr.f32.mxu0 0.0
    %2717 = vmatmul.mubr.f32.gmra.mrb[0].mxu0 %v2650
    %v2718 = vpop.f32.mrb[0].mxu0
    %v2719 = vadd.f32 0.0, %v2718
    %v2720 = vpop.f32.mrb[0].mxu0
    %2721 = vdwg.mxu0
    %v2722 = vadd.f32 %v2644, %v2719
    %v2723 = vxor.u32 %v2722, 2147483648
    %v2724 = vmul.f32 %v2723, 1.442695
    %v2725 = vpow.pop %v2724
    %v2726 = vadd.f32 %v2725, 1.0
    %v2727 = vrcp.pop %v2726
    %v2728 = vmul.f32 1.0, %v2727
    %v2729 = vadd.f32 %v2719, %v1514
    %2731 = vrot.lane.b32.xlu0 %v2729, 64
    %v2732 = vpop.permute.xlu0 %2731
    %v2734 = vmul.f32 %v2728, %v2732
    %2736 = vrot.lane.b32.xlu0 %v2734, 64
    %v2737 = vpop.permute.xlu0 %2736
    %v2739 = vadd.f32 %v2644, %v2737
    %v2740 = vtanh.pop %v2739
    %v2741 = vsub.f32 1.0, %v2728
    %2743 = vrot.lane.b32.xlu0 %v2740, 96
    %v2744 = vpop.permute.xlu0 %2743
    %v2746 = vmul.f32 %v2741, %v2744
    %v2747 = vmul.f32 %v2728, %v2567
    %v2748 = vadd.f32 %v2746, %v2747
    %v2749 = vld [vmem:[%s9] sm:$0x1]
    %v2751 = vlaneseq
    %v2752 = vshrl.u32 %v2751, 7
    %v2753 = vsub.s32 0, %v2752
    %v2754 = vrot.slane %v2749, %v2753
    %2755 = vrot.lane.b32.xlu0 %v2754, 32
    %v2756 = vpop.permute.xlu0 %2755
    %v2758 = vmul.f32 %v2748, %v2756
    %2760 = vrot.lane.b32.xlu0 %v2758, 96
    %v2761 = vpop.permute.xlu0 %2760
    %vm2763 = vcmask 254976
    %v2764 = vsel %vm2763, %v2761, 0.0
    %2765 = vadd.xlane.f32.xlu0 %v2764
    %v2766 = vpop.xlane.xlu0 %2765
    %v2767 = vld [vmem:[#allocation2] sm:$0x1]
    %v2769 = vlaneseq
    %v2770 = vshrl.u32 %v2769, 7
    %v2771 = vsub.s32 0, %v2770
    %v2772 = vrot.slane %v2767, %v2771
    %v2774 = vadd.f32 %v2766, %v2772
    %v2775 = vxor.u32 %v2774, 2147483648
    %v2776 = vmul.f32 %v2775, 1.442695
    %v2777 = vpow.pop %v2776
    %v2778 = vadd.f32 %v2777, 1.0
    %v2779 = vrcp.pop %v2778
    %v2780 = vmul.f32 1.0, %v2779
    %vm2781 = vcmask 1024
    %2782 = vst.msk [vmem:[%s11] sm:$0x3] %vm2781, %v2780
    // Predicated region
    $region70: #{gru_discriminator_forward.1} parent=1 // pred_check
      _
    $region71: #{gru_discriminator_forward.1} parent=1 // pred_check_branch
      %2784 = sbr.rel (0) target = $region73
    $region72: #{gru_discriminator_forward.1} parent=1 // pred_region
      _
    $region73: #{gru_discriminator_forward.1} parent=1 // pred_fallthru
      _
    // Predicated region
    $region74: #{gru_discriminator_forward.1} parent=1 // pred_check
      _
    $region75: #{gru_discriminator_forward.1} parent=1 // pred_check_branch
      %2786 = sbr.rel (0) target = $region77
    $region76: #{gru_discriminator_forward.1} parent=1 // pred_region
      _
    $region77: #{gru_discriminator_forward.1} parent=1 // pred_fallthru
      _
    %2787 = vsyncpa [#allocation4], 1
    %2788 = vsyncpa [#allocation6], 1
    %2789 = vsyncpa [#allocation9], 1
    %2790 = vsyncpa [#allocation12], 1

</llo_original>
